<compile_context>
chip_gen: v7x
topology: tpu7x:2x2x1
jax: 0.10.0
libtpu: 0.0.40
codegen_flags: <defaults>
</compile_context>

<pallas_src>
import functools

import jax
import jax.numpy as jnp
from jax.experimental import pallas as pl
from jax.experimental.pallas import tpu as pltpu

_LANE = 128
_SUBLANE = 8


def _round_up(v, m):
    return (v + m - 1) // m * m


# ----------------------------- Pallas kernel ---------------------------------
def lstm_forecaster_kernel(
        # VMEM inputs (needed immediately by the encoder)
        x_ref,                       # (T*B_pad, D_in_pad)        bf16
        wih_e_ref,                   # (D_in_pad, 4*H_pad)        bf16
        whh_e_ref,                   # (H_pad, 4*H_pad)           f32
        b_e_ref,                     # (1, 4*H_pad)               f32
        # HBM inputs (decoder / head side, prefetched behind encoder compute)
        whh_d_hbm,                   # (H_pad, 4*H_pad)           f32
        wfused_d_hbm,                # (H_pad, 4*H_pad)           f32
        b_d_hbm,                     # (B_pad, 4*H_pad)           f32
        wout_hbm,                    # (H_pad, D_out_pad)         bf16
        bout_hbm,                    # (1, D_out_pad)             f32
        # output
        out_ref,                     # (HORIZON*B_pad, D_out_pad) f32
        # scratch
        whh_d_vmem, wfused_vmem, b_d_vmem, wout_vmem, bout_vmem,
        dma_sems,                    # SemaphoreType.DMA((5,))
        xproj_ref,                   # (T*B_pad, 4*H_pad)         f32
        hs_ref,                      # (HORIZON*B_pad, H_pad)     f32
        h_ref, c_ref,                # (B_pad, H_pad)             f32
        *, b_pad, h_pad, seq_len, horizon):

    # ---- kick off decoder-side weight DMAs; they land behind encoder compute
    cp_whh_d  = pltpu.make_async_copy(whh_d_hbm,   whh_d_vmem,  dma_sems.at[0])
    cp_wfused = pltpu.make_async_copy(wfused_d_hbm, wfused_vmem, dma_sems.at[1])
    cp_b_d    = pltpu.make_async_copy(b_d_hbm,     b_d_vmem,    dma_sems.at[2])
    cp_wout   = pltpu.make_async_copy(wout_hbm,    wout_vmem,   dma_sems.at[3])
    cp_bout   = pltpu.make_async_copy(bout_hbm,    bout_vmem,   dma_sems.at[4])
    cp_whh_d.start(); cp_wfused.start(); cp_b_d.start()
    cp_wout.start(); cp_bout.start()

    def cell_update(gates):
        # Gate order (i, f, g, o); each block is H_pad wide -> lane-aligned.
        i = jax.nn.sigmoid(gates[:, 0 * h_pad:1 * h_pad])
        f = jax.nn.sigmoid(gates[:, 1 * h_pad:2 * h_pad])
        g = jnp.tanh(gates[:, 2 * h_pad:3 * h_pad])
        o = jax.nn.sigmoid(gates[:, 3 * h_pad:4 * h_pad])
        c_new = f * c_ref[...] + i * g
        h_ref[...] = o * jnp.tanh(c_new)
        c_ref[...] = c_new

    # ---- encoder input projection, hoisted: one bf16 matmul for all T steps -
    xproj_ref[...] = (jnp.dot(x_ref[...], wih_e_ref[...],
                              preferred_element_type=jnp.float32)
                      + b_e_ref[...])

    h_ref[...] = jnp.zeros((b_pad, h_pad), jnp.float32)
    c_ref[...] = jnp.zeros((b_pad, h_pad), jnp.float32)

    # ---- encoder: serial recurrence, only h @ W_hh per step.  Weight refs are
    # read at the call site (folded into the matmul feed), not hoisted to SSA.
    @pl.loop(0, seq_len, unroll=True)
    def _(t):
        row = pl.multiple_of(t * b_pad, b_pad)
        gates = xproj_ref[pl.ds(row, b_pad), :] + jnp.dot(
            h_ref[...], whh_e_ref[...], preferred_element_type=jnp.float32)
        cell_update(gates)

    # ---- decoder weights must have landed by now (DMA hidden behind encoder)
    cp_whh_d.wait(); cp_wfused.wait(); cp_b_d.wait()

    # ---- decoder step 0: input is zeros -> recurrent matmul only ------------
    cell_update(jnp.dot(h_ref[...], whh_d_vmem[...],
                        preferred_element_type=jnp.float32) + b_d_vmem[...])
    hs_ref[pl.ds(0, b_pad), :] = h_ref[...]

    # ---- decoder steps 1..horizon-1: dec_in == previous h -> fused weight ---
    @pl.loop(1, horizon, unroll=True)
    def _(t):
        cell_update(jnp.dot(h_ref[...], wfused_vmem[...],
                            preferred_element_type=jnp.float32) + b_d_vmem[...])
        row = pl.multiple_of(t * b_pad, b_pad)
        hs_ref[pl.ds(row, b_pad), :] = h_ref[...]

    # ---- deferred output head: one lane-dense bf16 matmul + unmasked store --
    cp_wout.wait(); cp_bout.wait()
    out_ref[...] = (jnp.dot(hs_ref[...].astype(jnp.bfloat16), wout_vmem[...],
                            preferred_element_type=jnp.float32)
                    + bout_vmem[...])


# ----------------------------- wrapper (layout glue) -------------------------
def _pad_gate_cols(w, H, H_pad):
    """(rows, 4H) gate-blocked columns -> (rows, 4*H_pad); each gate block is
    placed at a lane-aligned offset g*H_pad; padded columns are zero."""
    rows = w.shape[0]
    out = jnp.zeros((rows, 4 * H_pad), jnp.float32)
    for g in range(4):
        out = out.at[:, g * H_pad:g * H_pad + H].set(w[:, g * H:(g + 1) * H])
    return out


def _pad_rows(w, rows_pad):
    return jnp.pad(w, ((0, rows_pad - w.shape[0]), (0, 0)))


def lstm_forecaster(x, wih_e, whh_e, b_e, wih_d, whh_d, b_d, w_out, b_out,
                    *, hidden_dim, forecast_horizon):
    """x: (B, T, D). Torch-layout params: W_ih (4H, in), W_hh (4H, H),
    fused biases b (4H,), Linear W (out, H), b (out,). Returns (B, horizon, D)."""
    B, T, D = x.shape
    H = hidden_dim
    H_pad = _round_up(H, _LANE)
    B_pad = _round_up(B, _SUBLANE)
    D_in_pad = _round_up(D, _LANE)
    D_out_pad = _round_up(D, _LANE)

    # Torch layout -> transposed, gate-aligned, zero-padded slabs.
    # Off-chain operands (input projection, output head) are bf16; recurrent
    # weights stay f32 so the 14-step serial chain keeps f32 accuracy.
    wih_e_p = _pad_rows(_pad_gate_cols(wih_e.T, H, H_pad),
                        D_in_pad).astype(jnp.bfloat16)
    whh_e_p = _pad_rows(_pad_gate_cols(whh_e.T, H, H_pad), H_pad)
    b_e_p = _pad_gate_cols(b_e.reshape(1, -1), H, H_pad)
    wih_d_p = _pad_rows(_pad_gate_cols(wih_d.T, H, H_pad), H_pad)
    whh_d_p = _pad_rows(_pad_gate_cols(whh_d.T, H, H_pad), H_pad)
    # Decoder bias pre-broadcast to B_pad sublanes (no in-kernel broadcast).
    b_d_p = jnp.broadcast_to(_pad_gate_cols(b_d.reshape(1, -1), H, H_pad),
                             (B_pad, 4 * H_pad))
    wfused_d_p = wih_d_p + whh_d_p          # exact: dec_in == h for t >= 1
    w_out_p = (jnp.zeros((H_pad, D_out_pad), jnp.float32)
               .at[:H, :D].set(w_out.T).astype(jnp.bfloat16))
    b_out_p = jnp.zeros((1, D_out_pad), jnp.float32).at[:, :D].set(
        b_out.reshape(1, -1))

    # x -> time-major, batch padded to 8 sublanes, feature padded to 128 lanes,
    # flattened to 2D rows ordered [t, b]; bf16 feed for the hoisted projection.
    x_tm = jnp.transpose(x.astype(jnp.float32), (1, 0, 2))
    x_tm = jnp.pad(x_tm, ((0, 0), (0, B_pad - B), (0, D_in_pad - D)))
    x2d = x_tm.reshape(T * B_pad, D_in_pad).astype(jnp.bfloat16)

    kernel = functools.partial(lstm_forecaster_kernel,
                               b_pad=B_pad, h_pad=H_pad,
                               seq_len=T, horizon=forecast_horizon)

    vmem = pl.BlockSpec(memory_space=pltpu.MemorySpace.VMEM)
    hbm = pl.BlockSpec(memory_space=pl.ANY)
    out2d = pl.pallas_call(
        kernel,
        out_shape=jax.ShapeDtypeStruct((forecast_horizon * B_pad, D_out_pad),
                                       jnp.float32),
        in_specs=[vmem, vmem, vmem, vmem,      # x, wih_e, whh_e, b_e
                  hbm, hbm, hbm, hbm, hbm],    # decoder/head params (prefetch)
        out_specs=vmem,
        scratch_shapes=[
            pltpu.VMEM((H_pad, 4 * H_pad), jnp.float32),                # whh_d
            pltpu.VMEM((H_pad, 4 * H_pad), jnp.float32),                # wfused
            pltpu.VMEM((B_pad, 4 * H_pad), jnp.float32),                # b_d
            pltpu.VMEM((H_pad, D_out_pad), jnp.bfloat16),               # wout
            pltpu.VMEM((1, D_out_pad), jnp.float32),                    # bout
            pltpu.SemaphoreType.DMA((5,)),                              # sems
            pltpu.VMEM((T * B_pad, 4 * H_pad), jnp.float32),            # xproj
            pltpu.VMEM((forecast_horizon * B_pad, H_pad), jnp.float32),  # hs
            pltpu.VMEM((B_pad, H_pad), jnp.float32),                    # h
            pltpu.VMEM((B_pad, H_pad), jnp.float32),                    # c
        ],
        compiler_params=pltpu.CompilerParams(
            vmem_limit_bytes=8 * 1024 * 1024),   # ~2 MiB used; explicit guard
    )(x2d, wih_e_p, whh_e_p, b_e_p, whh_d_p, wfused_d_p, b_d_p,
      w_out_p, b_out_p)

    out = out2d.reshape(forecast_horizon, B_pad, D_out_pad)[:, :B, :D]
    return jnp.transpose(out, (1, 0, 2))


# ----------------------------- pure-JAX reference -----------------------------
def reference_forward(x, wih_e_t, whh_e_t, b_e, wih_d_t, whh_d_t, b_d,
                      wout_t, b_out, *, hidden_dim, forecast_horizon):
    B, T, _ = x.shape

    def cell(x_t, h, c, wih_t, whh_t, b):
        gates = x_t @ wih_t + h @ whh_t + b
        i, f, g, o = jnp.split(gates, 4, axis=-1)
        i = jax.nn.sigmoid(i)
        f = jax.nn.sigmoid(f)
        g = jnp.tanh(g)
        o = jax.nn.sigmoid(o)
        c = f * c + i * g
        h = o * jnp.tanh(c)
        return h, c

    h = jnp.zeros((B, hidden_dim), jnp.float32)
    c = jnp.zeros((B, hidden_dim), jnp.float32)
    for t in range(T):
        h, c = cell(x[:, t, :], h, c, wih_e_t, whh_e_t, b_e)

    dec_in = jnp.zeros((B, hidden_dim), jnp.float32)
    outs = []
    for _ in range(forecast_horizon):
        h, c = cell(dec_in, h, c, wih_d_t, whh_d_t, b_d)
        outs.append(h @ wout_t + b_out)
        dec_in = h
    return jnp.stack(outs, axis=1)


# ----------------------------------- main -----------------------------------
if __name__ == "__main__":
    B, T = 2, 8                 # batch, input sequence length
    INPUT_DIM = 1               # module default input_dim
    HIDDEN = 64                 # module default hidden_dim
    HORIZON = 6                 # module default forecast_horizon

    key = jax.random.PRNGKey(0)
    ks = jax.random.split(key, 12)
    bound = 1.0 / float(jnp.sqrt(HIDDEN))

    def uinit(k, shape):
        return jax.random.uniform(k, shape, jnp.float32, -bound, bound)

    # Encoder LSTM params (torch shapes: W_ih (4H, in), W_hh (4H, H), b (4H,))
    wih_e = uinit(ks[0], (4 * HIDDEN, INPUT_DIM))
    whh_e = uinit(ks[1], (4 * HIDDEN, HIDDEN))
    b_e = uinit(ks[2], (4 * HIDDEN,)) + uinit(ks[3], (4 * HIDDEN,))  # b_ih + b_hh
    # Decoder LSTM params (input is hidden_dim wide)
    wih_d = uinit(ks[4], (4 * HIDDEN, HIDDEN))
    whh_d = uinit(ks[5], (4 * HIDDEN, HIDDEN))
    b_d = uinit(ks[6], (4 * HIDDEN,)) + uinit(ks[7], (4 * HIDDEN,))
    # Output linear layer (torch Linear: W (out, in), b (out,))
    w_out = uinit(ks[8], (INPUT_DIM, HIDDEN))
    b_out = uinit(ks[9], (INPUT_DIM,))

    x = jax.random.normal(ks[10], (B, T, INPUT_DIM), jnp.float32)

    out = lstm_forecaster(x, wih_e, whh_e, b_e, wih_d, whh_d, b_d, w_out, b_out,
                          hidden_dim=HIDDEN, forecast_horizon=HORIZON)
    out = jax.block_until_ready(out)

    ref = reference_forward(x, wih_e.T, whh_e.T, b_e.reshape(1, -1),
                            wih_d.T, whh_d.T, b_d.reshape(1, -1),
                            w_out.T, b_out.reshape(1, -1),
                            hidden_dim=HIDDEN, forecast_horizon=HORIZON)

    assert out.shape == (B, HORIZON, INPUT_DIM), out.shape
    # Tolerance reflects bf16 operand rounding (2^-9) in the off-chain matmuls
    # (input projection + output head); the recurrent chain itself is f32.
    assert jnp.allclose(out, ref, atol=3e-3, rtol=3e-3), (
        float(jnp.max(jnp.abs(out - ref))))
    print("KERNEL_OK")
</pallas_src>

<mosaic_0001>
module attributes {stable_mosaic.version = 11 : i64} {
  func.func @lstm_forecaster_kernel(%arg0: memref<64x128xbf16, #tpu.memory_space<vmem>>, %arg1: memref<128x512xbf16, #tpu.memory_space<vmem>>, %arg2: memref<128x512xf32, #tpu.memory_space<vmem>>, %arg3: memref<1x512xf32, #tpu.memory_space<vmem>>, %arg4: memref<128x512xf32, #tpu.memory_space<any>>, %arg5: memref<128x512xf32, #tpu.memory_space<any>>, %arg6: memref<8x512xf32, #tpu.memory_space<any>>, %arg7: memref<128x128xbf16, #tpu.memory_space<any>>, %arg8: memref<1x128xf32, #tpu.memory_space<any>>, %arg9: memref<48x128xf32, #tpu.memory_space<vmem>>, %arg10: memref<128x512xf32, #tpu.memory_space<vmem>>, %arg11: memref<128x512xf32, #tpu.memory_space<vmem>>, %arg12: memref<8x512xf32, #tpu.memory_space<vmem>>, %arg13: memref<128x128xbf16, #tpu.memory_space<vmem>>, %arg14: memref<1x128xf32, #tpu.memory_space<vmem>>, %arg15: memref<5x!tpu.dma_semaphore, #tpu.memory_space<semaphore_mem>>, %arg16: memref<64x512xf32, #tpu.memory_space<vmem>>, %arg17: memref<48x128xf32, #tpu.memory_space<vmem>>, %arg18: memref<8x128xf32, #tpu.memory_space<vmem>>, %arg19: memref<8x128xf32, #tpu.memory_space<vmem>>) attributes {dimension_semantics = [], scalar_prefetch = 0 : i64, scratch_operands = 10 : i64, tpu.core_type = #tpu.core_type<tc>} {
    %c0_i32 = arith.constant 0 : i32
    %0 = tpu.memref_slice %arg15[%c0_i32] : memref<5x!tpu.dma_semaphore, #tpu.memory_space<semaphore_mem>> -> memref<1x!tpu.dma_semaphore, #tpu.memory_space<semaphore_mem>>
    %1 = tpu.memref_squeeze %0 : memref<1x!tpu.dma_semaphore, #tpu.memory_space<semaphore_mem>> -> memref<!tpu.dma_semaphore, #tpu.memory_space<semaphore_mem>>
    tpu.enqueue_dma source(%arg4 : memref<128x512xf32, #tpu.memory_space<any>>) target(%arg10 : memref<128x512xf32, #tpu.memory_space<vmem>>) target_semaphore(%1 : memref<!tpu.dma_semaphore, #tpu.memory_space<semaphore_mem>>)
    %c1_i32 = arith.constant 1 : i32
    %2 = tpu.memref_slice %arg15[%c1_i32] : memref<5x!tpu.dma_semaphore, #tpu.memory_space<semaphore_mem>> -> memref<1x!tpu.dma_semaphore, #tpu.memory_space<semaphore_mem>>
    %3 = tpu.memref_squeeze %2 : memref<1x!tpu.dma_semaphore, #tpu.memory_space<semaphore_mem>> -> memref<!tpu.dma_semaphore, #tpu.memory_space<semaphore_mem>>
    tpu.enqueue_dma source(%arg5 : memref<128x512xf32, #tpu.memory_space<any>>) target(%arg11 : memref<128x512xf32, #tpu.memory_space<vmem>>) target_semaphore(%3 : memref<!tpu.dma_semaphore, #tpu.memory_space<semaphore_mem>>)
    %c2_i32 = arith.constant 2 : i32
    %4 = tpu.memref_slice %arg15[%c2_i32] : memref<5x!tpu.dma_semaphore, #tpu.memory_space<semaphore_mem>> -> memref<1x!tpu.dma_semaphore, #tpu.memory_space<semaphore_mem>>
    %5 = tpu.memref_squeeze %4 : memref<1x!tpu.dma_semaphore, #tpu.memory_space<semaphore_mem>> -> memref<!tpu.dma_semaphore, #tpu.memory_space<semaphore_mem>>
    tpu.enqueue_dma source(%arg6 : memref<8x512xf32, #tpu.memory_space<any>>) target(%arg12 : memref<8x512xf32, #tpu.memory_space<vmem>>) target_semaphore(%5 : memref<!tpu.dma_semaphore, #tpu.memory_space<semaphore_mem>>)
    %c3_i32 = arith.constant 3 : i32
    %6 = tpu.memref_slice %arg15[%c3_i32] : memref<5x!tpu.dma_semaphore, #tpu.memory_space<semaphore_mem>> -> memref<1x!tpu.dma_semaphore, #tpu.memory_space<semaphore_mem>>
    %7 = tpu.memref_squeeze %6 : memref<1x!tpu.dma_semaphore, #tpu.memory_space<semaphore_mem>> -> memref<!tpu.dma_semaphore, #tpu.memory_space<semaphore_mem>>
    tpu.enqueue_dma source(%arg7 : memref<128x128xbf16, #tpu.memory_space<any>>) target(%arg13 : memref<128x128xbf16, #tpu.memory_space<vmem>>) target_semaphore(%7 : memref<!tpu.dma_semaphore, #tpu.memory_space<semaphore_mem>>)
    %c4_i32 = arith.constant 4 : i32
    %8 = tpu.memref_slice %arg15[%c4_i32] : memref<5x!tpu.dma_semaphore, #tpu.memory_space<semaphore_mem>> -> memref<1x!tpu.dma_semaphore, #tpu.memory_space<semaphore_mem>>
    %9 = tpu.memref_squeeze %8 : memref<1x!tpu.dma_semaphore, #tpu.memory_space<semaphore_mem>> -> memref<!tpu.dma_semaphore, #tpu.memory_space<semaphore_mem>>
    tpu.enqueue_dma source(%arg8 : memref<1x128xf32, #tpu.memory_space<any>>) target(%arg14 : memref<1x128xf32, #tpu.memory_space<vmem>>) target_semaphore(%9 : memref<!tpu.dma_semaphore, #tpu.memory_space<semaphore_mem>>)
    %c0 = arith.constant 0 : index
    %c0_0 = arith.constant 0 : index
    %10 = vector.load %arg0[%c0, %c0_0] : memref<64x128xbf16, #tpu.memory_space<vmem>>, vector<64x128xbf16>
    %c0_1 = arith.constant 0 : index
    %c0_2 = arith.constant 0 : index
    %11 = vector.load %arg1[%c0_1, %c0_2] : memref<128x512xbf16, #tpu.memory_space<vmem>>, vector<128x512xbf16>
    %cst = arith.constant dense<0.000000e+00> : vector<64x512xf32>
    %12 = tpu.matmul %10, %11, %cst {dimension_numbers = #tpu.dot_dimension_numbers<[1], [0], [0], [1], [0, 0, 1, 1], [], []>} : vector<64x128xbf16>, vector<128x512xbf16>, vector<64x512xf32> -> vector<64x512xf32>
    %c0_3 = arith.constant 0 : index
    %c0_4 = arith.constant 0 : index
    %13 = vector.load %arg3[%c0_3, %c0_4] : memref<1x512xf32, #tpu.memory_space<vmem>>, vector<1x512xf32>
    %14 = vector.broadcast %13 : vector<1x512xf32> to vector<64x512xf32>
    %15 = arith.addf %12, %14 : vector<64x512xf32>
    %c0_5 = arith.constant 0 : index
    %c0_6 = arith.constant 0 : index
    %16 = vector.load %arg16[%c0_5, %c0_6] : memref<64x512xf32, #tpu.memory_space<vmem>>, vector<64x512xf32>
    tpu.vector_store %arg16[%c0_5, %c0_6], %15 {strides = array<i32>} : memref<64x512xf32, #tpu.memory_space<vmem>>, vector<64x512xf32>,
    %cst_7 = arith.constant 0.000000e+00 : f32
    %17 = vector.broadcast %cst_7 : f32 to vector<8x128xf32>
    %c0_8 = arith.constant 0 : index
    %c0_9 = arith.constant 0 : index
    %18 = vector.load %arg18[%c0_8, %c0_9] : memref<8x128xf32, #tpu.memory_space<vmem>>, vector<8x128xf32>
    tpu.vector_store %arg18[%c0_8, %c0_9], %17 {strides = array<i32>} : memref<8x128xf32, #tpu.memory_space<vmem>>, vector<8x128xf32>,
    %cst_10 = arith.constant 0.000000e+00 : f32
    %19 = vector.broadcast %cst_10 : f32 to vector<8x128xf32>
    %c0_11 = arith.constant 0 : index
    %c0_12 = arith.constant 0 : index
    %20 = vector.load %arg19[%c0_11, %c0_12] : memref<8x128xf32, #tpu.memory_space<vmem>>, vector<8x128xf32>
    tpu.vector_store %arg19[%c0_11, %c0_12], %19 {strides = array<i32>} : memref<8x128xf32, #tpu.memory_space<vmem>>, vector<8x128xf32>,
    %c0_i32_13 = arith.constant 0 : i32
    %c1_i32_14 = arith.constant 1 : i32
    %21 = arith.muli %c0_i32_13, %c1_i32_14 : i32
    %c0_i32_15 = arith.constant 0 : i32
    %22 = arith.addi %c0_i32_15, %21 : i32
    %c8_i32 = arith.constant 8 : i32
    %23 = arith.muli %22, %c8_i32 : i32
    %24 = tpu.assume_multiple %23, 8 : i32
    %25 = arith.index_cast %24 : i32 to index
    %c0_16 = arith.constant 0 : index
    %26 = vector.load %arg16[%25, %c0_16] : memref<64x512xf32, #tpu.memory_space<vmem>>, vector<8x512xf32>
    %c0_17 = arith.constant 0 : index
    %c0_18 = arith.constant 0 : index
    %27 = vector.load %arg18[%c0_17, %c0_18] : memref<8x128xf32, #tpu.memory_space<vmem>>, vector<8x128xf32>
    %c0_19 = arith.constant 0 : index
    %c0_20 = arith.constant 0 : index
    %28 = vector.load %arg2[%c0_19, %c0_20] : memref<128x512xf32, #tpu.memory_space<vmem>>, vector<128x512xf32>
    %cst_21 = arith.constant dense<0.000000e+00> : vector<8x512xf32>
    %29 = tpu.matmul %27, %28, %cst_21 {dimension_numbers = #tpu.dot_dimension_numbers<[1], [0], [0], [1], [0, 0, 1, 1], [], []>} : vector<8x128xf32>, vector<128x512xf32>, vector<8x512xf32> -> vector<8x512xf32>
    %30 = arith.addf %26, %29 : vector<8x512xf32>
    %31 = vector.extract_strided_slice %30 {offsets = [0, 0], sizes = [8, 128], strides = [1, 1]} : vector<8x512xf32> to vector<8x128xf32>
    %32 = arith.negf %31 : vector<8x128xf32>
    %33 = math.exp %32 : vector<8x128xf32>
    %cst_22 = arith.constant 1.000000e+00 : f32
    %34 = vector.broadcast %cst_22 : f32 to vector<8x128xf32>
    %35 = arith.addf %34, %33 : vector<8x128xf32>
    %36 = arith.divf %34, %35 : vector<8x128xf32>
    %37 = vector.extract_strided_slice %30 {offsets = [0, 128], sizes = [8, 128], strides = [1, 1]} : vector<8x512xf32> to vector<8x128xf32>
    %38 = arith.negf %37 : vector<8x128xf32>
    %39 = math.exp %38 : vector<8x128xf32>
    %cst_23 = arith.constant 1.000000e+00 : f32
    %40 = vector.broadcast %cst_23 : f32 to vector<8x128xf32>
    %41 = arith.addf %40, %39 : vector<8x128xf32>
    %42 = arith.divf %40, %41 : vector<8x128xf32>
    %43 = vector.extract_strided_slice %30 {offsets = [0, 256], sizes = [8, 128], strides = [1, 1]} : vector<8x512xf32> to vector<8x128xf32>
    %44 = math.tanh %43 : vector<8x128xf32>
    %45 = vector.extract_strided_slice %30 {offsets = [0, 384], sizes = [8, 128], strides = [1, 1]} : vector<8x512xf32> to vector<8x128xf32>
    %46 = arith.negf %45 : vector<8x128xf32>
    %47 = math.exp %46 : vector<8x128xf32>
    %cst_24 = arith.constant 1.000000e+00 : f32
    %48 = vector.broadcast %cst_24 : f32 to vector<8x128xf32>
    %49 = arith.addf %48, %47 : vector<8x128xf32>
    %50 = arith.divf %48, %49 : vector<8x128xf32>
    %c0_25 = arith.constant 0 : index
    %c0_26 = arith.constant 0 : index
    %51 = vector.load %arg19[%c0_25, %c0_26] : memref<8x128xf32, #tpu.memory_space<vmem>>, vector<8x128xf32>
    %52 = arith.mulf %42, %51 : vector<8x128xf32>
    %53 = arith.mulf %36, %44 : vector<8x128xf32>
    %54 = arith.addf %52, %53 : vector<8x128xf32>
    %55 = math.tanh %54 : vector<8x128xf32>
    %56 = arith.mulf %50, %55 : vector<8x128xf32>
    %c0_27 = arith.constant 0 : index
    %c0_28 = arith.constant 0 : index
    %57 = vector.load %arg18[%c0_27, %c0_28] : memref<8x128xf32, #tpu.memory_space<vmem>>, vector<8x128xf32>
    tpu.vector_store %arg18[%c0_27, %c0_28], %56 {strides = array<i32>} : memref<8x128xf32, #tpu.memory_space<vmem>>, vector<8x128xf32>,
    %c0_29 = arith.constant 0 : index
    %c0_30 = arith.constant 0 : index
    %58 = vector.load %arg19[%c0_29, %c0_30] : memref<8x128xf32, #tpu.memory_space<vmem>>, vector<8x128xf32>
    tpu.vector_store %arg19[%c0_29, %c0_30], %54 {strides = array<i32>} : memref<8x128xf32, #tpu.memory_space<vmem>>, vector<8x128xf32>,
    %c1_i32_31 = arith.constant 1 : i32
    %c1_i32_32 = arith.constant 1 : i32
    %59 = arith.muli %c1_i32_31, %c1_i32_32 : i32
    %c0_i32_33 = arith.constant 0 : i32
    %60 = arith.addi %c0_i32_33, %59 : i32
    %c8_i32_34 = arith.constant 8 : i32
    %61 = arith.muli %60, %c8_i32_34 : i32
    %62 = tpu.assume_multiple %61, 8 : i32
    %63 = arith.index_cast %62 : i32 to index
    %c0_35 = arith.constant 0 : index
    %64 = vector.load %arg16[%63, %c0_35] : memref<64x512xf32, #tpu.memory_space<vmem>>, vector<8x512xf32>
    %c0_36 = arith.constant 0 : index
    %c0_37 = arith.constant 0 : index
    %65 = vector.load %arg18[%c0_36, %c0_37] : memref<8x128xf32, #tpu.memory_space<vmem>>, vector<8x128xf32>
    %c0_38 = arith.constant 0 : index
    %c0_39 = arith.constant 0 : index
    %66 = vector.load %arg2[%c0_38, %c0_39] : memref<128x512xf32, #tpu.memory_space<vmem>>, vector<128x512xf32>
    %cst_40 = arith.constant dense<0.000000e+00> : vector<8x512xf32>
    %67 = tpu.matmul %65, %66, %cst_40 {dimension_numbers = #tpu.dot_dimension_numbers<[1], [0], [0], [1], [0, 0, 1, 1], [], []>} : vector<8x128xf32>, vector<128x512xf32>, vector<8x512xf32> -> vector<8x512xf32>
    %68 = arith.addf %64, %67 : vector<8x512xf32>
    %69 = vector.extract_strided_slice %68 {offsets = [0, 0], sizes = [8, 128], strides = [1, 1]} : vector<8x512xf32> to vector<8x128xf32>
    %70 = arith.negf %69 : vector<8x128xf32>
    %71 = math.exp %70 : vector<8x128xf32>
    %cst_41 = arith.constant 1.000000e+00 : f32
    %72 = vector.broadcast %cst_41 : f32 to vector<8x128xf32>
    %73 = arith.addf %72, %71 : vector<8x128xf32>
    %74 = arith.divf %72, %73 : vector<8x128xf32>
    %75 = vector.extract_strided_slice %68 {offsets = [0, 128], sizes = [8, 128], strides = [1, 1]} : vector<8x512xf32> to vector<8x128xf32>
    %76 = arith.negf %75 : vector<8x128xf32>
    %77 = math.exp %76 : vector<8x128xf32>
    %cst_42 = arith.constant 1.000000e+00 : f32
    %78 = vector.broadcast %cst_42 : f32 to vector<8x128xf32>
    %79 = arith.addf %78, %77 : vector<8x128xf32>
    %80 = arith.divf %78, %79 : vector<8x128xf32>
    %81 = vector.extract_strided_slice %68 {offsets = [0, 256], sizes = [8, 128], strides = [1, 1]} : vector<8x512xf32> to vector<8x128xf32>
    %82 = math.tanh %81 : vector<8x128xf32>
    %83 = vector.extract_strided_slice %68 {offsets = [0, 384], sizes = [8, 128], strides = [1, 1]} : vector<8x512xf32> to vector<8x128xf32>
    %84 = arith.negf %83 : vector<8x128xf32>
    %85 = math.exp %84 : vector<8x128xf32>
    %cst_43 = arith.constant 1.000000e+00 : f32
    %86 = vector.broadcast %cst_43 : f32 to vector<8x128xf32>
    %87 = arith.addf %86, %85 : vector<8x128xf32>
    %88 = arith.divf %86, %87 : vector<8x128xf32>
    %c0_44 = arith.constant 0 : index
    %c0_45 = arith.constant 0 : index
    %89 = vector.load %arg19[%c0_44, %c0_45] : memref<8x128xf32, #tpu.memory_space<vmem>>, vector<8x128xf32>
    %90 = arith.mulf %80, %89 : vector<8x128xf32>
    %91 = arith.mulf %74, %82 : vector<8x128xf32>
    %92 = arith.addf %90, %91 : vector<8x128xf32>
    %93 = math.tanh %92 : vector<8x128xf32>
    %94 = arith.mulf %88, %93 : vector<8x128xf32>
    %c0_46 = arith.constant 0 : index
    %c0_47 = arith.constant 0 : index
    %95 = vector.load %arg18[%c0_46, %c0_47] : memref<8x128xf32, #tpu.memory_space<vmem>>, vector<8x128xf32>
    tpu.vector_store %arg18[%c0_46, %c0_47], %94 {strides = array<i32>} : memref<8x128xf32, #tpu.memory_space<vmem>>, vector<8x128xf32>,
    %c0_48 = arith.constant 0 : index
    %c0_49 = arith.constant 0 : index
    %96 = vector.load %arg19[%c0_48, %c0_49] : memref<8x128xf32, #tpu.memory_space<vmem>>, vector<8x128xf32>
    tpu.vector_store %arg19[%c0_48, %c0_49], %92 {strides = array<i32>} : memref<8x128xf32, #tpu.memory_space<vmem>>, vector<8x128xf32>,
    %c2_i32_50 = arith.constant 2 : i32
    %c1_i32_51 = arith.constant 1 : i32
    %97 = arith.muli %c2_i32_50, %c1_i32_51 : i32
    %c0_i32_52 = arith.constant 0 : i32
    %98 = arith.addi %c0_i32_52, %97 : i32
    %c8_i32_53 = arith.constant 8 : i32
    %99 = arith.muli %98, %c8_i32_53 : i32
    %100 = tpu.assume_multiple %99, 8 : i32
    %101 = arith.index_cast %100 : i32 to index
    %c0_54 = arith.constant 0 : index
    %102 = vector.load %arg16[%101, %c0_54] : memref<64x512xf32, #tpu.memory_space<vmem>>, vector<8x512xf32>
    %c0_55 = arith.constant 0 : index
    %c0_56 = arith.constant 0 : index
    %103 = vector.load %arg18[%c0_55, %c0_56] : memref<8x128xf32, #tpu.memory_space<vmem>>, vector<8x128xf32>
    %c0_57 = arith.constant 0 : index
    %c0_58 = arith.constant 0 : index
    %104 = vector.load %arg2[%c0_57, %c0_58] : memref<128x512xf32, #tpu.memory_space<vmem>>, vector<128x512xf32>
    %cst_59 = arith.constant dense<0.000000e+00> : vector<8x512xf32>
    %105 = tpu.matmul %103, %104, %cst_59 {dimension_numbers = #tpu.dot_dimension_numbers<[1], [0], [0], [1], [0, 0, 1, 1], [], []>} : vector<8x128xf32>, vector<128x512xf32>, vector<8x512xf32> -> vector<8x512xf32>
    %106 = arith.addf %102, %105 : vector<8x512xf32>
    %107 = vector.extract_strided_slice %106 {offsets = [0, 0], sizes = [8, 128], strides = [1, 1]} : vector<8x512xf32> to vector<8x128xf32>
    %108 = arith.negf %107 : vector<8x128xf32>
    %109 = math.exp %108 : vector<8x128xf32>
    %cst_60 = arith.constant 1.000000e+00 : f32
    %110 = vector.broadcast %cst_60 : f32 to vector<8x128xf32>
    %111 = arith.addf %110, %109 : vector<8x128xf32>
    %112 = arith.divf %110, %111 : vector<8x128xf32>
    %113 = vector.extract_strided_slice %106 {offsets = [0, 128], sizes = [8, 128], strides = [1, 1]} : vector<8x512xf32> to vector<8x128xf32>
    %114 = arith.negf %113 : vector<8x128xf32>
    %115 = math.exp %114 : vector<8x128xf32>
    %cst_61 = arith.constant 1.000000e+00 : f32
    %116 = vector.broadcast %cst_61 : f32 to vector<8x128xf32>
    %117 = arith.addf %116, %115 : vector<8x128xf32>
    %118 = arith.divf %116, %117 : vector<8x128xf32>
    %119 = vector.extract_strided_slice %106 {offsets = [0, 256], sizes = [8, 128], strides = [1, 1]} : vector<8x512xf32> to vector<8x128xf32>
    %120 = math.tanh %119 : vector<8x128xf32>
    %121 = vector.extract_strided_slice %106 {offsets = [0, 384], sizes = [8, 128], strides = [1, 1]} : vector<8x512xf32> to vector<8x128xf32>
    %122 = arith.negf %121 : vector<8x128xf32>
    %123 = math.exp %122 : vector<8x128xf32>
    %cst_62 = arith.constant 1.000000e+00 : f32
    %124 = vector.broadcast %cst_62 : f32 to vector<8x128xf32>
    %125 = arith.addf %124, %123 : vector<8x128xf32>
    %126 = arith.divf %124, %125 : vector<8x128xf32>
    %c0_63 = arith.constant 0 : index
    %c0_64 = arith.constant 0 : index
    %127 = vector.load %arg19[%c0_63, %c0_64] : memref<8x128xf32, #tpu.memory_space<vmem>>, vector<8x128xf32>
    %128 = arith.mulf %118, %127 : vector<8x128xf32>
    %129 = arith.mulf %112, %120 : vector<8x128xf32>
    %130 = arith.addf %128, %129 : vector<8x128xf32>
    %131 = math.tanh %130 : vector<8x128xf32>
    %132 = arith.mulf %126, %131 : vector<8x128xf32>
    %c0_65 = arith.constant 0 : index
    %c0_66 = arith.constant 0 : index
    %133 = vector.load %arg18[%c0_65, %c0_66] : memref<8x128xf32, #tpu.memory_space<vmem>>, vector<8x128xf32>
    tpu.vector_store %arg18[%c0_65, %c0_66], %132 {strides = array<i32>} : memref<8x128xf32, #tpu.memory_space<vmem>>, vector<8x128xf32>,
    %c0_67 = arith.constant 0 : index
    %c0_68 = arith.constant 0 : index
    %134 = vector.load %arg19[%c0_67, %c0_68] : memref<8x128xf32, #tpu.memory_space<vmem>>, vector<8x128xf32>
    tpu.vector_store %arg19[%c0_67, %c0_68], %130 {strides = array<i32>} : memref<8x128xf32, #tpu.memory_space<vmem>>, vector<8x128xf32>,
    %c3_i32_69 = arith.constant 3 : i32
    %c1_i32_70 = arith.constant 1 : i32
    %135 = arith.muli %c3_i32_69, %c1_i32_70 : i32
    %c0_i32_71 = arith.constant 0 : i32
    %136 = arith.addi %c0_i32_71, %135 : i32
    %c8_i32_72 = arith.constant 8 : i32
    %137 = arith.muli %136, %c8_i32_72 : i32
    %138 = tpu.assume_multiple %137, 8 : i32
    %139 = arith.index_cast %138 : i32 to index
    %c0_73 = arith.constant 0 : index
    %140 = vector.load %arg16[%139, %c0_73] : memref<64x512xf32, #tpu.memory_space<vmem>>, vector<8x512xf32>
    %c0_74 = arith.constant 0 : index
    %c0_75 = arith.constant 0 : index
    %141 = vector.load %arg18[%c0_74, %c0_75] : memref<8x128xf32, #tpu.memory_space<vmem>>, vector<8x128xf32>
    %c0_76 = arith.constant 0 : index
    %c0_77 = arith.constant 0 : index
    %142 = vector.load %arg2[%c0_76, %c0_77] : memref<128x512xf32, #tpu.memory_space<vmem>>, vector<128x512xf32>
    %cst_78 = arith.constant dense<0.000000e+00> : vector<8x512xf32>
    %143 = tpu.matmul %141, %142, %cst_78 {dimension_numbers = #tpu.dot_dimension_numbers<[1], [0], [0], [1], [0, 0, 1, 1], [], []>} : vector<8x128xf32>, vector<128x512xf32>, vector<8x512xf32> -> vector<8x512xf32>
    %144 = arith.addf %140, %143 : vector<8x512xf32>
    %145 = vector.extract_strided_slice %144 {offsets = [0, 0], sizes = [8, 128], strides = [1, 1]} : vector<8x512xf32> to vector<8x128xf32>
    %146 = arith.negf %145 : vector<8x128xf32>
    %147 = math.exp %146 : vector<8x128xf32>
    %cst_79 = arith.constant 1.000000e+00 : f32
    %148 = vector.broadcast %cst_79 : f32 to vector<8x128xf32>
    %149 = arith.addf %148, %147 : vector<8x128xf32>
    %150 = arith.divf %148, %149 : vector<8x128xf32>
    %151 = vector.extract_strided_slice %144 {offsets = [0, 128], sizes = [8, 128], strides = [1, 1]} : vector<8x512xf32> to vector<8x128xf32>
    %152 = arith.negf %151 : vector<8x128xf32>
    %153 = math.exp %152 : vector<8x128xf32>
    %cst_80 = arith.constant 1.000000e+00 : f32
    %154 = vector.broadcast %cst_80 : f32 to vector<8x128xf32>
    %155 = arith.addf %154, %153 : vector<8x128xf32>
    %156 = arith.divf %154, %155 : vector<8x128xf32>
    %157 = vector.extract_strided_slice %144 {offsets = [0, 256], sizes = [8, 128], strides = [1, 1]} : vector<8x512xf32> to vector<8x128xf32>
    %158 = math.tanh %157 : vector<8x128xf32>
    %159 = vector.extract_strided_slice %144 {offsets = [0, 384], sizes = [8, 128], strides = [1, 1]} : vector<8x512xf32> to vector<8x128xf32>
    %160 = arith.negf %159 : vector<8x128xf32>
    %161 = math.exp %160 : vector<8x128xf32>
    %cst_81 = arith.constant 1.000000e+00 : f32
    %162 = vector.broadcast %cst_81 : f32 to vector<8x128xf32>
    %163 = arith.addf %162, %161 : vector<8x128xf32>
    %164 = arith.divf %162, %163 : vector<8x128xf32>
    %c0_82 = arith.constant 0 : index
    %c0_83 = arith.constant 0 : index
    %165 = vector.load %arg19[%c0_82, %c0_83] : memref<8x128xf32, #tpu.memory_space<vmem>>, vector<8x128xf32>
    %166 = arith.mulf %156, %165 : vector<8x128xf32>
    %167 = arith.mulf %150, %158 : vector<8x128xf32>
    %168 = arith.addf %166, %167 : vector<8x128xf32>
    %169 = math.tanh %168 : vector<8x128xf32>
    %170 = arith.mulf %164, %169 : vector<8x128xf32>
    %c0_84 = arith.constant 0 : index
    %c0_85 = arith.constant 0 : index
    %171 = vector.load %arg18[%c0_84, %c0_85] : memref<8x128xf32, #tpu.memory_space<vmem>>, vector<8x128xf32>
    tpu.vector_store %arg18[%c0_84, %c0_85], %170 {strides = array<i32>} : memref<8x128xf32, #tpu.memory_space<vmem>>, vector<8x128xf32>,
    %c0_86 = arith.constant 0 : index
    %c0_87 = arith.constant 0 : index
    %172 = vector.load %arg19[%c0_86, %c0_87] : memref<8x128xf32, #tpu.memory_space<vmem>>, vector<8x128xf32>
    tpu.vector_store %arg19[%c0_86, %c0_87], %168 {strides = array<i32>} : memref<8x128xf32, #tpu.memory_space<vmem>>, vector<8x128xf32>,
    %c4_i32_88 = arith.constant 4 : i32
    %c1_i32_89 = arith.constant 1 : i32
    %173 = arith.muli %c4_i32_88, %c1_i32_89 : i32
    %c0_i32_90 = arith.constant 0 : i32
    %174 = arith.addi %c0_i32_90, %173 : i32
    %c8_i32_91 = arith.constant 8 : i32
    %175 = arith.muli %174, %c8_i32_91 : i32
    %176 = tpu.assume_multiple %175, 8 : i32
    %177 = arith.index_cast %176 : i32 to index
    %c0_92 = arith.constant 0 : index
    %178 = vector.load %arg16[%177, %c0_92] : memref<64x512xf32, #tpu.memory_space<vmem>>, vector<8x512xf32>
    %c0_93 = arith.constant 0 : index
    %c0_94 = arith.constant 0 : index
    %179 = vector.load %arg18[%c0_93, %c0_94] : memref<8x128xf32, #tpu.memory_space<vmem>>, vector<8x128xf32>
    %c0_95 = arith.constant 0 : index
    %c0_96 = arith.constant 0 : index
    %180 = vector.load %arg2[%c0_95, %c0_96] : memref<128x512xf32, #tpu.memory_space<vmem>>, vector<128x512xf32>
    %cst_97 = arith.constant dense<0.000000e+00> : vector<8x512xf32>
    %181 = tpu.matmul %179, %180, %cst_97 {dimension_numbers = #tpu.dot_dimension_numbers<[1], [0], [0], [1], [0, 0, 1, 1], [], []>} : vector<8x128xf32>, vector<128x512xf32>, vector<8x512xf32> -> vector<8x512xf32>
    %182 = arith.addf %178, %181 : vector<8x512xf32>
    %183 = vector.extract_strided_slice %182 {offsets = [0, 0], sizes = [8, 128], strides = [1, 1]} : vector<8x512xf32> to vector<8x128xf32>
    %184 = arith.negf %183 : vector<8x128xf32>
    %185 = math.exp %184 : vector<8x128xf32>
    %cst_98 = arith.constant 1.000000e+00 : f32
    %186 = vector.broadcast %cst_98 : f32 to vector<8x128xf32>
    %187 = arith.addf %186, %185 : vector<8x128xf32>
    %188 = arith.divf %186, %187 : vector<8x128xf32>
    %189 = vector.extract_strided_slice %182 {offsets = [0, 128], sizes = [8, 128], strides = [1, 1]} : vector<8x512xf32> to vector<8x128xf32>
    %190 = arith.negf %189 : vector<8x128xf32>
    %191 = math.exp %190 : vector<8x128xf32>
    %cst_99 = arith.constant 1.000000e+00 : f32
    %192 = vector.broadcast %cst_99 : f32 to vector<8x128xf32>
    %193 = arith.addf %192, %191 : vector<8x128xf32>
    %194 = arith.divf %192, %193 : vector<8x128xf32>
    %195 = vector.extract_strided_slice %182 {offsets = [0, 256], sizes = [8, 128], strides = [1, 1]} : vector<8x512xf32> to vector<8x128xf32>
    %196 = math.tanh %195 : vector<8x128xf32>
    %197 = vector.extract_strided_slice %182 {offsets = [0, 384], sizes = [8, 128], strides = [1, 1]} : vector<8x512xf32> to vector<8x128xf32>
    %198 = arith.negf %197 : vector<8x128xf32>
    %199 = math.exp %198 : vector<8x128xf32>
    %cst_100 = arith.constant 1.000000e+00 : f32
    %200 = vector.broadcast %cst_100 : f32 to vector<8x128xf32>
    %201 = arith.addf %200, %199 : vector<8x128xf32>
    %202 = arith.divf %200, %201 : vector<8x128xf32>
    %c0_101 = arith.constant 0 : index
    %c0_102 = arith.constant 0 : index
    %203 = vector.load %arg19[%c0_101, %c0_102] : memref<8x128xf32, #tpu.memory_space<vmem>>, vector<8x128xf32>
    %204 = arith.mulf %194, %203 : vector<8x128xf32>
    %205 = arith.mulf %188, %196 : vector<8x128xf32>
    %206 = arith.addf %204, %205 : vector<8x128xf32>
    %207 = math.tanh %206 : vector<8x128xf32>
    %208 = arith.mulf %202, %207 : vector<8x128xf32>
    %c0_103 = arith.constant 0 : index
    %c0_104 = arith.constant 0 : index
    %209 = vector.load %arg18[%c0_103, %c0_104] : memref<8x128xf32, #tpu.memory_space<vmem>>, vector<8x128xf32>
    tpu.vector_store %arg18[%c0_103, %c0_104], %208 {strides = array<i32>} : memref<8x128xf32, #tpu.memory_space<vmem>>, vector<8x128xf32>,
    %c0_105 = arith.constant 0 : index
    %c0_106 = arith.constant 0 : index
    %210 = vector.load %arg19[%c0_105, %c0_106] : memref<8x128xf32, #tpu.memory_space<vmem>>, vector<8x128xf32>
    tpu.vector_store %arg19[%c0_105, %c0_106], %206 {strides = array<i32>} : memref<8x128xf32, #tpu.memory_space<vmem>>, vector<8x128xf32>,
    %c5_i32 = arith.constant 5 : i32
    %c1_i32_107 = arith.constant 1 : i32
    %211 = arith.muli %c5_i32, %c1_i32_107 : i32
    %c0_i32_108 = arith.constant 0 : i32
    %212 = arith.addi %c0_i32_108, %211 : i32
    %c8_i32_109 = arith.constant 8 : i32
    %213 = arith.muli %212, %c8_i32_109 : i32
    %214 = tpu.assume_multiple %213, 8 : i32
    %215 = arith.index_cast %214 : i32 to index
    %c0_110 = arith.constant 0 : index
    %216 = vector.load %arg16[%215, %c0_110] : memref<64x512xf32, #tpu.memory_space<vmem>>, vector<8x512xf32>
    %c0_111 = arith.constant 0 : index
    %c0_112 = arith.constant 0 : index
    %217 = vector.load %arg18[%c0_111, %c0_112] : memref<8x128xf32, #tpu.memory_space<vmem>>, vector<8x128xf32>
    %c0_113 = arith.constant 0 : index
    %c0_114 = arith.constant 0 : index
    %218 = vector.load %arg2[%c0_113, %c0_114] : memref<128x512xf32, #tpu.memory_space<vmem>>, vector<128x512xf32>
    %cst_115 = arith.constant dense<0.000000e+00> : vector<8x512xf32>
    %219 = tpu.matmul %217, %218, %cst_115 {dimension_numbers = #tpu.dot_dimension_numbers<[1], [0], [0], [1], [0, 0, 1, 1], [], []>} : vector<8x128xf32>, vector<128x512xf32>, vector<8x512xf32> -> vector<8x512xf32>
    %220 = arith.addf %216, %219 : vector<8x512xf32>
    %221 = vector.extract_strided_slice %220 {offsets = [0, 0], sizes = [8, 128], strides = [1, 1]} : vector<8x512xf32> to vector<8x128xf32>
    %222 = arith.negf %221 : vector<8x128xf32>
    %223 = math.exp %222 : vector<8x128xf32>
    %cst_116 = arith.constant 1.000000e+00 : f32
    %224 = vector.broadcast %cst_116 : f32 to vector<8x128xf32>
    %225 = arith.addf %224, %223 : vector<8x128xf32>
    %226 = arith.divf %224, %225 : vector<8x128xf32>
    %227 = vector.extract_strided_slice %220 {offsets = [0, 128], sizes = [8, 128], strides = [1, 1]} : vector<8x512xf32> to vector<8x128xf32>
    %228 = arith.negf %227 : vector<8x128xf32>
    %229 = math.exp %228 : vector<8x128xf32>
    %cst_117 = arith.constant 1.000000e+00 : f32
    %230 = vector.broadcast %cst_117 : f32 to vector<8x128xf32>
    %231 = arith.addf %230, %229 : vector<8x128xf32>
    %232 = arith.divf %230, %231 : vector<8x128xf32>
    %233 = vector.extract_strided_slice %220 {offsets = [0, 256], sizes = [8, 128], strides = [1, 1]} : vector<8x512xf32> to vector<8x128xf32>
    %234 = math.tanh %233 : vector<8x128xf32>
    %235 = vector.extract_strided_slice %220 {offsets = [0, 384], sizes = [8, 128], strides = [1, 1]} : vector<8x512xf32> to vector<8x128xf32>
    %236 = arith.negf %235 : vector<8x128xf32>
    %237 = math.exp %236 : vector<8x128xf32>
    %cst_118 = arith.constant 1.000000e+00 : f32
    %238 = vector.broadcast %cst_118 : f32 to vector<8x128xf32>
    %239 = arith.addf %238, %237 : vector<8x128xf32>
    %240 = arith.divf %238, %239 : vector<8x128xf32>
    %c0_119 = arith.constant 0 : index
    %c0_120 = arith.constant 0 : index
    %241 = vector.load %arg19[%c0_119, %c0_120] : memref<8x128xf32, #tpu.memory_space<vmem>>, vector<8x128xf32>
    %242 = arith.mulf %232, %241 : vector<8x128xf32>
    %243 = arith.mulf %226, %234 : vector<8x128xf32>
    %244 = arith.addf %242, %243 : vector<8x128xf32>
    %245 = math.tanh %244 : vector<8x128xf32>
    %246 = arith.mulf %240, %245 : vector<8x128xf32>
    %c0_121 = arith.constant 0 : index
    %c0_122 = arith.constant 0 : index
    %247 = vector.load %arg18[%c0_121, %c0_122] : memref<8x128xf32, #tpu.memory_space<vmem>>, vector<8x128xf32>
    tpu.vector_store %arg18[%c0_121, %c0_122], %246 {strides = array<i32>} : memref<8x128xf32, #tpu.memory_space<vmem>>, vector<8x128xf32>,
    %c0_123 = arith.constant 0 : index
    %c0_124 = arith.constant 0 : index
    %248 = vector.load %arg19[%c0_123, %c0_124] : memref<8x128xf32, #tpu.memory_space<vmem>>, vector<8x128xf32>
    tpu.vector_store %arg19[%c0_123, %c0_124], %244 {strides = array<i32>} : memref<8x128xf32, #tpu.memory_space<vmem>>, vector<8x128xf32>,
    %c6_i32 = arith.constant 6 : i32
    %c1_i32_125 = arith.constant 1 : i32
    %249 = arith.muli %c6_i32, %c1_i32_125 : i32
    %c0_i32_126 = arith.constant 0 : i32
    %250 = arith.addi %c0_i32_126, %249 : i32
    %c8_i32_127 = arith.constant 8 : i32
    %251 = arith.muli %250, %c8_i32_127 : i32
    %252 = tpu.assume_multiple %251, 8 : i32
    %253 = arith.index_cast %252 : i32 to index
    %c0_128 = arith.constant 0 : index
    %254 = vector.load %arg16[%253, %c0_128] : memref<64x512xf32, #tpu.memory_space<vmem>>, vector<8x512xf32>
    %c0_129 = arith.constant 0 : index
    %c0_130 = arith.constant 0 : index
    %255 = vector.load %arg18[%c0_129, %c0_130] : memref<8x128xf32, #tpu.memory_space<vmem>>, vector<8x128xf32>
    %c0_131 = arith.constant 0 : index
    %c0_132 = arith.constant 0 : index
    %256 = vector.load %arg2[%c0_131, %c0_132] : memref<128x512xf32, #tpu.memory_space<vmem>>, vector<128x512xf32>
    %cst_133 = arith.constant dense<0.000000e+00> : vector<8x512xf32>
    %257 = tpu.matmul %255, %256, %cst_133 {dimension_numbers = #tpu.dot_dimension_numbers<[1], [0], [0], [1], [0, 0, 1, 1], [], []>} : vector<8x128xf32>, vector<128x512xf32>, vector<8x512xf32> -> vector<8x512xf32>
    %258 = arith.addf %254, %257 : vector<8x512xf32>
    %259 = vector.extract_strided_slice %258 {offsets = [0, 0], sizes = [8, 128], strides = [1, 1]} : vector<8x512xf32> to vector<8x128xf32>
    %260 = arith.negf %259 : vector<8x128xf32>
    %261 = math.exp %260 : vector<8x128xf32>
    %cst_134 = arith.constant 1.000000e+00 : f32
    %262 = vector.broadcast %cst_134 : f32 to vector<8x128xf32>
    %263 = arith.addf %262, %261 : vector<8x128xf32>
    %264 = arith.divf %262, %263 : vector<8x128xf32>
    %265 = vector.extract_strided_slice %258 {offsets = [0, 128], sizes = [8, 128], strides = [1, 1]} : vector<8x512xf32> to vector<8x128xf32>
    %266 = arith.negf %265 : vector<8x128xf32>
    %267 = math.exp %266 : vector<8x128xf32>
    %cst_135 = arith.constant 1.000000e+00 : f32
    %268 = vector.broadcast %cst_135 : f32 to vector<8x128xf32>
    %269 = arith.addf %268, %267 : vector<8x128xf32>
    %270 = arith.divf %268, %269 : vector<8x128xf32>
    %271 = vector.extract_strided_slice %258 {offsets = [0, 256], sizes = [8, 128], strides = [1, 1]} : vector<8x512xf32> to vector<8x128xf32>
    %272 = math.tanh %271 : vector<8x128xf32>
    %273 = vector.extract_strided_slice %258 {offsets = [0, 384], sizes = [8, 128], strides = [1, 1]} : vector<8x512xf32> to vector<8x128xf32>
    %274 = arith.negf %273 : vector<8x128xf32>
    %275 = math.exp %274 : vector<8x128xf32>
    %cst_136 = arith.constant 1.000000e+00 : f32
    %276 = vector.broadcast %cst_136 : f32 to vector<8x128xf32>
    %277 = arith.addf %276, %275 : vector<8x128xf32>
    %278 = arith.divf %276, %277 : vector<8x128xf32>
    %c0_137 = arith.constant 0 : index
    %c0_138 = arith.constant 0 : index
    %279 = vector.load %arg19[%c0_137, %c0_138] : memref<8x128xf32, #tpu.memory_space<vmem>>, vector<8x128xf32>
    %280 = arith.mulf %270, %279 : vector<8x128xf32>
    %281 = arith.mulf %264, %272 : vector<8x128xf32>
    %282 = arith.addf %280, %281 : vector<8x128xf32>
    %283 = math.tanh %282 : vector<8x128xf32>
    %284 = arith.mulf %278, %283 : vector<8x128xf32>
    %c0_139 = arith.constant 0 : index
    %c0_140 = arith.constant 0 : index
    %285 = vector.load %arg18[%c0_139, %c0_140] : memref<8x128xf32, #tpu.memory_space<vmem>>, vector<8x128xf32>
    tpu.vector_store %arg18[%c0_139, %c0_140], %284 {strides = array<i32>} : memref<8x128xf32, #tpu.memory_space<vmem>>, vector<8x128xf32>,
    %c0_141 = arith.constant 0 : index
    %c0_142 = arith.constant 0 : index
    %286 = vector.load %arg19[%c0_141, %c0_142] : memref<8x128xf32, #tpu.memory_space<vmem>>, vector<8x128xf32>
    tpu.vector_store %arg19[%c0_141, %c0_142], %282 {strides = array<i32>} : memref<8x128xf32, #tpu.memory_space<vmem>>, vector<8x128xf32>,
    %c7_i32 = arith.constant 7 : i32
    %c1_i32_143 = arith.constant 1 : i32
    %287 = arith.muli %c7_i32, %c1_i32_143 : i32
    %c0_i32_144 = arith.constant 0 : i32
    %288 = arith.addi %c0_i32_144, %287 : i32
    %c8_i32_145 = arith.constant 8 : i32
    %289 = arith.muli %288, %c8_i32_145 : i32
    %290 = tpu.assume_multiple %289, 8 : i32
    %291 = arith.index_cast %290 : i32 to index
    %c0_146 = arith.constant 0 : index
    %292 = vector.load %arg16[%291, %c0_146] : memref<64x512xf32, #tpu.memory_space<vmem>>, vector<8x512xf32>
    %c0_147 = arith.constant 0 : index
    %c0_148 = arith.constant 0 : index
    %293 = vector.load %arg18[%c0_147, %c0_148] : memref<8x128xf32, #tpu.memory_space<vmem>>, vector<8x128xf32>
    %c0_149 = arith.constant 0 : index
    %c0_150 = arith.constant 0 : index
    %294 = vector.load %arg2[%c0_149, %c0_150] : memref<128x512xf32, #tpu.memory_space<vmem>>, vector<128x512xf32>
    %cst_151 = arith.constant dense<0.000000e+00> : vector<8x512xf32>
    %295 = tpu.matmul %293, %294, %cst_151 {dimension_numbers = #tpu.dot_dimension_numbers<[1], [0], [0], [1], [0, 0, 1, 1], [], []>} : vector<8x128xf32>, vector<128x512xf32>, vector<8x512xf32> -> vector<8x512xf32>
    %296 = arith.addf %292, %295 : vector<8x512xf32>
    %297 = vector.extract_strided_slice %296 {offsets = [0, 0], sizes = [8, 128], strides = [1, 1]} : vector<8x512xf32> to vector<8x128xf32>
    %298 = arith.negf %297 : vector<8x128xf32>
    %299 = math.exp %298 : vector<8x128xf32>
    %cst_152 = arith.constant 1.000000e+00 : f32
    %300 = vector.broadcast %cst_152 : f32 to vector<8x128xf32>
    %301 = arith.addf %300, %299 : vector<8x128xf32>
    %302 = arith.divf %300, %301 : vector<8x128xf32>
    %303 = vector.extract_strided_slice %296 {offsets = [0, 128], sizes = [8, 128], strides = [1, 1]} : vector<8x512xf32> to vector<8x128xf32>
    %304 = arith.negf %303 : vector<8x128xf32>
    %305 = math.exp %304 : vector<8x128xf32>
    %cst_153 = arith.constant 1.000000e+00 : f32
    %306 = vector.broadcast %cst_153 : f32 to vector<8x128xf32>
    %307 = arith.addf %306, %305 : vector<8x128xf32>
    %308 = arith.divf %306, %307 : vector<8x128xf32>
    %309 = vector.extract_strided_slice %296 {offsets = [0, 256], sizes = [8, 128], strides = [1, 1]} : vector<8x512xf32> to vector<8x128xf32>
    %310 = math.tanh %309 : vector<8x128xf32>
    %311 = vector.extract_strided_slice %296 {offsets = [0, 384], sizes = [8, 128], strides = [1, 1]} : vector<8x512xf32> to vector<8x128xf32>
    %312 = arith.negf %311 : vector<8x128xf32>
    %313 = math.exp %312 : vector<8x128xf32>
    %cst_154 = arith.constant 1.000000e+00 : f32
    %314 = vector.broadcast %cst_154 : f32 to vector<8x128xf32>
    %315 = arith.addf %314, %313 : vector<8x128xf32>
    %316 = arith.divf %314, %315 : vector<8x128xf32>
    %c0_155 = arith.constant 0 : index
    %c0_156 = arith.constant 0 : index
    %317 = vector.load %arg19[%c0_155, %c0_156] : memref<8x128xf32, #tpu.memory_space<vmem>>, vector<8x128xf32>
    %318 = arith.mulf %308, %317 : vector<8x128xf32>
    %319 = arith.mulf %302, %310 : vector<8x128xf32>
    %320 = arith.addf %318, %319 : vector<8x128xf32>
    %321 = math.tanh %320 : vector<8x128xf32>
    %322 = arith.mulf %316, %321 : vector<8x128xf32>
    %c0_157 = arith.constant 0 : index
    %c0_158 = arith.constant 0 : index
    %323 = vector.load %arg18[%c0_157, %c0_158] : memref<8x128xf32, #tpu.memory_space<vmem>>, vector<8x128xf32>
    tpu.vector_store %arg18[%c0_157, %c0_158], %322 {strides = array<i32>} : memref<8x128xf32, #tpu.memory_space<vmem>>, vector<8x128xf32>,
    %c0_159 = arith.constant 0 : index
    %c0_160 = arith.constant 0 : index
    %324 = vector.load %arg19[%c0_159, %c0_160] : memref<8x128xf32, #tpu.memory_space<vmem>>, vector<8x128xf32>
    tpu.vector_store %arg19[%c0_159, %c0_160], %320 {strides = array<i32>} : memref<8x128xf32, #tpu.memory_space<vmem>>, vector<8x128xf32>,
    %c8_i32_161 = arith.constant 8 : i32
    %c0_i32_162 = arith.constant 0 : i32
    %325 = tpu.memref_slice %arg15[%c0_i32_162] : memref<5x!tpu.dma_semaphore, #tpu.memory_space<semaphore_mem>> -> memref<1x!tpu.dma_semaphore, #tpu.memory_space<semaphore_mem>>
    %326 = tpu.memref_squeeze %325 : memref<1x!tpu.dma_semaphore, #tpu.memory_space<semaphore_mem>> -> memref<!tpu.dma_semaphore, #tpu.memory_space<semaphore_mem>>
    tpu.wait_dma2 semaphore(%326 : memref<!tpu.dma_semaphore, #tpu.memory_space<semaphore_mem>>) src(%arg4 : memref<128x512xf32, #tpu.memory_space<any>>) dst(%arg10 : memref<128x512xf32, #tpu.memory_space<vmem>>)
    %c1_i32_163 = arith.constant 1 : i32
    %327 = tpu.memref_slice %arg15[%c1_i32_163] : memref<5x!tpu.dma_semaphore, #tpu.memory_space<semaphore_mem>> -> memref<1x!tpu.dma_semaphore, #tpu.memory_space<semaphore_mem>>
    %328 = tpu.memref_squeeze %327 : memref<1x!tpu.dma_semaphore, #tpu.memory_space<semaphore_mem>> -> memref<!tpu.dma_semaphore, #tpu.memory_space<semaphore_mem>>
    tpu.wait_dma2 semaphore(%328 : memref<!tpu.dma_semaphore, #tpu.memory_space<semaphore_mem>>) src(%arg5 : memref<128x512xf32, #tpu.memory_space<any>>) dst(%arg11 : memref<128x512xf32, #tpu.memory_space<vmem>>)
    %c2_i32_164 = arith.constant 2 : i32
    %329 = tpu.memref_slice %arg15[%c2_i32_164] : memref<5x!tpu.dma_semaphore, #tpu.memory_space<semaphore_mem>> -> memref<1x!tpu.dma_semaphore, #tpu.memory_space<semaphore_mem>>
    %330 = tpu.memref_squeeze %329 : memref<1x!tpu.dma_semaphore, #tpu.memory_space<semaphore_mem>> -> memref<!tpu.dma_semaphore, #tpu.memory_space<semaphore_mem>>
    tpu.wait_dma2 semaphore(%330 : memref<!tpu.dma_semaphore, #tpu.memory_space<semaphore_mem>>) src(%arg6 : memref<8x512xf32, #tpu.memory_space<any>>) dst(%arg12 : memref<8x512xf32, #tpu.memory_space<vmem>>)
    %c0_165 = arith.constant 0 : index
    %c0_166 = arith.constant 0 : index
    %331 = vector.load %arg18[%c0_165, %c0_166] : memref<8x128xf32, #tpu.memory_space<vmem>>, vector<8x128xf32>
    %c0_167 = arith.constant 0 : index
    %c0_168 = arith.constant 0 : index
    %332 = vector.load %arg10[%c0_167, %c0_168] : memref<128x512xf32, #tpu.memory_space<vmem>>, vector<128x512xf32>
    %cst_169 = arith.constant dense<0.000000e+00> : vector<8x512xf32>
    %333 = tpu.matmul %331, %332, %cst_169 {dimension_numbers = #tpu.dot_dimension_numbers<[1], [0], [0], [1], [0, 0, 1, 1], [], []>} : vector<8x128xf32>, vector<128x512xf32>, vector<8x512xf32> -> vector<8x512xf32>
    %c0_170 = arith.constant 0 : index
    %c0_171 = arith.constant 0 : index
    %334 = vector.load %arg12[%c0_170, %c0_171] : memref<8x512xf32, #tpu.memory_space<vmem>>, vector<8x512xf32>
    %335 = arith.addf %333, %334 : vector<8x512xf32>
    %336 = vector.extract_strided_slice %335 {offsets = [0, 0], sizes = [8, 128], strides = [1, 1]} : vector<8x512xf32> to vector<8x128xf32>
    %337 = arith.negf %336 : vector<8x128xf32>
    %338 = math.exp %337 : vector<8x128xf32>
    %cst_172 = arith.constant 1.000000e+00 : f32
    %339 = vector.broadcast %cst_172 : f32 to vector<8x128xf32>
    %340 = arith.addf %339, %338 : vector<8x128xf32>
    %341 = arith.divf %339, %340 : vector<8x128xf32>
    %342 = vector.extract_strided_slice %335 {offsets = [0, 128], sizes = [8, 128], strides = [1, 1]} : vector<8x512xf32> to vector<8x128xf32>
    %343 = arith.negf %342 : vector<8x128xf32>
    %344 = math.exp %343 : vector<8x128xf32>
    %cst_173 = arith.constant 1.000000e+00 : f32
    %345 = vector.broadcast %cst_173 : f32 to vector<8x128xf32>
    %346 = arith.addf %345, %344 : vector<8x128xf32>
    %347 = arith.divf %345, %346 : vector<8x128xf32>
    %348 = vector.extract_strided_slice %335 {offsets = [0, 256], sizes = [8, 128], strides = [1, 1]} : vector<8x512xf32> to vector<8x128xf32>
    %349 = math.tanh %348 : vector<8x128xf32>
    %350 = vector.extract_strided_slice %335 {offsets = [0, 384], sizes = [8, 128], strides = [1, 1]} : vector<8x512xf32> to vector<8x128xf32>
    %351 = arith.negf %350 : vector<8x128xf32>
    %352 = math.exp %351 : vector<8x128xf32>
    %cst_174 = arith.constant 1.000000e+00 : f32
    %353 = vector.broadcast %cst_174 : f32 to vector<8x128xf32>
    %354 = arith.addf %353, %352 : vector<8x128xf32>
    %355 = arith.divf %353, %354 : vector<8x128xf32>
    %c0_175 = arith.constant 0 : index
    %c0_176 = arith.constant 0 : index
    %356 = vector.load %arg19[%c0_175, %c0_176] : memref<8x128xf32, #tpu.memory_space<vmem>>, vector<8x128xf32>
    %357 = arith.mulf %347, %356 : vector<8x128xf32>
    %358 = arith.mulf %341, %349 : vector<8x128xf32>
    %359 = arith.addf %357, %358 : vector<8x128xf32>
    %360 = math.tanh %359 : vector<8x128xf32>
    %361 = arith.mulf %355, %360 : vector<8x128xf32>
    %c0_177 = arith.constant 0 : index
    %c0_178 = arith.constant 0 : index
    %362 = vector.load %arg18[%c0_177, %c0_178] : memref<8x128xf32, #tpu.memory_space<vmem>>, vector<8x128xf32>
    tpu.vector_store %arg18[%c0_177, %c0_178], %361 {strides = array<i32>} : memref<8x128xf32, #tpu.memory_space<vmem>>, vector<8x128xf32>,
    %c0_179 = arith.constant 0 : index
    %c0_180 = arith.constant 0 : index
    %363 = vector.load %arg19[%c0_179, %c0_180] : memref<8x128xf32, #tpu.memory_space<vmem>>, vector<8x128xf32>
    tpu.vector_store %arg19[%c0_179, %c0_180], %359 {strides = array<i32>} : memref<8x128xf32, #tpu.memory_space<vmem>>, vector<8x128xf32>,
    %c0_181 = arith.constant 0 : index
    %c0_182 = arith.constant 0 : index
    %364 = vector.load %arg18[%c0_181, %c0_182] : memref<8x128xf32, #tpu.memory_space<vmem>>, vector<8x128xf32>
    %c0_183 = arith.constant 0 : index
    %c0_184 = arith.constant 0 : index
    %365 = vector.load %arg17[%c0_183, %c0_184] : memref<48x128xf32, #tpu.memory_space<vmem>>, vector<8x128xf32>
    tpu.vector_store %arg17[%c0_183, %c0_184], %364 {strides = array<i32>} : memref<48x128xf32, #tpu.memory_space<vmem>>, vector<8x128xf32>,
    %c0_i32_185 = arith.constant 0 : i32
    %c1_i32_186 = arith.constant 1 : i32
    %366 = arith.muli %c0_i32_185, %c1_i32_186 : i32
    %c1_i32_187 = arith.constant 1 : i32
    %367 = arith.addi %c1_i32_187, %366 : i32
    %c0_188 = arith.constant 0 : index
    %c0_189 = arith.constant 0 : index
    %368 = vector.load %arg18[%c0_188, %c0_189] : memref<8x128xf32, #tpu.memory_space<vmem>>, vector<8x128xf32>
    %c0_190 = arith.constant 0 : index
    %c0_191 = arith.constant 0 : index
    %369 = vector.load %arg11[%c0_190, %c0_191] : memref<128x512xf32, #tpu.memory_space<vmem>>, vector<128x512xf32>
    %cst_192 = arith.constant dense<0.000000e+00> : vector<8x512xf32>
    %370 = tpu.matmul %368, %369, %cst_192 {dimension_numbers = #tpu.dot_dimension_numbers<[1], [0], [0], [1], [0, 0, 1, 1], [], []>} : vector<8x128xf32>, vector<128x512xf32>, vector<8x512xf32> -> vector<8x512xf32>
    %c0_193 = arith.constant 0 : index
    %c0_194 = arith.constant 0 : index
    %371 = vector.load %arg12[%c0_193, %c0_194] : memref<8x512xf32, #tpu.memory_space<vmem>>, vector<8x512xf32>
    %372 = arith.addf %370, %371 : vector<8x512xf32>
    %373 = vector.extract_strided_slice %372 {offsets = [0, 0], sizes = [8, 128], strides = [1, 1]} : vector<8x512xf32> to vector<8x128xf32>
    %374 = arith.negf %373 : vector<8x128xf32>
    %375 = math.exp %374 : vector<8x128xf32>
    %cst_195 = arith.constant 1.000000e+00 : f32
    %376 = vector.broadcast %cst_195 : f32 to vector<8x128xf32>
    %377 = arith.addf %376, %375 : vector<8x128xf32>
    %378 = arith.divf %376, %377 : vector<8x128xf32>
    %379 = vector.extract_strided_slice %372 {offsets = [0, 128], sizes = [8, 128], strides = [1, 1]} : vector<8x512xf32> to vector<8x128xf32>
    %380 = arith.negf %379 : vector<8x128xf32>
    %381 = math.exp %380 : vector<8x128xf32>
    %cst_196 = arith.constant 1.000000e+00 : f32
    %382 = vector.broadcast %cst_196 : f32 to vector<8x128xf32>
    %383 = arith.addf %382, %381 : vector<8x128xf32>
    %384 = arith.divf %382, %383 : vector<8x128xf32>
    %385 = vector.extract_strided_slice %372 {offsets = [0, 256], sizes = [8, 128], strides = [1, 1]} : vector<8x512xf32> to vector<8x128xf32>
    %386 = math.tanh %385 : vector<8x128xf32>
    %387 = vector.extract_strided_slice %372 {offsets = [0, 384], sizes = [8, 128], strides = [1, 1]} : vector<8x512xf32> to vector<8x128xf32>
    %388 = arith.negf %387 : vector<8x128xf32>
    %389 = math.exp %388 : vector<8x128xf32>
    %cst_197 = arith.constant 1.000000e+00 : f32
    %390 = vector.broadcast %cst_197 : f32 to vector<8x128xf32>
    %391 = arith.addf %390, %389 : vector<8x128xf32>
    %392 = arith.divf %390, %391 : vector<8x128xf32>
    %c0_198 = arith.constant 0 : index
    %c0_199 = arith.constant 0 : index
    %393 = vector.load %arg19[%c0_198, %c0_199] : memref<8x128xf32, #tpu.memory_space<vmem>>, vector<8x128xf32>
    %394 = arith.mulf %384, %393 : vector<8x128xf32>
    %395 = arith.mulf %378, %386 : vector<8x128xf32>
    %396 = arith.addf %394, %395 : vector<8x128xf32>
    %397 = math.tanh %396 : vector<8x128xf32>
    %398 = arith.mulf %392, %397 : vector<8x128xf32>
    %c0_200 = arith.constant 0 : index
    %c0_201 = arith.constant 0 : index
    %399 = vector.load %arg18[%c0_200, %c0_201] : memref<8x128xf32, #tpu.memory_space<vmem>>, vector<8x128xf32>
    tpu.vector_store %arg18[%c0_200, %c0_201], %398 {strides = array<i32>} : memref<8x128xf32, #tpu.memory_space<vmem>>, vector<8x128xf32>,
    %c0_202 = arith.constant 0 : index
    %c0_203 = arith.constant 0 : index
    %400 = vector.load %arg19[%c0_202, %c0_203] : memref<8x128xf32, #tpu.memory_space<vmem>>, vector<8x128xf32>
    tpu.vector_store %arg19[%c0_202, %c0_203], %396 {strides = array<i32>} : memref<8x128xf32, #tpu.memory_space<vmem>>, vector<8x128xf32>,
    %c8_i32_204 = arith.constant 8 : i32
    %401 = arith.muli %367, %c8_i32_204 : i32
    %402 = tpu.assume_multiple %401, 8 : i32
    %c0_205 = arith.constant 0 : index
    %c0_206 = arith.constant 0 : index
    %403 = vector.load %arg18[%c0_205, %c0_206] : memref<8x128xf32, #tpu.memory_space<vmem>>, vector<8x128xf32>
    %404 = arith.index_cast %402 : i32 to index
    %c0_207 = arith.constant 0 : index
    %405 = vector.load %arg17[%404, %c0_207] : memref<48x128xf32, #tpu.memory_space<vmem>>, vector<8x128xf32>
    tpu.vector_store %arg17[%404, %c0_207], %403 {strides = array<i32>} : memref<48x128xf32, #tpu.memory_space<vmem>>, vector<8x128xf32>,
    %c1_i32_208 = arith.constant 1 : i32
    %c1_i32_209 = arith.constant 1 : i32
    %406 = arith.muli %c1_i32_208, %c1_i32_209 : i32
    %c1_i32_210 = arith.constant 1 : i32
    %407 = arith.addi %c1_i32_210, %406 : i32
    %c0_211 = arith.constant 0 : index
    %c0_212 = arith.constant 0 : index
    %408 = vector.load %arg18[%c0_211, %c0_212] : memref<8x128xf32, #tpu.memory_space<vmem>>, vector<8x128xf32>
    %c0_213 = arith.constant 0 : index
    %c0_214 = arith.constant 0 : index
    %409 = vector.load %arg11[%c0_213, %c0_214] : memref<128x512xf32, #tpu.memory_space<vmem>>, vector<128x512xf32>
    %cst_215 = arith.constant dense<0.000000e+00> : vector<8x512xf32>
    %410 = tpu.matmul %408, %409, %cst_215 {dimension_numbers = #tpu.dot_dimension_numbers<[1], [0], [0], [1], [0, 0, 1, 1], [], []>} : vector<8x128xf32>, vector<128x512xf32>, vector<8x512xf32> -> vector<8x512xf32>
    %c0_216 = arith.constant 0 : index
    %c0_217 = arith.constant 0 : index
    %411 = vector.load %arg12[%c0_216, %c0_217] : memref<8x512xf32, #tpu.memory_space<vmem>>, vector<8x512xf32>
    %412 = arith.addf %410, %411 : vector<8x512xf32>
    %413 = vector.extract_strided_slice %412 {offsets = [0, 0], sizes = [8, 128], strides = [1, 1]} : vector<8x512xf32> to vector<8x128xf32>
    %414 = arith.negf %413 : vector<8x128xf32>
    %415 = math.exp %414 : vector<8x128xf32>
    %cst_218 = arith.constant 1.000000e+00 : f32
    %416 = vector.broadcast %cst_218 : f32 to vector<8x128xf32>
    %417 = arith.addf %416, %415 : vector<8x128xf32>
    %418 = arith.divf %416, %417 : vector<8x128xf32>
    %419 = vector.extract_strided_slice %412 {offsets = [0, 128], sizes = [8, 128], strides = [1, 1]} : vector<8x512xf32> to vector<8x128xf32>
    %420 = arith.negf %419 : vector<8x128xf32>
    %421 = math.exp %420 : vector<8x128xf32>
    %cst_219 = arith.constant 1.000000e+00 : f32
    %422 = vector.broadcast %cst_219 : f32 to vector<8x128xf32>
    %423 = arith.addf %422, %421 : vector<8x128xf32>
    %424 = arith.divf %422, %423 : vector<8x128xf32>
    %425 = vector.extract_strided_slice %412 {offsets = [0, 256], sizes = [8, 128], strides = [1, 1]} : vector<8x512xf32> to vector<8x128xf32>
    %426 = math.tanh %425 : vector<8x128xf32>
    %427 = vector.extract_strided_slice %412 {offsets = [0, 384], sizes = [8, 128], strides = [1, 1]} : vector<8x512xf32> to vector<8x128xf32>
    %428 = arith.negf %427 : vector<8x128xf32>
    %429 = math.exp %428 : vector<8x128xf32>
    %cst_220 = arith.constant 1.000000e+00 : f32
    %430 = vector.broadcast %cst_220 : f32 to vector<8x128xf32>
    %431 = arith.addf %430, %429 : vector<8x128xf32>
    %432 = arith.divf %430, %431 : vector<8x128xf32>
    %c0_221 = arith.constant 0 : index
    %c0_222 = arith.constant 0 : index
    %433 = vector.load %arg19[%c0_221, %c0_222] : memref<8x128xf32, #tpu.memory_space<vmem>>, vector<8x128xf32>
    %434 = arith.mulf %424, %433 : vector<8x128xf32>
    %435 = arith.mulf %418, %426 : vector<8x128xf32>
    %436 = arith.addf %434, %435 : vector<8x128xf32>
    %437 = math.tanh %436 : vector<8x128xf32>
    %438 = arith.mulf %432, %437 : vector<8x128xf32>
    %c0_223 = arith.constant 0 : index
    %c0_224 = arith.constant 0 : index
    %439 = vector.load %arg18[%c0_223, %c0_224] : memref<8x128xf32, #tpu.memory_space<vmem>>, vector<8x128xf32>
    tpu.vector_store %arg18[%c0_223, %c0_224], %438 {strides = array<i32>} : memref<8x128xf32, #tpu.memory_space<vmem>>, vector<8x128xf32>,
    %c0_225 = arith.constant 0 : index
    %c0_226 = arith.constant 0 : index
    %440 = vector.load %arg19[%c0_225, %c0_226] : memref<8x128xf32, #tpu.memory_space<vmem>>, vector<8x128xf32>
    tpu.vector_store %arg19[%c0_225, %c0_226], %436 {strides = array<i32>} : memref<8x128xf32, #tpu.memory_space<vmem>>, vector<8x128xf32>,
    %c8_i32_227 = arith.constant 8 : i32
    %441 = arith.muli %407, %c8_i32_227 : i32
    %442 = tpu.assume_multiple %441, 8 : i32
    %c0_228 = arith.constant 0 : index
    %c0_229 = arith.constant 0 : index
    %443 = vector.load %arg18[%c0_228, %c0_229] : memref<8x128xf32, #tpu.memory_space<vmem>>, vector<8x128xf32>
    %444 = arith.index_cast %442 : i32 to index
    %c0_230 = arith.constant 0 : index
    %445 = vector.load %arg17[%444, %c0_230] : memref<48x128xf32, #tpu.memory_space<vmem>>, vector<8x128xf32>
    tpu.vector_store %arg17[%444, %c0_230], %443 {strides = array<i32>} : memref<48x128xf32, #tpu.memory_space<vmem>>, vector<8x128xf32>,
    %c2_i32_231 = arith.constant 2 : i32
    %c1_i32_232 = arith.constant 1 : i32
    %446 = arith.muli %c2_i32_231, %c1_i32_232 : i32
    %c1_i32_233 = arith.constant 1 : i32
    %447 = arith.addi %c1_i32_233, %446 : i32
    %c0_234 = arith.constant 0 : index
    %c0_235 = arith.constant 0 : index
    %448 = vector.load %arg18[%c0_234, %c0_235] : memref<8x128xf32, #tpu.memory_space<vmem>>, vector<8x128xf32>
    %c0_236 = arith.constant 0 : index
    %c0_237 = arith.constant 0 : index
    %449 = vector.load %arg11[%c0_236, %c0_237] : memref<128x512xf32, #tpu.memory_space<vmem>>, vector<128x512xf32>
    %cst_238 = arith.constant dense<0.000000e+00> : vector<8x512xf32>
    %450 = tpu.matmul %448, %449, %cst_238 {dimension_numbers = #tpu.dot_dimension_numbers<[1], [0], [0], [1], [0, 0, 1, 1], [], []>} : vector<8x128xf32>, vector<128x512xf32>, vector<8x512xf32> -> vector<8x512xf32>
    %c0_239 = arith.constant 0 : index
    %c0_240 = arith.constant 0 : index
    %451 = vector.load %arg12[%c0_239, %c0_240] : memref<8x512xf32, #tpu.memory_space<vmem>>, vector<8x512xf32>
    %452 = arith.addf %450, %451 : vector<8x512xf32>
    %453 = vector.extract_strided_slice %452 {offsets = [0, 0], sizes = [8, 128], strides = [1, 1]} : vector<8x512xf32> to vector<8x128xf32>
    %454 = arith.negf %453 : vector<8x128xf32>
    %455 = math.exp %454 : vector<8x128xf32>
    %cst_241 = arith.constant 1.000000e+00 : f32
    %456 = vector.broadcast %cst_241 : f32 to vector<8x128xf32>
    %457 = arith.addf %456, %455 : vector<8x128xf32>
    %458 = arith.divf %456, %457 : vector<8x128xf32>
    %459 = vector.extract_strided_slice %452 {offsets = [0, 128], sizes = [8, 128], strides = [1, 1]} : vector<8x512xf32> to vector<8x128xf32>
    %460 = arith.negf %459 : vector<8x128xf32>
    %461 = math.exp %460 : vector<8x128xf32>
    %cst_242 = arith.constant 1.000000e+00 : f32
    %462 = vector.broadcast %cst_242 : f32 to vector<8x128xf32>
    %463 = arith.addf %462, %461 : vector<8x128xf32>
    %464 = arith.divf %462, %463 : vector<8x128xf32>
    %465 = vector.extract_strided_slice %452 {offsets = [0, 256], sizes = [8, 128], strides = [1, 1]} : vector<8x512xf32> to vector<8x128xf32>
    %466 = math.tanh %465 : vector<8x128xf32>
    %467 = vector.extract_strided_slice %452 {offsets = [0, 384], sizes = [8, 128], strides = [1, 1]} : vector<8x512xf32> to vector<8x128xf32>
    %468 = arith.negf %467 : vector<8x128xf32>
    %469 = math.exp %468 : vector<8x128xf32>
    %cst_243 = arith.constant 1.000000e+00 : f32
    %470 = vector.broadcast %cst_243 : f32 to vector<8x128xf32>
    %471 = arith.addf %470, %469 : vector<8x128xf32>
    %472 = arith.divf %470, %471 : vector<8x128xf32>
    %c0_244 = arith.constant 0 : index
    %c0_245 = arith.constant 0 : index
    %473 = vector.load %arg19[%c0_244, %c0_245] : memref<8x128xf32, #tpu.memory_space<vmem>>, vector<8x128xf32>
    %474 = arith.mulf %464, %473 : vector<8x128xf32>
    %475 = arith.mulf %458, %466 : vector<8x128xf32>
    %476 = arith.addf %474, %475 : vector<8x128xf32>
    %477 = math.tanh %476 : vector<8x128xf32>
    %478 = arith.mulf %472, %477 : vector<8x128xf32>
    %c0_246 = arith.constant 0 : index
    %c0_247 = arith.constant 0 : index
    %479 = vector.load %arg18[%c0_246, %c0_247] : memref<8x128xf32, #tpu.memory_space<vmem>>, vector<8x128xf32>
    tpu.vector_store %arg18[%c0_246, %c0_247], %478 {strides = array<i32>} : memref<8x128xf32, #tpu.memory_space<vmem>>, vector<8x128xf32>,
    %c0_248 = arith.constant 0 : index
    %c0_249 = arith.constant 0 : index
    %480 = vector.load %arg19[%c0_248, %c0_249] : memref<8x128xf32, #tpu.memory_space<vmem>>, vector<8x128xf32>
    tpu.vector_store %arg19[%c0_248, %c0_249], %476 {strides = array<i32>} : memref<8x128xf32, #tpu.memory_space<vmem>>, vector<8x128xf32>,
    %c8_i32_250 = arith.constant 8 : i32
    %481 = arith.muli %447, %c8_i32_250 : i32
    %482 = tpu.assume_multiple %481, 8 : i32
    %c0_251 = arith.constant 0 : index
    %c0_252 = arith.constant 0 : index
    %483 = vector.load %arg18[%c0_251, %c0_252] : memref<8x128xf32, #tpu.memory_space<vmem>>, vector<8x128xf32>
    %484 = arith.index_cast %482 : i32 to index
    %c0_253 = arith.constant 0 : index
    %485 = vector.load %arg17[%484, %c0_253] : memref<48x128xf32, #tpu.memory_space<vmem>>, vector<8x128xf32>
    tpu.vector_store %arg17[%484, %c0_253], %483 {strides = array<i32>} : memref<48x128xf32, #tpu.memory_space<vmem>>, vector<8x128xf32>,
    %c3_i32_254 = arith.constant 3 : i32
    %c1_i32_255 = arith.constant 1 : i32
    %486 = arith.muli %c3_i32_254, %c1_i32_255 : i32
    %c1_i32_256 = arith.constant 1 : i32
    %487 = arith.addi %c1_i32_256, %486 : i32
    %c0_257 = arith.constant 0 : index
    %c0_258 = arith.constant 0 : index
    %488 = vector.load %arg18[%c0_257, %c0_258] : memref<8x128xf32, #tpu.memory_space<vmem>>, vector<8x128xf32>
    %c0_259 = arith.constant 0 : index
    %c0_260 = arith.constant 0 : index
    %489 = vector.load %arg11[%c0_259, %c0_260] : memref<128x512xf32, #tpu.memory_space<vmem>>, vector<128x512xf32>
    %cst_261 = arith.constant dense<0.000000e+00> : vector<8x512xf32>
    %490 = tpu.matmul %488, %489, %cst_261 {dimension_numbers = #tpu.dot_dimension_numbers<[1], [0], [0], [1], [0, 0, 1, 1], [], []>} : vector<8x128xf32>, vector<128x512xf32>, vector<8x512xf32> -> vector<8x512xf32>
    %c0_262 = arith.constant 0 : index
    %c0_263 = arith.constant 0 : index
    %491 = vector.load %arg12[%c0_262, %c0_263] : memref<8x512xf32, #tpu.memory_space<vmem>>, vector<8x512xf32>
    %492 = arith.addf %490, %491 : vector<8x512xf32>
    %493 = vector.extract_strided_slice %492 {offsets = [0, 0], sizes = [8, 128], strides = [1, 1]} : vector<8x512xf32> to vector<8x128xf32>
    %494 = arith.negf %493 : vector<8x128xf32>
    %495 = math.exp %494 : vector<8x128xf32>
    %cst_264 = arith.constant 1.000000e+00 : f32
    %496 = vector.broadcast %cst_264 : f32 to vector<8x128xf32>
    %497 = arith.addf %496, %495 : vector<8x128xf32>
    %498 = arith.divf %496, %497 : vector<8x128xf32>
    %499 = vector.extract_strided_slice %492 {offsets = [0, 128], sizes = [8, 128], strides = [1, 1]} : vector<8x512xf32> to vector<8x128xf32>
    %500 = arith.negf %499 : vector<8x128xf32>
    %501 = math.exp %500 : vector<8x128xf32>
    %cst_265 = arith.constant 1.000000e+00 : f32
    %502 = vector.broadcast %cst_265 : f32 to vector<8x128xf32>
    %503 = arith.addf %502, %501 : vector<8x128xf32>
    %504 = arith.divf %502, %503 : vector<8x128xf32>
    %505 = vector.extract_strided_slice %492 {offsets = [0, 256], sizes = [8, 128], strides = [1, 1]} : vector<8x512xf32> to vector<8x128xf32>
    %506 = math.tanh %505 : vector<8x128xf32>
    %507 = vector.extract_strided_slice %492 {offsets = [0, 384], sizes = [8, 128], strides = [1, 1]} : vector<8x512xf32> to vector<8x128xf32>
    %508 = arith.negf %507 : vector<8x128xf32>
    %509 = math.exp %508 : vector<8x128xf32>
    %cst_266 = arith.constant 1.000000e+00 : f32
    %510 = vector.broadcast %cst_266 : f32 to vector<8x128xf32>
    %511 = arith.addf %510, %509 : vector<8x128xf32>
    %512 = arith.divf %510, %511 : vector<8x128xf32>
    %c0_267 = arith.constant 0 : index
    %c0_268 = arith.constant 0 : index
    %513 = vector.load %arg19[%c0_267, %c0_268] : memref<8x128xf32, #tpu.memory_space<vmem>>, vector<8x128xf32>
    %514 = arith.mulf %504, %513 : vector<8x128xf32>
    %515 = arith.mulf %498, %506 : vector<8x128xf32>
    %516 = arith.addf %514, %515 : vector<8x128xf32>
    %517 = math.tanh %516 : vector<8x128xf32>
    %518 = arith.mulf %512, %517 : vector<8x128xf32>
    %c0_269 = arith.constant 0 : index
    %c0_270 = arith.constant 0 : index
    %519 = vector.load %arg18[%c0_269, %c0_270] : memref<8x128xf32, #tpu.memory_space<vmem>>, vector<8x128xf32>
    tpu.vector_store %arg18[%c0_269, %c0_270], %518 {strides = array<i32>} : memref<8x128xf32, #tpu.memory_space<vmem>>, vector<8x128xf32>,
    %c0_271 = arith.constant 0 : index
    %c0_272 = arith.constant 0 : index
    %520 = vector.load %arg19[%c0_271, %c0_272] : memref<8x128xf32, #tpu.memory_space<vmem>>, vector<8x128xf32>
    tpu.vector_store %arg19[%c0_271, %c0_272], %516 {strides = array<i32>} : memref<8x128xf32, #tpu.memory_space<vmem>>, vector<8x128xf32>,
    %c8_i32_273 = arith.constant 8 : i32
    %521 = arith.muli %487, %c8_i32_273 : i32
    %522 = tpu.assume_multiple %521, 8 : i32
    %c0_274 = arith.constant 0 : index
    %c0_275 = arith.constant 0 : index
    %523 = vector.load %arg18[%c0_274, %c0_275] : memref<8x128xf32, #tpu.memory_space<vmem>>, vector<8x128xf32>
    %524 = arith.index_cast %522 : i32 to index
    %c0_276 = arith.constant 0 : index
    %525 = vector.load %arg17[%524, %c0_276] : memref<48x128xf32, #tpu.memory_space<vmem>>, vector<8x128xf32>
    tpu.vector_store %arg17[%524, %c0_276], %523 {strides = array<i32>} : memref<48x128xf32, #tpu.memory_space<vmem>>, vector<8x128xf32>,
    %c4_i32_277 = arith.constant 4 : i32
    %c1_i32_278 = arith.constant 1 : i32
    %526 = arith.muli %c4_i32_277, %c1_i32_278 : i32
    %c1_i32_279 = arith.constant 1 : i32
    %527 = arith.addi %c1_i32_279, %526 : i32
    %c0_280 = arith.constant 0 : index
    %c0_281 = arith.constant 0 : index
    %528 = vector.load %arg18[%c0_280, %c0_281] : memref<8x128xf32, #tpu.memory_space<vmem>>, vector<8x128xf32>
    %c0_282 = arith.constant 0 : index
    %c0_283 = arith.constant 0 : index
    %529 = vector.load %arg11[%c0_282, %c0_283] : memref<128x512xf32, #tpu.memory_space<vmem>>, vector<128x512xf32>
    %cst_284 = arith.constant dense<0.000000e+00> : vector<8x512xf32>
    %530 = tpu.matmul %528, %529, %cst_284 {dimension_numbers = #tpu.dot_dimension_numbers<[1], [0], [0], [1], [0, 0, 1, 1], [], []>} : vector<8x128xf32>, vector<128x512xf32>, vector<8x512xf32> -> vector<8x512xf32>
    %c0_285 = arith.constant 0 : index
    %c0_286 = arith.constant 0 : index
    %531 = vector.load %arg12[%c0_285, %c0_286] : memref<8x512xf32, #tpu.memory_space<vmem>>, vector<8x512xf32>
    %532 = arith.addf %530, %531 : vector<8x512xf32>
    %533 = vector.extract_strided_slice %532 {offsets = [0, 0], sizes = [8, 128], strides = [1, 1]} : vector<8x512xf32> to vector<8x128xf32>
    %534 = arith.negf %533 : vector<8x128xf32>
    %535 = math.exp %534 : vector<8x128xf32>
    %cst_287 = arith.constant 1.000000e+00 : f32
    %536 = vector.broadcast %cst_287 : f32 to vector<8x128xf32>
    %537 = arith.addf %536, %535 : vector<8x128xf32>
    %538 = arith.divf %536, %537 : vector<8x128xf32>
    %539 = vector.extract_strided_slice %532 {offsets = [0, 128], sizes = [8, 128], strides = [1, 1]} : vector<8x512xf32> to vector<8x128xf32>
    %540 = arith.negf %539 : vector<8x128xf32>
    %541 = math.exp %540 : vector<8x128xf32>
    %cst_288 = arith.constant 1.000000e+00 : f32
    %542 = vector.broadcast %cst_288 : f32 to vector<8x128xf32>
    %543 = arith.addf %542, %541 : vector<8x128xf32>
    %544 = arith.divf %542, %543 : vector<8x128xf32>
    %545 = vector.extract_strided_slice %532 {offsets = [0, 256], sizes = [8, 128], strides = [1, 1]} : vector<8x512xf32> to vector<8x128xf32>
    %546 = math.tanh %545 : vector<8x128xf32>
    %547 = vector.extract_strided_slice %532 {offsets = [0, 384], sizes = [8, 128], strides = [1, 1]} : vector<8x512xf32> to vector<8x128xf32>
    %548 = arith.negf %547 : vector<8x128xf32>
    %549 = math.exp %548 : vector<8x128xf32>
    %cst_289 = arith.constant 1.000000e+00 : f32
    %550 = vector.broadcast %cst_289 : f32 to vector<8x128xf32>
    %551 = arith.addf %550, %549 : vector<8x128xf32>
    %552 = arith.divf %550, %551 : vector<8x128xf32>
    %c0_290 = arith.constant 0 : index
    %c0_291 = arith.constant 0 : index
    %553 = vector.load %arg19[%c0_290, %c0_291] : memref<8x128xf32, #tpu.memory_space<vmem>>, vector<8x128xf32>
    %554 = arith.mulf %544, %553 : vector<8x128xf32>
    %555 = arith.mulf %538, %546 : vector<8x128xf32>
    %556 = arith.addf %554, %555 : vector<8x128xf32>
    %557 = math.tanh %556 : vector<8x128xf32>
    %558 = arith.mulf %552, %557 : vector<8x128xf32>
    %c0_292 = arith.constant 0 : index
    %c0_293 = arith.constant 0 : index
    %559 = vector.load %arg18[%c0_292, %c0_293] : memref<8x128xf32, #tpu.memory_space<vmem>>, vector<8x128xf32>
    tpu.vector_store %arg18[%c0_292, %c0_293], %558 {strides = array<i32>} : memref<8x128xf32, #tpu.memory_space<vmem>>, vector<8x128xf32>,
    %c0_294 = arith.constant 0 : index
    %c0_295 = arith.constant 0 : index
    %560 = vector.load %arg19[%c0_294, %c0_295] : memref<8x128xf32, #tpu.memory_space<vmem>>, vector<8x128xf32>
    tpu.vector_store %arg19[%c0_294, %c0_295], %556 {strides = array<i32>} : memref<8x128xf32, #tpu.memory_space<vmem>>, vector<8x128xf32>,
    %c8_i32_296 = arith.constant 8 : i32
    %561 = arith.muli %527, %c8_i32_296 : i32
    %562 = tpu.assume_multiple %561, 8 : i32
    %c0_297 = arith.constant 0 : index
    %c0_298 = arith.constant 0 : index
    %563 = vector.load %arg18[%c0_297, %c0_298] : memref<8x128xf32, #tpu.memory_space<vmem>>, vector<8x128xf32>
    %564 = arith.index_cast %562 : i32 to index
    %c0_299 = arith.constant 0 : index
    %565 = vector.load %arg17[%564, %c0_299] : memref<48x128xf32, #tpu.memory_space<vmem>>, vector<8x128xf32>
    tpu.vector_store %arg17[%564, %c0_299], %563 {strides = array<i32>} : memref<48x128xf32, #tpu.memory_space<vmem>>, vector<8x128xf32>,
    %c5_i32_300 = arith.constant 5 : i32
    %c3_i32_301 = arith.constant 3 : i32
    %566 = tpu.memref_slice %arg15[%c3_i32_301] : memref<5x!tpu.dma_semaphore, #tpu.memory_space<semaphore_mem>> -> memref<1x!tpu.dma_semaphore, #tpu.memory_space<semaphore_mem>>
    %567 = tpu.memref_squeeze %566 : memref<1x!tpu.dma_semaphore, #tpu.memory_space<semaphore_mem>> -> memref<!tpu.dma_semaphore, #tpu.memory_space<semaphore_mem>>
    tpu.wait_dma2 semaphore(%567 : memref<!tpu.dma_semaphore, #tpu.memory_space<semaphore_mem>>) src(%arg7 : memref<128x128xbf16, #tpu.memory_space<any>>) dst(%arg13 : memref<128x128xbf16, #tpu.memory_space<vmem>>)
    %c4_i32_302 = arith.constant 4 : i32
    %568 = tpu.memref_slice %arg15[%c4_i32_302] : memref<5x!tpu.dma_semaphore, #tpu.memory_space<semaphore_mem>> -> memref<1x!tpu.dma_semaphore, #tpu.memory_space<semaphore_mem>>
    %569 = tpu.memref_squeeze %568 : memref<1x!tpu.dma_semaphore, #tpu.memory_space<semaphore_mem>> -> memref<!tpu.dma_semaphore, #tpu.memory_space<semaphore_mem>>
    tpu.wait_dma2 semaphore(%569 : memref<!tpu.dma_semaphore, #tpu.memory_space<semaphore_mem>>) src(%arg8 : memref<1x128xf32, #tpu.memory_space<any>>) dst(%arg14 : memref<1x128xf32, #tpu.memory_space<vmem>>)
    %c0_303 = arith.constant 0 : index
    %c0_304 = arith.constant 0 : index
    %570 = vector.load %arg17[%c0_303, %c0_304] : memref<48x128xf32, #tpu.memory_space<vmem>>, vector<48x128xf32>
    %571 = arith.truncf %570 : vector<48x128xf32> to vector<48x128xbf16>
    %c0_305 = arith.constant 0 : index
    %c0_306 = arith.constant 0 : index
    %572 = vector.load %arg13[%c0_305, %c0_306] : memref<128x128xbf16, #tpu.memory_space<vmem>>, vector<128x128xbf16>
    %cst_307 = arith.constant dense<0.000000e+00> : vector<48x128xf32>
    %573 = tpu.matmul %571, %572, %cst_307 {dimension_numbers = #tpu.dot_dimension_numbers<[1], [0], [0], [1], [0, 0, 1, 1], [], []>} : vector<48x128xbf16>, vector<128x128xbf16>, vector<48x128xf32> -> vector<48x128xf32>
    %c0_308 = arith.constant 0 : index
    %c0_309 = arith.constant 0 : index
    %574 = vector.load %arg14[%c0_308, %c0_309] : memref<1x128xf32, #tpu.memory_space<vmem>>, vector<1x128xf32>
    %575 = vector.broadcast %574 : vector<1x128xf32> to vector<48x128xf32>
    %576 = arith.addf %573, %575 : vector<48x128xf32>
    %c0_310 = arith.constant 0 : index
    %c0_311 = arith.constant 0 : index
    %577 = vector.load %arg9[%c0_310, %c0_311] : memref<48x128xf32, #tpu.memory_space<vmem>>, vector<48x128xf32>
    tpu.vector_store %arg9[%c0_310, %c0_311], %576 {strides = array<i32>} : memref<48x128xf32, #tpu.memory_space<vmem>>, vector<48x128xf32>,
    return
  }
}

</mosaic_0001>

<llo_original>
// kernel: tpu_custom_call.1
$region0: #{tpu_custom_call.1}
  #allocation0 [shape = 'u32[]', space=smem, size = 0x4, offset = 0x4, fixed_abs, tag = 'smem constant byte address 0x4 - core index']
  #allocation1 [shape = 'u32[144,128]{1,0:T(1,128)}', space=vmem, size = 0x12000, scoped, tag = 'internal scratch']
  #allocation2 [shape = 'f32[128,512]{1,0:T(8,128)}', space=vmem, size = 0x40000, scoped, tag = 'scratch operand']
  #allocation3 [shape = 'f32[128,512]{1,0:T(8,128)}', space=vmem, size = 0x40000, scoped, tag = 'scratch operand']
  #allocation4 [shape = 'f32[8,512]{1,0:T(8,128)}', space=vmem, size = 0x4000, scoped, tag = 'scratch operand']
  #allocation5 [shape = 'bf16[128,128]{1,0:T(16,128)(2,1)}', space=vmem, size = 0x8000, scoped, tag = 'scratch operand']
  #allocation6 [shape = 'f32[1,128]{1,0:T(1,128)}', space=vmem, size = 0x200, scoped, tag = 'scratch operand']
  #allocation7 [shape = 's32[5]{0}', space=sflag, size = 0x14, scoped, tag = 'scratch operand']
  #allocation8 [shape = 'f32[64,512]{1,0:T(8,128)}', space=vmem, size = 0x20000, scoped, tag = 'scratch operand']
  #allocation9 [shape = 'f32[48,128]{1,0:T(8,128)}', space=vmem, size = 0x6000, scoped, tag = 'scratch operand']
  #allocation10 [shape = 'f32[8,128]{1,0:T(8,128)}', space=vmem, size = 0x1000, scoped, tag = 'scratch operand']
  #allocation11 [shape = 'f32[8,128]{1,0:T(8,128)}', space=vmem, size = 0x1000, scoped, tag = 'scratch operand']
  #allocation19 [shape = 's32[]', space=sflag, size = 0x4, offset = 0, fixed_abs, tag = 'sflag constant byte address 0x0 - dummy sync flag']
  #allocation20 [shape = 's32[]', space=sflag, size = 0x4, offset = 0, fixed_abs, tag = 'sflag constant byte address 0x0 - dummy sync flag']
  #allocation21 [shape = 'u32[]', space=smem, size = 0x4, offset = 0x44, fixed_abs, tag = 'smem constant byte address 0x44 - assertion arg 0']
  #allocation22 [shape = 'u32[]', space=smem, size = 0x4, offset = 0x48, fixed_abs, tag = 'smem constant byte address 0x48 - assertion arg 1']
  #allocation23 [shape = 's32[]', space=sflag, size = 0x4, offset = 0, fixed_abs, tag = 'sflag constant byte address 0x0 - dummy sync flag']
  #allocation24 [shape = 's32[]', space=sflag, size = 0x4, offset = 0, fixed_abs, tag = 'sflag constant byte address 0x0 - dummy sync flag']
  #allocation25 [shape = 's32[]', space=sflag, size = 0x4, offset = 0, fixed_abs, tag = 'sflag constant byte address 0x0 - dummy sync flag']
  #allocation26 [shape = 's32[]', space=sflag, size = 0x4, offset = 0, fixed_abs, tag = 'sflag constant byte address 0x0 - dummy sync flag']
  #allocation27 [shape = 's32[]', space=sflag, size = 0x4, offset = 0, fixed_abs, tag = 'sflag constant byte address 0x0 - dummy sync flag']
  #allocation28 [shape = 's32[]', space=sflag, size = 0x4, offset = 0, fixed_abs, tag = 'sflag constant byte address 0x0 - dummy sync flag']
  #allocation29 [shape = 's32[]', space=sflag, size = 0x4, offset = 0, fixed_abs, tag = 'sflag constant byte address 0x0 - dummy sync flag']
  %s0 = inlined_call_operand.hbm [shape: bf16[64,128], index: 0, kind: input, shape index: {}]
  %s1 = inlined_call_operand.hbm [shape: bf16[128,512], index: 1, kind: input, shape index: {}]
  %s2 = inlined_call_operand.hbm [shape: f32[128,512], index: 2, kind: input, shape index: {}]
  %s3 = inlined_call_operand.vmem [shape: f32[1,512], index: 3, kind: input, shape index: {}]
  %s4 = inlined_call_operand.hbm [shape: f32[128,512], index: 4, kind: input, shape index: {}]
  %s5 = inlined_call_operand.hbm [shape: f32[128,512], index: 5, kind: input, shape index: {}]
  %s6 = inlined_call_operand.hbm [shape: f32[8,512], index: 6, kind: input, shape index: {}]
  %s7 = inlined_call_operand.hbm [shape: bf16[128,128], index: 7, kind: input, shape index: {}]
  %s8 = inlined_call_operand.vmem [shape: f32[1,128], index: 8, kind: input, shape index: {}]
  %s9 = inlined_call_operand.hbm [shape: f32[48,128], index: 9, kind: output, shape index: {}]
  %s10 = sld [smem:[#allocation0]]
  $region84: #{tpu_custom_call.1} parent=0
    _
  %s12 = ssub.s32 1, %s10
  %s13 = scalar_select 0, %s12, %s10
  $region1: #{tpu_custom_call.1} parent=0
    #allocation12 [shape = 'u8[16384]{0}', space=vmem, size = 0x4000, scoped, tag = 'input window, operand 0, single buffered']
    #allocation13 [shape = 's32[1]{0}', space=sflag, size = 0x4, scoped, tag = 'scoped memory for tpu_custom_call.1']
    #allocation14 [shape = 's32[1]{0}', space=sflag, size = 0x4, scoped, tag = 'scoped memory for tpu_custom_call.1']
    #allocation15 [shape = 'u8[131072]{0}', space=vmem, size = 0x20000, scoped, tag = 'input window, operand 1, single buffered']
    #allocation16 [shape = 's32[1]{0}', space=sflag, size = 0x4, scoped, tag = 'scoped memory for tpu_custom_call.1']
    #allocation17 [shape = 'u8[262144]{0}', space=vmem, size = 0x40000, scoped, tag = 'input window, operand 2, single buffered']
    #allocation18 [shape = 'u8[24576]{0}', space=vmem, size = 0x6000, scoped, tag = 'output window, operand 0, single buffered']
    %14 = vsyncpa [#allocation13], 0
    %15 = vsyncpa [#allocation16], 0
    %16 = vsyncpa [#allocation14], 0
    // Predicated region
    $region2: #{tpu_custom_call.1} parent=1 // pred_check
      _
    $region3: #{tpu_custom_call.1} parent=1 // pred_check_branch
      %18 = sbr.rel (0) target = $region5
    $region4: #{tpu_custom_call.1} parent=1 // pred_region
      %s20 = ssub.s32 512, 512
      %21 = vsyncadd [#allocation13], %s20
      %s22 = sshll.u32 [#allocation12], 4
      %s23 = int_to_ptr.vmem [resolvable:$true] %s22
      %28 = dma.hbm_to_vmem [thread:$0]  %s0, 512, %s23, [#allocation13], 64, 64, 4
    $region5: #{tpu_custom_call.1} parent=1 // pred_fallthru
      _
    // Predicated region
    $region6: #{tpu_custom_call.1} parent=1 // pred_check
      _
    $region7: #{tpu_custom_call.1} parent=1 // pred_check_branch
      %30 = sbr.rel (0) target = $region9
    $region8: #{tpu_custom_call.1} parent=1 // pred_region
      %s32 = ssub.s32 4096, 4096
      %33 = vsyncadd [#allocation16], %s32
      %s34 = sshll.u32 [#allocation15], 4
      %s35 = int_to_ptr.vmem [resolvable:$true] %s34
      %40 = dma.hbm_to_vmem [thread:$0]  %s1, 4096, %s35, [#allocation16], 256, 256, 16
    $region9: #{tpu_custom_call.1} parent=1 // pred_fallthru
      _
    // Predicated region
    $region10: #{tpu_custom_call.1} parent=1 // pred_check
      _
    $region11: #{tpu_custom_call.1} parent=1 // pred_check_branch
      %42 = sbr.rel (0) target = $region13
    $region12: #{tpu_custom_call.1} parent=1 // pred_region
      %s44 = ssub.s32 8192, 8192
      %45 = vsyncadd [#allocation16], %s44
      %s46 = sshll.u32 [#allocation17], 4
      %s47 = int_to_ptr.vmem [resolvable:$true] %s46
      %52 = dma.hbm_to_vmem [thread:$0]  %s2, 8192, %s47, [#allocation16], 512, 512, 32
    $region13: #{tpu_custom_call.1} parent=1 // pred_fallthru
      _
    // Predicated region
    $region14: #{tpu_custom_call.1} parent=1 // pred_check
      _
    $region15: #{tpu_custom_call.1} parent=1 // pred_check_branch
      %54 = sbr.rel (0) target = $region17
    $region16: #{tpu_custom_call.1} parent=1 // pred_region
      _
    $region17: #{tpu_custom_call.1} parent=1 // pred_fallthru
      _
    // Predicated region
    $region18: #{tpu_custom_call.1} parent=1 // pred_check
      _
    $region19: #{tpu_custom_call.1} parent=1 // pred_check_branch
      %56 = sbr.rel (0) target = $region21
    $region20: #{tpu_custom_call.1} parent=1 // pred_region
      %57 = dma.done [#allocation13], 512
    $region21: #{tpu_custom_call.1} parent=1 // pred_fallthru
      _
    // Predicated region
    $region22: #{tpu_custom_call.1} parent=1 // pred_check
      _
    $region23: #{tpu_custom_call.1} parent=1 // pred_check_branch
      %59 = sbr.rel (0) target = $region25
    $region24: #{tpu_custom_call.1} parent=1 // pred_region
      %60 = dma.done [#allocation16], 4096
    $region25: #{tpu_custom_call.1} parent=1 // pred_fallthru
      _
    // Predicated region
    $region26: #{tpu_custom_call.1} parent=1 // pred_check
      _
    $region27: #{tpu_custom_call.1} parent=1 // pred_check_branch
      %62 = sbr.rel (0) target = $region29
    $region28: #{tpu_custom_call.1} parent=1 // pred_region
      %63 = dma.done [#allocation16], 8192
    $region29: #{tpu_custom_call.1} parent=1 // pred_fallthru
      _
    // Predicated region
    $region30: #{tpu_custom_call.1} parent=1 // pred_check
      _
    $region31: #{tpu_custom_call.1} parent=1 // pred_check_branch
      %66 = sbr.rel target = $region33
    $region32: #{tpu_custom_call.1} parent=1 // pred_region
      %67 = sst [smem:[#allocation21]] [#allocation20]
      %68 = sst [smem:[#allocation22]] [#allocation19]
    $region33: #{tpu_custom_call.1} parent=1 // pred_fallthru
      _
    %70 = shalt.err (0)
    %s72 = sshll.u32 [#allocation2], 4
    %s73 = int_to_ptr.vmem [resolvable:$true] %s72
    %75 = dma.hbm_to_vmem [thread:$0]  %s4, 8192, %s73, [#allocation7]
    %s76 = scalar_lea.sflag [#allocation7], 1
    // Predicated region
    $region34: #{tpu_custom_call.1} parent=1 // pred_check
      _
    $region35: #{tpu_custom_call.1} parent=1 // pred_check_branch
      %78 = sbr.rel target = $region37
    $region36: #{tpu_custom_call.1} parent=1 // pred_region
      %79 = sst [smem:[#allocation21]] [#allocation24]
      %80 = sst [smem:[#allocation22]] [#allocation23]
    $region37: #{tpu_custom_call.1} parent=1 // pred_fallthru
      _
    %82 = shalt.err (0)
    %s84 = sshll.u32 [#allocation3], 4
    %s85 = int_to_ptr.vmem [resolvable:$true] %s84
    %87 = dma.hbm_to_vmem [thread:$0]  %s5, 8192, %s85, %s76
    %s88 = scalar_lea.sflag [#allocation7], 2
    // Predicated region
    $region38: #{tpu_custom_call.1} parent=1 // pred_check
      _
    $region39: #{tpu_custom_call.1} parent=1 // pred_check_branch
      %90 = sbr.rel target = $region41
    $region40: #{tpu_custom_call.1} parent=1 // pred_region
      %91 = sst [smem:[#allocation21]] [#allocation26]
      %92 = sst [smem:[#allocation22]] [#allocation25]
    $region41: #{tpu_custom_call.1} parent=1 // pred_fallthru
      _
    %94 = shalt.err (0)
    %s96 = sshll.u32 [#allocation4], 4
    %s97 = int_to_ptr.vmem [resolvable:$true] %s96
    %99 = dma.hbm_to_vmem [thread:$0]  %s6, 512, %s97, %s88
    %s100 = scalar_lea.sflag [#allocation7], 3
    // Predicated region
    $region42: #{tpu_custom_call.1} parent=1 // pred_check
      _
    $region43: #{tpu_custom_call.1} parent=1 // pred_check_branch
      %102 = sbr.rel target = $region45
    $region44: #{tpu_custom_call.1} parent=1 // pred_region
      %103 = sst [smem:[#allocation21]] [#allocation28]
      %104 = sst [smem:[#allocation22]] [#allocation27]
    $region45: #{tpu_custom_call.1} parent=1 // pred_fallthru
      _
    %106 = shalt.err (0)
    %s108 = sshll.u32 [#allocation5], 4
    %s109 = int_to_ptr.vmem [resolvable:$true] %s108
    %111 = dma.hbm_to_vmem [thread:$0]  %s7, 1024, %s109, %s100
    %s112 = scalar_lea.sflag [#allocation7], 4
    %p114 = scmp.lt.u32.totalorder 1, 8
    %p115 = pneg %p114
    // Predicated region
    $region46: #{tpu_custom_call.1} parent=1 // pred_check
      _
    $region47: #{tpu_custom_call.1} parent=1 // pred_check_branch
      %117 = sbr.rel (%p114) target = $region49
    $region48: #{tpu_custom_call.1} parent=1 // pred_region
      %s132 = sand.u32 1, 7
      %p133 = scmp.eq.s32.totalorder %s132, 0
      %p134 = pneg %p133
      // Predicated region
      $region61: #{tpu_custom_call.1} parent=48 // pred_check
        _
      $region62: #{tpu_custom_call.1} parent=48 // pred_check_branch
        %136 = sbr.rel (%p133) target = $region64
      $region63: #{tpu_custom_call.1} parent=48 // pred_region
        %s137 = sand.u32 1, 7
        %s138 = ssub.s32 1, %s137
        %s139 = scalar_lea.vmem %s8, %s138
        %s140 = ssub.s32 1, %s137
        %s141 = scalar_lea.vmem [#allocation6], %s140
        %s142 = sshllo.u32 0, %s137
        loop: start=0, step=1, limit=1
        $region65: #{tpu_custom_call.1} parent=63 // loop_pre_header
          _
        $region66: #{tpu_custom_call.1} parent=63 // loop_header
          %s144 = sphi 0, %s148
          %p145 = scmp.ge.s32.totalorder %s144, 1
          %s149 = sphi %s139, %s139
          %s150 = sphi %s141, %s141
        $region67: #{tpu_custom_call.1} parent=63 // loop_header_branch
          %147 = sbr.rel (%p145) target = $region71
        $region68: #{tpu_custom_call.1} parent=63 // loop_body
          %v151 = vld [vmem:[%s149] sm:%s142]
          %152 = vst [vmem:[%s150] sm:%s142] %v151
        $region69: #{tpu_custom_call.1} parent=63 // loop_footer
          %s148 = sadd.s32 1, %s144
        $region70: #{tpu_custom_call.1} parent=63 // loop_footer_branch
          %143 = sbr.rel target = $region66
        $region71: #{tpu_custom_call.1} parent=63 // loop_exit
          _
      $region64: #{tpu_custom_call.1} parent=48 // pred_fallthru
        _
    $region49: #{tpu_custom_call.1} parent=1 // pred_fallthru
      _
    // Predicated region
    $region50: #{tpu_custom_call.1} parent=1 // pred_check
      %p118 = pneg %p114
    $region51: #{tpu_custom_call.1} parent=1 // pred_check_branch
      %120 = sbr.rel (%p118) target = $region53
    $region52: #{tpu_custom_call.1} parent=1 // pred_region
      %s121 = sshllo.u32 0, 1
      loop: start=0, step=1, limit=1
      $region54: #{tpu_custom_call.1} parent=52 // loop_pre_header
        _
      $region55: #{tpu_custom_call.1} parent=52 // loop_header
        %s123 = sphi 0, %s127
        %p124 = scmp.ge.s32.totalorder %s123, 1
        %s128 = sphi %s8, %s8
        %s129 = sphi [#allocation6], [#allocation6]
      $region56: #{tpu_custom_call.1} parent=52 // loop_header_branch
        %126 = sbr.rel (%p124) target = $region60
      $region57: #{tpu_custom_call.1} parent=52 // loop_body
        %v130 = vld [vmem:[%s128] sm:%s121]
        %131 = vst [vmem:[%s129] sm:%s121] %v130
      $region58: #{tpu_custom_call.1} parent=52 // loop_footer
        %s127 = sadd.s32 1, %s123
      $region59: #{tpu_custom_call.1} parent=52 // loop_footer_branch
        %122 = sbr.rel target = $region55
      $region60: #{tpu_custom_call.1} parent=52 // loop_exit
        _
    $region53: #{tpu_custom_call.1} parent=1 // pred_fallthru
      _
    // Predicated region
    $region72: #{tpu_custom_call.1} parent=1 // pred_check
      _
    $region73: #{tpu_custom_call.1} parent=1 // pred_check_branch
      %155 = sbr.rel (0) target = $region75
    $region74: #{tpu_custom_call.1} parent=1 // pred_region
      %156 = vsyncadd %s112, 16
    $region75: #{tpu_custom_call.1} parent=1 // pred_fallthru
      _
    %v157 = vld [vmem:[#allocation12] sm:$0xf]
    %v158 = vld [vmem:[#allocation12 + $0x4] sm:$0xf]
    %v159 = vld [vmem:[#allocation12 + $0x8] sm:$0xf]
    %v160 = vld [vmem:[#allocation12 + $0xc] sm:$0xf]
    %v161 = vld [vmem:[#allocation12 + $0x10] sm:$0xf]
    %v162 = vld [vmem:[#allocation12 + $0x14] sm:$0xf]
    %v163 = vld [vmem:[#allocation12 + $0x18] sm:$0xf]
    %v164 = vld [vmem:[#allocation12 + $0x1c] sm:$0xf]
    %v165 = vld [vmem:[#allocation15] sm:$0xff]
    %v166 = vld [vmem:[#allocation15 + $0x8] sm:$0xff]
    %v167 = vld [vmem:[#allocation15 + $0x10] sm:$0xff]
    %v168 = vld [vmem:[#allocation15 + $0x18] sm:$0xff]
    %v169 = vld [vmem:[#allocation15 + $0x20] sm:$0xff]
    %v170 = vld [vmem:[#allocation15 + $0x28] sm:$0xff]
    %v171 = vld [vmem:[#allocation15 + $0x30] sm:$0xff]
    %v172 = vld [vmem:[#allocation15 + $0x38] sm:$0xff]
    %v173 = vld [vmem:[#allocation15 + $0x40] sm:$0xff]
    %v174 = vld [vmem:[#allocation15 + $0x48] sm:$0xff]
    %v175 = vld [vmem:[#allocation15 + $0x50] sm:$0xff]
    %v176 = vld [vmem:[#allocation15 + $0x58] sm:$0xff]
    %v177 = vld [vmem:[#allocation15 + $0x60] sm:$0xff]
    %v178 = vld [vmem:[#allocation15 + $0x68] sm:$0xff]
    %v179 = vld [vmem:[#allocation15 + $0x70] sm:$0xff]
    %v180 = vld [vmem:[#allocation15 + $0x78] sm:$0xff]
    %v181 = vld [vmem:[#allocation15 + $0x80] sm:$0xff]
    %v182 = vld [vmem:[#allocation15 + $0x88] sm:$0xff]
    %v183 = vld [vmem:[#allocation15 + $0x90] sm:$0xff]
    %v184 = vld [vmem:[#allocation15 + $0x98] sm:$0xff]
    %v185 = vld [vmem:[#allocation15 + $0xa0] sm:$0xff]
    %v186 = vld [vmem:[#allocation15 + $0xa8] sm:$0xff]
    %v187 = vld [vmem:[#allocation15 + $0xb0] sm:$0xff]
    %v188 = vld [vmem:[#allocation15 + $0xb8] sm:$0xff]
    %v189 = vld [vmem:[#allocation15 + $0xc0] sm:$0xff]
    %v190 = vld [vmem:[#allocation15 + $0xc8] sm:$0xff]
    %v191 = vld [vmem:[#allocation15 + $0xd0] sm:$0xff]
    %v192 = vld [vmem:[#allocation15 + $0xd8] sm:$0xff]
    %v193 = vld [vmem:[#allocation15 + $0xe0] sm:$0xff]
    %v194 = vld [vmem:[#allocation15 + $0xe8] sm:$0xff]
    %v195 = vld [vmem:[#allocation15 + $0xf0] sm:$0xff]
    %v196 = vld [vmem:[#allocation15 + $0xf8] sm:$0xff]
    %v197 = vld [vmem:[%s3] sm:$0xf]
    %v199 = vlaneseq
    %v200 = vshrl.u32 %v199, 7
    %v201 = vsub.s32 0, %v200
    %v202 = vrot.slane %v197, %v201
    %v203 = vlaneseq
    %v204 = vshrl.u32 %v203, 7
    %v205 = vsub.s32 1, %v204
    %v206 = vrot.slane %v197, %v205
    %v207 = vlaneseq
    %v208 = vshrl.u32 %v207, 7
    %v209 = vsub.s32 2, %v208
    %v210 = vrot.slane %v197, %v209
    %v211 = vlaneseq
    %v212 = vshrl.u32 %v211, 7
    %v213 = vsub.s32 3, %v212
    %v214 = vrot.slane %v197, %v213
    %v227 = vunpack.c.l.b16 %v157
    %v228 = vunpack.c.l.b16 %v158
    %v229 = vunpack.c.l.b16 %v159
    %v230 = vunpack.c.l.b16 %v160
    %v231 = vunpack.c.l.b16 %v161
    %v232 = vunpack.c.l.b16 %v162
    %v233 = vunpack.c.l.b16 %v163
    %v234 = vunpack.c.l.b16 %v164
    %v235 = vpack.c.b16 %v228, %v227
    %v236 = vpack.c.b16 %v230, %v229
    %v237 = vpack.c.b16 %v232, %v231
    %v238 = vpack.c.b16 %v234, %v233
    %v275 = vunpack.c.l.b16 %v165
    %v276 = vunpack.c.h.b16 %v165
    %v277 = vunpack.c.l.b16 %v166
    %v278 = vunpack.c.h.b16 %v166
    %v279 = vunpack.c.l.b16 %v167
    %v280 = vunpack.c.h.b16 %v167
    %v281 = vunpack.c.l.b16 %v168
    %v282 = vunpack.c.h.b16 %v168
    %v283 = vunpack.c.l.b16 %v169
    %v284 = vunpack.c.h.b16 %v169
    %v285 = vunpack.c.l.b16 %v170
    %v286 = vunpack.c.h.b16 %v170
    %v287 = vunpack.c.l.b16 %v171
    %v288 = vunpack.c.h.b16 %v171
    %v289 = vunpack.c.l.b16 %v172
    %v290 = vunpack.c.h.b16 %v172
    %v291 = vunpack.c.l.b16 %v173
    %v292 = vunpack.c.h.b16 %v173
    %v293 = vunpack.c.l.b16 %v174
    %v294 = vunpack.c.h.b16 %v174
    %v295 = vunpack.c.l.b16 %v175
    %v296 = vunpack.c.h.b16 %v175
    %v297 = vunpack.c.l.b16 %v176
    %v298 = vunpack.c.h.b16 %v176
    %v299 = vunpack.c.l.b16 %v177
    %v300 = vunpack.c.h.b16 %v177
    %v301 = vunpack.c.l.b16 %v178
    %v302 = vunpack.c.h.b16 %v178
    %v303 = vunpack.c.l.b16 %v179
    %v304 = vunpack.c.h.b16 %v179
    %v305 = vunpack.c.l.b16 %v180
    %v306 = vunpack.c.h.b16 %v180
    %v307 = vunpack.c.l.b16 %v181
    %v308 = vunpack.c.h.b16 %v181
    %v309 = vunpack.c.l.b16 %v182
    %v310 = vunpack.c.h.b16 %v182
    %v311 = vunpack.c.l.b16 %v183
    %v312 = vunpack.c.h.b16 %v183
    %v313 = vunpack.c.l.b16 %v184
    %v314 = vunpack.c.h.b16 %v184
    %v315 = vunpack.c.l.b16 %v185
    %v316 = vunpack.c.h.b16 %v185
    %v317 = vunpack.c.l.b16 %v186
    %v318 = vunpack.c.h.b16 %v186
    %v319 = vunpack.c.l.b16 %v187
    %v320 = vunpack.c.h.b16 %v187
    %v321 = vunpack.c.l.b16 %v188
    %v322 = vunpack.c.h.b16 %v188
    %v323 = vunpack.c.l.b16 %v189
    %v324 = vunpack.c.h.b16 %v189
    %v325 = vunpack.c.l.b16 %v190
    %v326 = vunpack.c.h.b16 %v190
    %v327 = vunpack.c.l.b16 %v191
    %v328 = vunpack.c.h.b16 %v191
    %v329 = vunpack.c.l.b16 %v192
    %v330 = vunpack.c.h.b16 %v192
    %v331 = vunpack.c.l.b16 %v193
    %v332 = vunpack.c.h.b16 %v193
    %v333 = vunpack.c.l.b16 %v194
    %v334 = vunpack.c.h.b16 %v194
    %v335 = vunpack.c.l.b16 %v195
    %v336 = vunpack.c.h.b16 %v195
    %v337 = vunpack.c.l.b16 %v196
    %v338 = vunpack.c.h.b16 %v196
    %v339 = vpack.c.b16 %v279, %v275
    %v340 = vpack.c.b16 %v280, %v276
    %v341 = vpack.c.b16 %v281, %v277
    %v342 = vpack.c.b16 %v282, %v278
    %v343 = vpack.c.b16 %v287, %v283
    %v344 = vpack.c.b16 %v288, %v284
    %v345 = vpack.c.b16 %v289, %v285
    %v346 = vpack.c.b16 %v290, %v286
    %v347 = vpack.c.b16 %v295, %v291
    %v348 = vpack.c.b16 %v296, %v292
    %v349 = vpack.c.b16 %v297, %v293
    %v350 = vpack.c.b16 %v298, %v294
    %v351 = vpack.c.b16 %v303, %v299
    %v352 = vpack.c.b16 %v304, %v300
    %v353 = vpack.c.b16 %v305, %v301
    %v354 = vpack.c.b16 %v306, %v302
    %v355 = vpack.c.b16 %v311, %v307
    %v356 = vpack.c.b16 %v312, %v308
    %v357 = vpack.c.b16 %v313, %v309
    %v358 = vpack.c.b16 %v314, %v310
    %v359 = vpack.c.b16 %v319, %v315
    %v360 = vpack.c.b16 %v320, %v316
    %v361 = vpack.c.b16 %v321, %v317
    %v362 = vpack.c.b16 %v322, %v318
    %v363 = vpack.c.b16 %v327, %v323
    %v364 = vpack.c.b16 %v328, %v324
    %v365 = vpack.c.b16 %v329, %v325
    %v366 = vpack.c.b16 %v330, %v326
    %v367 = vpack.c.b16 %v335, %v331
    %v368 = vpack.c.b16 %v336, %v332
    %v369 = vpack.c.b16 %v337, %v333
    %v370 = vpack.c.b16 %v338, %v334
    %403 = vmatprep.subr.bf16.mxu0 %v340
    %404 = vmatpush1.bf16.msra.mxu0 %v339
    %405 = vmatprep.subr.bf16.mxu0 %v344
    %406 = vmatpush1.bf16.msra.mxu0 %v343
    %407 = vmatprep.subr.bf16.mxu0 %v348
    %408 = vmatpush1.bf16.msra.mxu0 %v347
    %409 = vmatprep.subr.bf16.mxu0 %v352
    %410 = vmatpush1.bf16.msra.mxu0 %v351
    %411 = vmatprep.subr.bf16.mxu0 %v356
    %412 = vmatpush1.bf16.msra.mxu0 %v355
    %413 = vmatprep.subr.bf16.mxu0 %v360
    %414 = vmatpush1.bf16.msra.mxu0 %v359
    %415 = vmatprep.subr.bf16.mxu0 %v364
    %416 = vmatpush1.bf16.msra.mxu0 %v363
    %417 = vmatprep.subr.bf16.mxu0 %v368
    %418 = vmatpush1.bf16.msra.mxu0 %v367
    %419 = vmatprep.subr.bf16.mxu0 0
    %420 = vmatpush1.bf16.msra.mxu0 0
    %421 = vmatprep.subr.bf16.mxu0 0
    %422 = vmatpush1.bf16.msra.mxu0 0
    %423 = vmatprep.subr.bf16.mxu0 0
    %424 = vmatpush1.bf16.msra.mxu0 0
    %425 = vmatprep.subr.bf16.mxu0 0
    %426 = vmatpush1.bf16.msra.mxu0 0
    %427 = vmatprep.subr.bf16.mxu0 0
    %428 = vmatpush1.bf16.msra.mxu0 0
    %429 = vmatprep.subr.bf16.mxu0 0
    %430 = vmatpush1.bf16.msra.mxu0 0
    %431 = vmatprep.subr.bf16.mxu0 0
    %432 = vmatpush1.bf16.msra.mxu0 0
    %433 = vmatprep.subr.bf16.mxu0 0
    %434 = vmatpush1.bf16.msra.mxu0 0
    %435 = vmatprep.mubr.bf16.mxu0 0
    %436 = vmatmul.mubr.bf16.gmra.mrb[0].mxu0 %v235
    %v437 = vpop.f32.mrb[0].mxu0
    %v438 = vadd.f32 %v202, %v437
    %v439 = vpop.f32.mrb[0].mxu0
    %v440 = vadd.f32 %v206, %v439
    %v441 = vpop.f32.mrb[0].mxu0
    %v442 = vadd.f32 %v202, %v441
    %v443 = vpop.f32.mrb[0].mxu0
    %v444 = vadd.f32 %v206, %v443
    %445 = vmatprep.mubr.bf16.mxu0 0
    %446 = vmatmul.mubr.bf16.gmra.mrb[0].mxu0 %v236
    %v447 = vpop.f32.mrb[0].mxu0
    %v448 = vadd.f32 %v202, %v447
    %v449 = vpop.f32.mrb[0].mxu0
    %v450 = vadd.f32 %v206, %v449
    %v451 = vpop.f32.mrb[0].mxu0
    %v452 = vadd.f32 %v202, %v451
    %v453 = vpop.f32.mrb[0].mxu0
    %v454 = vadd.f32 %v206, %v453
    %455 = vmatprep.mubr.bf16.mxu0 0
    %456 = vmatmul.mubr.bf16.gmra.mrb[0].mxu0 %v237
    %v457 = vpop.f32.mrb[0].mxu0
    %v458 = vadd.f32 %v202, %v457
    %v459 = vpop.f32.mrb[0].mxu0
    %v460 = vadd.f32 %v206, %v459
    %v461 = vpop.f32.mrb[0].mxu0
    %v462 = vadd.f32 %v202, %v461
    %v463 = vpop.f32.mrb[0].mxu0
    %v464 = vadd.f32 %v206, %v463
    %465 = vmatprep.mubr.bf16.mxu0 0
    %466 = vmatmul.mubr.bf16.gmra.mrb[0].mxu0 %v238
    %v467 = vpop.f32.mrb[0].mxu0
    %v468 = vadd.f32 %v202, %v467
    %v469 = vpop.f32.mrb[0].mxu0
    %v470 = vadd.f32 %v206, %v469
    %v471 = vpop.f32.mrb[0].mxu0
    %v472 = vadd.f32 %v202, %v471
    %v473 = vpop.f32.mrb[0].mxu0
    %v474 = vadd.f32 %v206, %v473
    %475 = vdwg.mxu0
    %476 = vmatprep.subr.bf16.mxu0 %v342
    %477 = vmatpush1.bf16.msra.mxu0 %v341
    %478 = vmatprep.subr.bf16.mxu0 %v346
    %479 = vmatpush1.bf16.msra.mxu0 %v345
    %480 = vmatprep.subr.bf16.mxu0 %v350
    %481 = vmatpush1.bf16.msra.mxu0 %v349
    %482 = vmatprep.subr.bf16.mxu0 %v354
    %483 = vmatpush1.bf16.msra.mxu0 %v353
    %484 = vmatprep.subr.bf16.mxu0 %v358
    %485 = vmatpush1.bf16.msra.mxu0 %v357
    %486 = vmatprep.subr.bf16.mxu0 %v362
    %487 = vmatpush1.bf16.msra.mxu0 %v361
    %488 = vmatprep.subr.bf16.mxu0 %v366
    %489 = vmatpush1.bf16.msra.mxu0 %v365
    %490 = vmatprep.subr.bf16.mxu0 %v370
    %491 = vmatpush1.bf16.msra.mxu0 %v369
    %492 = vmatprep.subr.bf16.mxu0 0
    %493 = vmatpush1.bf16.msra.mxu0 0
    %494 = vmatprep.subr.bf16.mxu0 0
    %495 = vmatpush1.bf16.msra.mxu0 0
    %496 = vmatprep.subr.bf16.mxu0 0
    %497 = vmatpush1.bf16.msra.mxu0 0
    %498 = vmatprep.subr.bf16.mxu0 0
    %499 = vmatpush1.bf16.msra.mxu0 0
    %500 = vmatprep.subr.bf16.mxu0 0
    %501 = vmatpush1.bf16.msra.mxu0 0
    %502 = vmatprep.subr.bf16.mxu0 0
    %503 = vmatpush1.bf16.msra.mxu0 0
    %504 = vmatprep.subr.bf16.mxu0 0
    %505 = vmatpush1.bf16.msra.mxu0 0
    %506 = vmatprep.subr.bf16.mxu0 0
    %507 = vmatpush1.bf16.msra.mxu0 0
    %508 = vmatprep.mubr.bf16.mxu0 0
    %509 = vmatmul.mubr.bf16.gmra.mrb[0].mxu0 %v235
    %v510 = vpop.f32.mrb[0].mxu0
    %v511 = vadd.f32 %v210, %v510
    %v512 = vpop.f32.mrb[0].mxu0
    %v513 = vadd.f32 %v214, %v512
    %v514 = vpop.f32.mrb[0].mxu0
    %v515 = vadd.f32 %v210, %v514
    %v516 = vpop.f32.mrb[0].mxu0
    %v517 = vadd.f32 %v214, %v516
    %518 = vmatprep.mubr.bf16.mxu0 0
    %519 = vmatmul.mubr.bf16.gmra.mrb[0].mxu0 %v236
    %v520 = vpop.f32.mrb[0].mxu0
    %v521 = vadd.f32 %v210, %v520
    %v522 = vpop.f32.mrb[0].mxu0
    %v523 = vadd.f32 %v214, %v522
    %v524 = vpop.f32.mrb[0].mxu0
    %v525 = vadd.f32 %v210, %v524
    %v526 = vpop.f32.mrb[0].mxu0
    %v527 = vadd.f32 %v214, %v526
    %528 = vmatprep.mubr.bf16.mxu0 0
    %529 = vmatmul.mubr.bf16.gmra.mrb[0].mxu0 %v237
    %v530 = vpop.f32.mrb[0].mxu0
    %v531 = vadd.f32 %v210, %v530
    %v532 = vpop.f32.mrb[0].mxu0
    %v533 = vadd.f32 %v214, %v532
    %v534 = vpop.f32.mrb[0].mxu0
    %v535 = vadd.f32 %v210, %v534
    %v536 = vpop.f32.mrb[0].mxu0
    %v537 = vadd.f32 %v214, %v536
    %538 = vmatprep.mubr.bf16.mxu0 0
    %539 = vmatmul.mubr.bf16.gmra.mrb[0].mxu0 %v238
    %v540 = vpop.f32.mrb[0].mxu0
    %v541 = vadd.f32 %v210, %v540
    %v542 = vpop.f32.mrb[0].mxu0
    %v543 = vadd.f32 %v214, %v542
    %v544 = vpop.f32.mrb[0].mxu0
    %v545 = vadd.f32 %v210, %v544
    %v546 = vpop.f32.mrb[0].mxu0
    %v547 = vadd.f32 %v214, %v546
    %548 = vdwg.mxu0
    %549 = vst [vmem:[#allocation8] sm:$0xff] %v438
    %550 = vst [vmem:[#allocation8 + $0x8] sm:$0xff] %v440
    %551 = vst [vmem:[#allocation8 + $0x10] sm:$0xff] %v511
    %552 = vst [vmem:[#allocation8 + $0x18] sm:$0xff] %v513
    %553 = vst [vmem:[#allocation8 + $0x20] sm:$0xff] %v442
    %554 = vst [vmem:[#allocation8 + $0x28] sm:$0xff] %v444
    %555 = vst [vmem:[#allocation8 + $0x30] sm:$0xff] %v515
    %556 = vst [vmem:[#allocation8 + $0x38] sm:$0xff] %v517
    %557 = vst [vmem:[#allocation8 + $0x40] sm:$0xff] %v448
    %558 = vst [vmem:[#allocation8 + $0x48] sm:$0xff] %v450
    %559 = vst [vmem:[#allocation8 + $0x50] sm:$0xff] %v521
    %560 = vst [vmem:[#allocation8 + $0x58] sm:$0xff] %v523
    %561 = vst [vmem:[#allocation8 + $0x60] sm:$0xff] %v452
    %562 = vst [vmem:[#allocation8 + $0x68] sm:$0xff] %v454
    %563 = vst [vmem:[#allocation8 + $0x70] sm:$0xff] %v525
    %564 = vst [vmem:[#allocation8 + $0x78] sm:$0xff] %v527
    %565 = vst [vmem:[#allocation8 + $0x80] sm:$0xff] %v458
    %566 = vst [vmem:[#allocation8 + $0x88] sm:$0xff] %v460
    %567 = vst [vmem:[#allocation8 + $0x90] sm:$0xff] %v531
    %568 = vst [vmem:[#allocation8 + $0x98] sm:$0xff] %v533
    %569 = vst [vmem:[#allocation8 + $0xa0] sm:$0xff] %v462
    %570 = vst [vmem:[#allocation8 + $0xa8] sm:$0xff] %v464
    %571 = vst [vmem:[#allocation8 + $0xb0] sm:$0xff] %v535
    %572 = vst [vmem:[#allocation8 + $0xb8] sm:$0xff] %v537
    %573 = vst [vmem:[#allocation8 + $0xc0] sm:$0xff] %v468
    %574 = vst [vmem:[#allocation8 + $0xc8] sm:$0xff] %v470
    %575 = vst [vmem:[#allocation8 + $0xd0] sm:$0xff] %v541
    %576 = vst [vmem:[#allocation8 + $0xd8] sm:$0xff] %v543
    %577 = vst [vmem:[#allocation8 + $0xe0] sm:$0xff] %v472
    %578 = vst [vmem:[#allocation8 + $0xe8] sm:$0xff] %v474
    %579 = vst [vmem:[#allocation8 + $0xf0] sm:$0xff] %v545
    %580 = vst [vmem:[#allocation8 + $0xf8] sm:$0xff] %v547
    %581 = vst [vmem:[#allocation10] sm:$0xff] 0.0
    %582 = vst [vmem:[#allocation11] sm:$0xff] 0.0
    %s583 = smul.u32 0, 4
    %s584 = smul.addr %s583, 8
    %s585 = scalar_lea.vmem [#allocation8], %s584
    %v586 = vld [vmem:[%s585] sm:$0xff]
    %v587 = vld [vmem:[%s585 + $0x8] sm:$0xff]
    %v588 = vld [vmem:[%s585 + $0x10] sm:$0xff]
    %v589 = vld [vmem:[%s585 + $0x18] sm:$0xff]
    %v590 = vld [vmem:[#allocation10] sm:$0xff]
    %v591 = vld [vmem:[#allocation17] sm:$0xff]
    %v592 = vld [vmem:[#allocation17 + $0x8] sm:$0xff]
    %v593 = vld [vmem:[#allocation17 + $0x10] sm:$0xff]
    %v594 = vld [vmem:[#allocation17 + $0x18] sm:$0xff]
    %v595 = vld [vmem:[#allocation17 + $0x20] sm:$0xff]
    %v596 = vld [vmem:[#allocation17 + $0x28] sm:$0xff]
    %v597 = vld [vmem:[#allocation17 + $0x30] sm:$0xff]
    %v598 = vld [vmem:[#allocation17 + $0x38] sm:$0xff]
    %v599 = vld [vmem:[#allocation17 + $0x40] sm:$0xff]
    %v600 = vld [vmem:[#allocation17 + $0x48] sm:$0xff]
    %v601 = vld [vmem:[#allocation17 + $0x50] sm:$0xff]
    %v602 = vld [vmem:[#allocation17 + $0x58] sm:$0xff]
    %v603 = vld [vmem:[#allocation17 + $0x60] sm:$0xff]
    %v604 = vld [vmem:[#allocation17 + $0x68] sm:$0xff]
    %v605 = vld [vmem:[#allocation17 + $0x70] sm:$0xff]
    %v606 = vld [vmem:[#allocation17 + $0x78] sm:$0xff]
    %v607 = vld [vmem:[#allocation17 + $0x80] sm:$0xff]
    %v608 = vld [vmem:[#allocation17 + $0x88] sm:$0xff]
    %v609 = vld [vmem:[#allocation17 + $0x90] sm:$0xff]
    %v610 = vld [vmem:[#allocation17 + $0x98] sm:$0xff]
    %v611 = vld [vmem:[#allocation17 + $0xa0] sm:$0xff]
    %v612 = vld [vmem:[#allocation17 + $0xa8] sm:$0xff]
    %v613 = vld [vmem:[#allocation17 + $0xb0] sm:$0xff]
    %v614 = vld [vmem:[#allocation17 + $0xb8] sm:$0xff]
    %v615 = vld [vmem:[#allocation17 + $0xc0] sm:$0xff]
    %v616 = vld [vmem:[#allocation17 + $0xc8] sm:$0xff]
    %v617 = vld [vmem:[#allocation17 + $0xd0] sm:$0xff]
    %v618 = vld [vmem:[#allocation17 + $0xd8] sm:$0xff]
    %v619 = vld [vmem:[#allocation17 + $0xe0] sm:$0xff]
    %v620 = vld [vmem:[#allocation17 + $0xe8] sm:$0xff]
    %v621 = vld [vmem:[#allocation17 + $0xf0] sm:$0xff]
    %v622 = vld [vmem:[#allocation17 + $0xf8] sm:$0xff]
    %v623 = vld [vmem:[#allocation17 + $0x100] sm:$0xff]
    %v624 = vld [vmem:[#allocation17 + $0x108] sm:$0xff]
    %v625 = vld [vmem:[#allocation17 + $0x110] sm:$0xff]
    %v626 = vld [vmem:[#allocation17 + $0x118] sm:$0xff]
    %v627 = vld [vmem:[#allocation17 + $0x120] sm:$0xff]
    %v628 = vld [vmem:[#allocation17 + $0x128] sm:$0xff]
    %v629 = vld [vmem:[#allocation17 + $0x130] sm:$0xff]
    %v630 = vld [vmem:[#allocation17 + $0x138] sm:$0xff]
    %v631 = vld [vmem:[#allocation17 + $0x140] sm:$0xff]
    %v632 = vld [vmem:[#allocation17 + $0x148] sm:$0xff]
    %v633 = vld [vmem:[#allocation17 + $0x150] sm:$0xff]
    %v634 = vld [vmem:[#allocation17 + $0x158] sm:$0xff]
    %v635 = vld [vmem:[#allocation17 + $0x160] sm:$0xff]
    %v636 = vld [vmem:[#allocation17 + $0x168] sm:$0xff]
    %v637 = vld [vmem:[#allocation17 + $0x170] sm:$0xff]
    %v638 = vld [vmem:[#allocation17 + $0x178] sm:$0xff]
    %v639 = vld [vmem:[#allocation17 + $0x180] sm:$0xff]
    %v640 = vld [vmem:[#allocation17 + $0x188] sm:$0xff]
    %v641 = vld [vmem:[#allocation17 + $0x190] sm:$0xff]
    %v642 = vld [vmem:[#allocation17 + $0x198] sm:$0xff]
    %v643 = vld [vmem:[#allocation17 + $0x1a0] sm:$0xff]
    %v644 = vld [vmem:[#allocation17 + $0x1a8] sm:$0xff]
    %v645 = vld [vmem:[#allocation17 + $0x1b0] sm:$0xff]
    %v646 = vld [vmem:[#allocation17 + $0x1b8] sm:$0xff]
    %v647 = vld [vmem:[#allocation17 + $0x1c0] sm:$0xff]
    %v648 = vld [vmem:[#allocation17 + $0x1c8] sm:$0xff]
    %v649 = vld [vmem:[#allocation17 + $0x1d0] sm:$0xff]
    %v650 = vld [vmem:[#allocation17 + $0x1d8] sm:$0xff]
    %v651 = vld [vmem:[#allocation17 + $0x1e0] sm:$0xff]
    %v652 = vld [vmem:[#allocation17 + $0x1e8] sm:$0xff]
    %v653 = vld [vmem:[#allocation17 + $0x1f0] sm:$0xff]
    %v654 = vld [vmem:[#allocation17 + $0x1f8] sm:$0xff]
    %655 = vmatprep.subr.mxu0 %v592
    %656 = vmatpush1.msra.mxu0 %v591
    %657 = vmatprep.subr.mxu0 %v596
    %658 = vmatpush1.msra.mxu0 %v595
    %659 = vmatprep.subr.mxu0 %v600
    %660 = vmatpush1.msra.mxu0 %v599
    %661 = vmatprep.subr.mxu0 %v604
    %662 = vmatpush1.msra.mxu0 %v603
    %663 = vmatprep.subr.mxu0 %v608
    %664 = vmatpush1.msra.mxu0 %v607
    %665 = vmatprep.subr.mxu0 %v612
    %666 = vmatpush1.msra.mxu0 %v611
    %667 = vmatprep.subr.mxu0 %v616
    %668 = vmatpush1.msra.mxu0 %v615
    %669 = vmatprep.subr.mxu0 %v620
    %670 = vmatpush1.msra.mxu0 %v619
    %671 = vmatprep.subr.mxu0 %v624
    %672 = vmatpush1.msra.mxu0 %v623
    %673 = vmatprep.subr.mxu0 %v628
    %674 = vmatpush1.msra.mxu0 %v627
    %675 = vmatprep.subr.mxu0 %v632
    %676 = vmatpush1.msra.mxu0 %v631
    %677 = vmatprep.subr.mxu0 %v636
    %678 = vmatpush1.msra.mxu0 %v635
    %679 = vmatprep.subr.mxu0 %v640
    %680 = vmatpush1.msra.mxu0 %v639
    %681 = vmatprep.subr.mxu0 %v644
    %682 = vmatpush1.msra.mxu0 %v643
    %683 = vmatprep.subr.mxu0 %v648
    %684 = vmatpush1.msra.mxu0 %v647
    %685 = vmatprep.subr.mxu0 %v652
    %686 = vmatpush1.msra.mxu0 %v651
    %687 = vmatprep.subr.mxu0 0.0
    %688 = vmatpush1.msra.mxu0 0.0
    %689 = vmatprep.subr.mxu0 0.0
    %690 = vmatpush1.msra.mxu0 0.0
    %691 = vmatprep.subr.mxu0 0.0
    %692 = vmatpush1.msra.mxu0 0.0
    %693 = vmatprep.subr.mxu0 0.0
    %694 = vmatpush1.msra.mxu0 0.0
    %695 = vmatprep.subr.mxu0 0.0
    %696 = vmatpush1.msra.mxu0 0.0
    %697 = vmatprep.subr.mxu0 0.0
    %698 = vmatpush1.msra.mxu0 0.0
    %699 = vmatprep.subr.mxu0 0.0
    %700 = vmatpush1.msra.mxu0 0.0
    %701 = vmatprep.subr.mxu0 0.0
    %702 = vmatpush1.msra.mxu0 0.0
    %703 = vmatprep.subr.mxu0 0.0
    %704 = vmatpush1.msra.mxu0 0.0
    %705 = vmatprep.subr.mxu0 0.0
    %706 = vmatpush1.msra.mxu0 0.0
    %707 = vmatprep.subr.mxu0 0.0
    %708 = vmatpush1.msra.mxu0 0.0
    %709 = vmatprep.subr.mxu0 0.0
    %710 = vmatpush1.msra.mxu0 0.0
    %711 = vmatprep.subr.mxu0 0.0
    %712 = vmatpush1.msra.mxu0 0.0
    %713 = vmatprep.subr.mxu0 0.0
    %714 = vmatpush1.msra.mxu0 0.0
    %715 = vmatprep.subr.mxu0 0.0
    %716 = vmatpush1.msra.mxu0 0.0
    %717 = vmatprep.subr.mxu0 0.0
    %718 = vmatpush1.msra.mxu0 0.0
    %719 = vmatprep.mubr.f32.mxu0 0.0
    %720 = vmatmul.mubr.f32.gmra.mrb[0].mxu0 %v590
    %v721 = vpop.f32.mrb[0].mxu0
    %v722 = vadd.f32 0.0, %v721
    %v723 = vpop.f32.mrb[0].mxu0
    %v724 = vadd.f32 0.0, %v723
    %725 = vdwg.mxu0
    %726 = vmatprep.subr.mxu0 %v594
    %727 = vmatpush1.msra.mxu0 %v593
    %728 = vmatprep.subr.mxu0 %v598
    %729 = vmatpush1.msra.mxu0 %v597
    %730 = vmatprep.subr.mxu0 %v602
    %731 = vmatpush1.msra.mxu0 %v601
    %732 = vmatprep.subr.mxu0 %v606
    %733 = vmatpush1.msra.mxu0 %v605
    %734 = vmatprep.subr.mxu0 %v610
    %735 = vmatpush1.msra.mxu0 %v609
    %736 = vmatprep.subr.mxu0 %v614
    %737 = vmatpush1.msra.mxu0 %v613
    %738 = vmatprep.subr.mxu0 %v618
    %739 = vmatpush1.msra.mxu0 %v617
    %740 = vmatprep.subr.mxu0 %v622
    %741 = vmatpush1.msra.mxu0 %v621
    %742 = vmatprep.subr.mxu0 %v626
    %743 = vmatpush1.msra.mxu0 %v625
    %744 = vmatprep.subr.mxu0 %v630
    %745 = vmatpush1.msra.mxu0 %v629
    %746 = vmatprep.subr.mxu0 %v634
    %747 = vmatpush1.msra.mxu0 %v633
    %748 = vmatprep.subr.mxu0 %v638
    %749 = vmatpush1.msra.mxu0 %v637
    %750 = vmatprep.subr.mxu0 %v642
    %751 = vmatpush1.msra.mxu0 %v641
    %752 = vmatprep.subr.mxu0 %v646
    %753 = vmatpush1.msra.mxu0 %v645
    %754 = vmatprep.subr.mxu0 %v650
    %755 = vmatpush1.msra.mxu0 %v649
    %756 = vmatprep.subr.mxu0 %v654
    %757 = vmatpush1.msra.mxu0 %v653
    %758 = vmatprep.subr.mxu0 0.0
    %759 = vmatpush1.msra.mxu0 0.0
    %760 = vmatprep.subr.mxu0 0.0
    %761 = vmatpush1.msra.mxu0 0.0
    %762 = vmatprep.subr.mxu0 0.0
    %763 = vmatpush1.msra.mxu0 0.0
    %764 = vmatprep.subr.mxu0 0.0
    %765 = vmatpush1.msra.mxu0 0.0
    %766 = vmatprep.subr.mxu0 0.0
    %767 = vmatpush1.msra.mxu0 0.0
    %768 = vmatprep.subr.mxu0 0.0
    %769 = vmatpush1.msra.mxu0 0.0
    %770 = vmatprep.subr.mxu0 0.0
    %771 = vmatpush1.msra.mxu0 0.0
    %772 = vmatprep.subr.mxu0 0.0
    %773 = vmatpush1.msra.mxu0 0.0
    %774 = vmatprep.subr.mxu0 0.0
    %775 = vmatpush1.msra.mxu0 0.0
    %776 = vmatprep.subr.mxu0 0.0
    %777 = vmatpush1.msra.mxu0 0.0
    %778 = vmatprep.subr.mxu0 0.0
    %779 = vmatpush1.msra.mxu0 0.0
    %780 = vmatprep.subr.mxu0 0.0
    %781 = vmatpush1.msra.mxu0 0.0
    %782 = vmatprep.subr.mxu0 0.0
    %783 = vmatpush1.msra.mxu0 0.0
    %784 = vmatprep.subr.mxu0 0.0
    %785 = vmatpush1.msra.mxu0 0.0
    %786 = vmatprep.subr.mxu0 0.0
    %787 = vmatpush1.msra.mxu0 0.0
    %788 = vmatprep.subr.mxu0 0.0
    %789 = vmatpush1.msra.mxu0 0.0
    %790 = vmatprep.mubr.f32.mxu0 0.0
    %791 = vmatmul.mubr.f32.gmra.mrb[0].mxu0 %v590
    %v792 = vpop.f32.mrb[0].mxu0
    %v793 = vadd.f32 0.0, %v792
    %v794 = vpop.f32.mrb[0].mxu0
    %v795 = vadd.f32 0.0, %v794
    %796 = vdwg.mxu0
    %v797 = vadd.f32 %v586, %v722
    %v798 = vadd.f32 %v587, %v724
    %v799 = vadd.f32 %v588, %v793
    %v800 = vadd.f32 %v589, %v795
    %v801 = vxor.u32 %v797, 2147483648
    %v802 = vmul.f32 %v801, 1.442695
    %v803 = vpow.pop %v802
    %v804 = vadd.f32 %v803, 1.0
    %v805 = vrcp.pop %v804
    %v806 = vmul.f32 1.0, %v805
    %v807 = vxor.u32 %v798, 2147483648
    %v808 = vmul.f32 %v807, 1.442695
    %v809 = vpow.pop %v808
    %v810 = vadd.f32 %v809, 1.0
    %v811 = vrcp.pop %v810
    %v812 = vmul.f32 1.0, %v811
    %v813 = vtanh.pop %v799
    %v814 = vxor.u32 %v800, 2147483648
    %v815 = vmul.f32 %v814, 1.442695
    %v816 = vpow.pop %v815
    %v817 = vadd.f32 %v816, 1.0
    %v818 = vrcp.pop %v817
    %v819 = vmul.f32 1.0, %v818
    %v820 = vld [vmem:[#allocation11] sm:$0xff]
    %v821 = vmul.f32 %v812, %v820
    %v822 = vmul.f32 %v806, %v813
    %v823 = vadd.f32 %v821, %v822
    %v824 = vtanh.pop %v823
    %v825 = vmul.f32 %v819, %v824
    %826 = vst [vmem:[#allocation10] sm:$0xff] %v825
    %827 = vst [vmem:[#allocation11] sm:$0xff] %v823
    %s828 = smul.u32 1, 4
    %s829 = smul.addr %s828, 8
    %s830 = scalar_lea.vmem [#allocation8], %s829
    %v831 = vld [vmem:[%s830] sm:$0xff]
    %v832 = vld [vmem:[%s830 + $0x8] sm:$0xff]
    %v833 = vld [vmem:[%s830 + $0x10] sm:$0xff]
    %v834 = vld [vmem:[%s830 + $0x18] sm:$0xff]
    %v835 = vld [vmem:[#allocation10] sm:$0xff]
    %v836 = vld [vmem:[#allocation17] sm:$0xff]
    %v837 = vld [vmem:[#allocation17 + $0x8] sm:$0xff]
    %v838 = vld [vmem:[#allocation17 + $0x10] sm:$0xff]
    %v839 = vld [vmem:[#allocation17 + $0x18] sm:$0xff]
    %v840 = vld [vmem:[#allocation17 + $0x20] sm:$0xff]
    %v841 = vld [vmem:[#allocation17 + $0x28] sm:$0xff]
    %v842 = vld [vmem:[#allocation17 + $0x30] sm:$0xff]
    %v843 = vld [vmem:[#allocation17 + $0x38] sm:$0xff]
    %v844 = vld [vmem:[#allocation17 + $0x40] sm:$0xff]
    %v845 = vld [vmem:[#allocation17 + $0x48] sm:$0xff]
    %v846 = vld [vmem:[#allocation17 + $0x50] sm:$0xff]
    %v847 = vld [vmem:[#allocation17 + $0x58] sm:$0xff]
    %v848 = vld [vmem:[#allocation17 + $0x60] sm:$0xff]
    %v849 = vld [vmem:[#allocation17 + $0x68] sm:$0xff]
    %v850 = vld [vmem:[#allocation17 + $0x70] sm:$0xff]
    %v851 = vld [vmem:[#allocation17 + $0x78] sm:$0xff]
    %v852 = vld [vmem:[#allocation17 + $0x80] sm:$0xff]
    %v853 = vld [vmem:[#allocation17 + $0x88] sm:$0xff]
    %v854 = vld [vmem:[#allocation17 + $0x90] sm:$0xff]
    %v855 = vld [vmem:[#allocation17 + $0x98] sm:$0xff]
    %v856 = vld [vmem:[#allocation17 + $0xa0] sm:$0xff]
    %v857 = vld [vmem:[#allocation17 + $0xa8] sm:$0xff]
    %v858 = vld [vmem:[#allocation17 + $0xb0] sm:$0xff]
    %v859 = vld [vmem:[#allocation17 + $0xb8] sm:$0xff]
    %v860 = vld [vmem:[#allocation17 + $0xc0] sm:$0xff]
    %v861 = vld [vmem:[#allocation17 + $0xc8] sm:$0xff]
    %v862 = vld [vmem:[#allocation17 + $0xd0] sm:$0xff]
    %v863 = vld [vmem:[#allocation17 + $0xd8] sm:$0xff]
    %v864 = vld [vmem:[#allocation17 + $0xe0] sm:$0xff]
    %v865 = vld [vmem:[#allocation17 + $0xe8] sm:$0xff]
    %v866 = vld [vmem:[#allocation17 + $0xf0] sm:$0xff]
    %v867 = vld [vmem:[#allocation17 + $0xf8] sm:$0xff]
    %v868 = vld [vmem:[#allocation17 + $0x100] sm:$0xff]
    %v869 = vld [vmem:[#allocation17 + $0x108] sm:$0xff]
    %v870 = vld [vmem:[#allocation17 + $0x110] sm:$0xff]
    %v871 = vld [vmem:[#allocation17 + $0x118] sm:$0xff]
    %v872 = vld [vmem:[#allocation17 + $0x120] sm:$0xff]
    %v873 = vld [vmem:[#allocation17 + $0x128] sm:$0xff]
    %v874 = vld [vmem:[#allocation17 + $0x130] sm:$0xff]
    %v875 = vld [vmem:[#allocation17 + $0x138] sm:$0xff]
    %v876 = vld [vmem:[#allocation17 + $0x140] sm:$0xff]
    %v877 = vld [vmem:[#allocation17 + $0x148] sm:$0xff]
    %v878 = vld [vmem:[#allocation17 + $0x150] sm:$0xff]
    %v879 = vld [vmem:[#allocation17 + $0x158] sm:$0xff]
    %v880 = vld [vmem:[#allocation17 + $0x160] sm:$0xff]
    %v881 = vld [vmem:[#allocation17 + $0x168] sm:$0xff]
    %v882 = vld [vmem:[#allocation17 + $0x170] sm:$0xff]
    %v883 = vld [vmem:[#allocation17 + $0x178] sm:$0xff]
    %v884 = vld [vmem:[#allocation17 + $0x180] sm:$0xff]
    %v885 = vld [vmem:[#allocation17 + $0x188] sm:$0xff]
    %v886 = vld [vmem:[#allocation17 + $0x190] sm:$0xff]
    %v887 = vld [vmem:[#allocation17 + $0x198] sm:$0xff]
    %v888 = vld [vmem:[#allocation17 + $0x1a0] sm:$0xff]
    %v889 = vld [vmem:[#allocation17 + $0x1a8] sm:$0xff]
    %v890 = vld [vmem:[#allocation17 + $0x1b0] sm:$0xff]
    %v891 = vld [vmem:[#allocation17 + $0x1b8] sm:$0xff]
    %v892 = vld [vmem:[#allocation17 + $0x1c0] sm:$0xff]
    %v893 = vld [vmem:[#allocation17 + $0x1c8] sm:$0xff]
    %v894 = vld [vmem:[#allocation17 + $0x1d0] sm:$0xff]
    %v895 = vld [vmem:[#allocation17 + $0x1d8] sm:$0xff]
    %v896 = vld [vmem:[#allocation17 + $0x1e0] sm:$0xff]
    %v897 = vld [vmem:[#allocation17 + $0x1e8] sm:$0xff]
    %v898 = vld [vmem:[#allocation17 + $0x1f0] sm:$0xff]
    %v899 = vld [vmem:[#allocation17 + $0x1f8] sm:$0xff]
    %900 = vmatprep.subr.mxu0 %v837
    %901 = vmatpush1.msra.mxu0 %v836
    %902 = vmatprep.subr.mxu0 %v841
    %903 = vmatpush1.msra.mxu0 %v840
    %904 = vmatprep.subr.mxu0 %v845
    %905 = vmatpush1.msra.mxu0 %v844
    %906 = vmatprep.subr.mxu0 %v849
    %907 = vmatpush1.msra.mxu0 %v848
    %908 = vmatprep.subr.mxu0 %v853
    %909 = vmatpush1.msra.mxu0 %v852
    %910 = vmatprep.subr.mxu0 %v857
    %911 = vmatpush1.msra.mxu0 %v856
    %912 = vmatprep.subr.mxu0 %v861
    %913 = vmatpush1.msra.mxu0 %v860
    %914 = vmatprep.subr.mxu0 %v865
    %915 = vmatpush1.msra.mxu0 %v864
    %916 = vmatprep.subr.mxu0 %v869
    %917 = vmatpush1.msra.mxu0 %v868
    %918 = vmatprep.subr.mxu0 %v873
    %919 = vmatpush1.msra.mxu0 %v872
    %920 = vmatprep.subr.mxu0 %v877
    %921 = vmatpush1.msra.mxu0 %v876
    %922 = vmatprep.subr.mxu0 %v881
    %923 = vmatpush1.msra.mxu0 %v880
    %924 = vmatprep.subr.mxu0 %v885
    %925 = vmatpush1.msra.mxu0 %v884
    %926 = vmatprep.subr.mxu0 %v889
    %927 = vmatpush1.msra.mxu0 %v888
    %928 = vmatprep.subr.mxu0 %v893
    %929 = vmatpush1.msra.mxu0 %v892
    %930 = vmatprep.subr.mxu0 %v897
    %931 = vmatpush1.msra.mxu0 %v896
    %932 = vmatprep.subr.mxu0 0.0
    %933 = vmatpush1.msra.mxu0 0.0
    %934 = vmatprep.subr.mxu0 0.0
    %935 = vmatpush1.msra.mxu0 0.0
    %936 = vmatprep.subr.mxu0 0.0
    %937 = vmatpush1.msra.mxu0 0.0
    %938 = vmatprep.subr.mxu0 0.0
    %939 = vmatpush1.msra.mxu0 0.0
    %940 = vmatprep.subr.mxu0 0.0
    %941 = vmatpush1.msra.mxu0 0.0
    %942 = vmatprep.subr.mxu0 0.0
    %943 = vmatpush1.msra.mxu0 0.0
    %944 = vmatprep.subr.mxu0 0.0
    %945 = vmatpush1.msra.mxu0 0.0
    %946 = vmatprep.subr.mxu0 0.0
    %947 = vmatpush1.msra.mxu0 0.0
    %948 = vmatprep.subr.mxu0 0.0
    %949 = vmatpush1.msra.mxu0 0.0
    %950 = vmatprep.subr.mxu0 0.0
    %951 = vmatpush1.msra.mxu0 0.0
    %952 = vmatprep.subr.mxu0 0.0
    %953 = vmatpush1.msra.mxu0 0.0
    %954 = vmatprep.subr.mxu0 0.0
    %955 = vmatpush1.msra.mxu0 0.0
    %956 = vmatprep.subr.mxu0 0.0
    %957 = vmatpush1.msra.mxu0 0.0
    %958 = vmatprep.subr.mxu0 0.0
    %959 = vmatpush1.msra.mxu0 0.0
    %960 = vmatprep.subr.mxu0 0.0
    %961 = vmatpush1.msra.mxu0 0.0
    %962 = vmatprep.subr.mxu0 0.0
    %963 = vmatpush1.msra.mxu0 0.0
    %964 = vmatprep.mubr.f32.mxu0 0.0
    %965 = vmatmul.mubr.f32.gmra.mrb[0].mxu0 %v835
    %v966 = vpop.f32.mrb[0].mxu0
    %v967 = vadd.f32 0.0, %v966
    %v968 = vpop.f32.mrb[0].mxu0
    %v969 = vadd.f32 0.0, %v968
    %970 = vdwg.mxu0
    %971 = vmatprep.subr.mxu0 %v839
    %972 = vmatpush1.msra.mxu0 %v838
    %973 = vmatprep.subr.mxu0 %v843
    %974 = vmatpush1.msra.mxu0 %v842
    %975 = vmatprep.subr.mxu0 %v847
    %976 = vmatpush1.msra.mxu0 %v846
    %977 = vmatprep.subr.mxu0 %v851
    %978 = vmatpush1.msra.mxu0 %v850
    %979 = vmatprep.subr.mxu0 %v855
    %980 = vmatpush1.msra.mxu0 %v854
    %981 = vmatprep.subr.mxu0 %v859
    %982 = vmatpush1.msra.mxu0 %v858
    %983 = vmatprep.subr.mxu0 %v863
    %984 = vmatpush1.msra.mxu0 %v862
    %985 = vmatprep.subr.mxu0 %v867
    %986 = vmatpush1.msra.mxu0 %v866
    %987 = vmatprep.subr.mxu0 %v871
    %988 = vmatpush1.msra.mxu0 %v870
    %989 = vmatprep.subr.mxu0 %v875
    %990 = vmatpush1.msra.mxu0 %v874
    %991 = vmatprep.subr.mxu0 %v879
    %992 = vmatpush1.msra.mxu0 %v878
    %993 = vmatprep.subr.mxu0 %v883
    %994 = vmatpush1.msra.mxu0 %v882
    %995 = vmatprep.subr.mxu0 %v887
    %996 = vmatpush1.msra.mxu0 %v886
    %997 = vmatprep.subr.mxu0 %v891
    %998 = vmatpush1.msra.mxu0 %v890
    %999 = vmatprep.subr.mxu0 %v895
    %1000 = vmatpush1.msra.mxu0 %v894
    %1001 = vmatprep.subr.mxu0 %v899
    %1002 = vmatpush1.msra.mxu0 %v898
    %1003 = vmatprep.subr.mxu0 0.0
    %1004 = vmatpush1.msra.mxu0 0.0
    %1005 = vmatprep.subr.mxu0 0.0
    %1006 = vmatpush1.msra.mxu0 0.0
    %1007 = vmatprep.subr.mxu0 0.0
    %1008 = vmatpush1.msra.mxu0 0.0
    %1009 = vmatprep.subr.mxu0 0.0
    %1010 = vmatpush1.msra.mxu0 0.0
    %1011 = vmatprep.subr.mxu0 0.0
    %1012 = vmatpush1.msra.mxu0 0.0
    %1013 = vmatprep.subr.mxu0 0.0
    %1014 = vmatpush1.msra.mxu0 0.0
    %1015 = vmatprep.subr.mxu0 0.0
    %1016 = vmatpush1.msra.mxu0 0.0
    %1017 = vmatprep.subr.mxu0 0.0
    %1018 = vmatpush1.msra.mxu0 0.0
    %1019 = vmatprep.subr.mxu0 0.0
    %1020 = vmatpush1.msra.mxu0 0.0
    %1021 = vmatprep.subr.mxu0 0.0
    %1022 = vmatpush1.msra.mxu0 0.0
    %1023 = vmatprep.subr.mxu0 0.0
    %1024 = vmatpush1.msra.mxu0 0.0
    %1025 = vmatprep.subr.mxu0 0.0
    %1026 = vmatpush1.msra.mxu0 0.0
    %1027 = vmatprep.subr.mxu0 0.0
    %1028 = vmatpush1.msra.mxu0 0.0
    %1029 = vmatprep.subr.mxu0 0.0
    %1030 = vmatpush1.msra.mxu0 0.0
    %1031 = vmatprep.subr.mxu0 0.0
    %1032 = vmatpush1.msra.mxu0 0.0
    %1033 = vmatprep.subr.mxu0 0.0
    %1034 = vmatpush1.msra.mxu0 0.0
    %1035 = vmatprep.mubr.f32.mxu0 0.0
    %1036 = vmatmul.mubr.f32.gmra.mrb[0].mxu0 %v835
    %v1037 = vpop.f32.mrb[0].mxu0
    %v1038 = vadd.f32 0.0, %v1037
    %v1039 = vpop.f32.mrb[0].mxu0
    %v1040 = vadd.f32 0.0, %v1039
    %1041 = vdwg.mxu0
    %v1042 = vadd.f32 %v831, %v967
    %v1043 = vadd.f32 %v832, %v969
    %v1044 = vadd.f32 %v833, %v1038
    %v1045 = vadd.f32 %v834, %v1040
    %v1046 = vxor.u32 %v1042, 2147483648
    %v1047 = vmul.f32 %v1046, 1.442695
    %v1048 = vpow.pop %v1047
    %v1049 = vadd.f32 %v1048, 1.0
    %v1050 = vrcp.pop %v1049
    %v1051 = vmul.f32 1.0, %v1050
    %v1052 = vxor.u32 %v1043, 2147483648
    %v1053 = vmul.f32 %v1052, 1.442695
    %v1054 = vpow.pop %v1053
    %v1055 = vadd.f32 %v1054, 1.0
    %v1056 = vrcp.pop %v1055
    %v1057 = vmul.f32 1.0, %v1056
    %v1058 = vtanh.pop %v1044
    %v1059 = vxor.u32 %v1045, 2147483648
    %v1060 = vmul.f32 %v1059, 1.442695
    %v1061 = vpow.pop %v1060
    %v1062 = vadd.f32 %v1061, 1.0
    %v1063 = vrcp.pop %v1062
    %v1064 = vmul.f32 1.0, %v1063
    %v1065 = vld [vmem:[#allocation11] sm:$0xff]
    %v1066 = vmul.f32 %v1057, %v1065
    %v1067 = vmul.f32 %v1051, %v1058
    %v1068 = vadd.f32 %v1066, %v1067
    %v1069 = vtanh.pop %v1068
    %v1070 = vmul.f32 %v1064, %v1069
    %1071 = vst [vmem:[#allocation10] sm:$0xff] %v1070
    %1072 = vst [vmem:[#allocation11] sm:$0xff] %v1068
    %s1073 = smul.u32 2, 4
    %s1074 = smul.addr %s1073, 8
    %s1075 = scalar_lea.vmem [#allocation8], %s1074
    %v1076 = vld [vmem:[%s1075] sm:$0xff]
    %v1077 = vld [vmem:[%s1075 + $0x8] sm:$0xff]
    %v1078 = vld [vmem:[%s1075 + $0x10] sm:$0xff]
    %v1079 = vld [vmem:[%s1075 + $0x18] sm:$0xff]
    %v1080 = vld [vmem:[#allocation10] sm:$0xff]
    %v1081 = vld [vmem:[#allocation17] sm:$0xff]
    %v1082 = vld [vmem:[#allocation17 + $0x8] sm:$0xff]
    %v1083 = vld [vmem:[#allocation17 + $0x10] sm:$0xff]
    %v1084 = vld [vmem:[#allocation17 + $0x18] sm:$0xff]
    %v1085 = vld [vmem:[#allocation17 + $0x20] sm:$0xff]
    %v1086 = vld [vmem:[#allocation17 + $0x28] sm:$0xff]
    %v1087 = vld [vmem:[#allocation17 + $0x30] sm:$0xff]
    %v1088 = vld [vmem:[#allocation17 + $0x38] sm:$0xff]
    %v1089 = vld [vmem:[#allocation17 + $0x40] sm:$0xff]
    %v1090 = vld [vmem:[#allocation17 + $0x48] sm:$0xff]
    %v1091 = vld [vmem:[#allocation17 + $0x50] sm:$0xff]
    %v1092 = vld [vmem:[#allocation17 + $0x58] sm:$0xff]
    %v1093 = vld [vmem:[#allocation17 + $0x60] sm:$0xff]
    %v1094 = vld [vmem:[#allocation17 + $0x68] sm:$0xff]
    %v1095 = vld [vmem:[#allocation17 + $0x70] sm:$0xff]
    %v1096 = vld [vmem:[#allocation17 + $0x78] sm:$0xff]
    %v1097 = vld [vmem:[#allocation17 + $0x80] sm:$0xff]
    %v1098 = vld [vmem:[#allocation17 + $0x88] sm:$0xff]
    %v1099 = vld [vmem:[#allocation17 + $0x90] sm:$0xff]
    %v1100 = vld [vmem:[#allocation17 + $0x98] sm:$0xff]
    %v1101 = vld [vmem:[#allocation17 + $0xa0] sm:$0xff]
    %v1102 = vld [vmem:[#allocation17 + $0xa8] sm:$0xff]
    %v1103 = vld [vmem:[#allocation17 + $0xb0] sm:$0xff]
    %v1104 = vld [vmem:[#allocation17 + $0xb8] sm:$0xff]
    %v1105 = vld [vmem:[#allocation17 + $0xc0] sm:$0xff]
    %v1106 = vld [vmem:[#allocation17 + $0xc8] sm:$0xff]
    %v1107 = vld [vmem:[#allocation17 + $0xd0] sm:$0xff]
    %v1108 = vld [vmem:[#allocation17 + $0xd8] sm:$0xff]
    %v1109 = vld [vmem:[#allocation17 + $0xe0] sm:$0xff]
    %v1110 = vld [vmem:[#allocation17 + $0xe8] sm:$0xff]
    %v1111 = vld [vmem:[#allocation17 + $0xf0] sm:$0xff]
    %v1112 = vld [vmem:[#allocation17 + $0xf8] sm:$0xff]
    %v1113 = vld [vmem:[#allocation17 + $0x100] sm:$0xff]
    %v1114 = vld [vmem:[#allocation17 + $0x108] sm:$0xff]
    %v1115 = vld [vmem:[#allocation17 + $0x110] sm:$0xff]
    %v1116 = vld [vmem:[#allocation17 + $0x118] sm:$0xff]
    %v1117 = vld [vmem:[#allocation17 + $0x120] sm:$0xff]
    %v1118 = vld [vmem:[#allocation17 + $0x128] sm:$0xff]
    %v1119 = vld [vmem:[#allocation17 + $0x130] sm:$0xff]
    %v1120 = vld [vmem:[#allocation17 + $0x138] sm:$0xff]
    %v1121 = vld [vmem:[#allocation17 + $0x140] sm:$0xff]
    %v1122 = vld [vmem:[#allocation17 + $0x148] sm:$0xff]
    %v1123 = vld [vmem:[#allocation17 + $0x150] sm:$0xff]
    %v1124 = vld [vmem:[#allocation17 + $0x158] sm:$0xff]
    %v1125 = vld [vmem:[#allocation17 + $0x160] sm:$0xff]
    %v1126 = vld [vmem:[#allocation17 + $0x168] sm:$0xff]
    %v1127 = vld [vmem:[#allocation17 + $0x170] sm:$0xff]
    %v1128 = vld [vmem:[#allocation17 + $0x178] sm:$0xff]
    %v1129 = vld [vmem:[#allocation17 + $0x180] sm:$0xff]
    %v1130 = vld [vmem:[#allocation17 + $0x188] sm:$0xff]
    %v1131 = vld [vmem:[#allocation17 + $0x190] sm:$0xff]
    %v1132 = vld [vmem:[#allocation17 + $0x198] sm:$0xff]
    %v1133 = vld [vmem:[#allocation17 + $0x1a0] sm:$0xff]
    %v1134 = vld [vmem:[#allocation17 + $0x1a8] sm:$0xff]
    %v1135 = vld [vmem:[#allocation17 + $0x1b0] sm:$0xff]
    %v1136 = vld [vmem:[#allocation17 + $0x1b8] sm:$0xff]
    %v1137 = vld [vmem:[#allocation17 + $0x1c0] sm:$0xff]
    %v1138 = vld [vmem:[#allocation17 + $0x1c8] sm:$0xff]
    %v1139 = vld [vmem:[#allocation17 + $0x1d0] sm:$0xff]
    %v1140 = vld [vmem:[#allocation17 + $0x1d8] sm:$0xff]
    %v1141 = vld [vmem:[#allocation17 + $0x1e0] sm:$0xff]
    %v1142 = vld [vmem:[#allocation17 + $0x1e8] sm:$0xff]
    %v1143 = vld [vmem:[#allocation17 + $0x1f0] sm:$0xff]
    %v1144 = vld [vmem:[#allocation17 + $0x1f8] sm:$0xff]
    %1145 = vmatprep.subr.mxu0 %v1082
    %1146 = vmatpush1.msra.mxu0 %v1081
    %1147 = vmatprep.subr.mxu0 %v1086
    %1148 = vmatpush1.msra.mxu0 %v1085
    %1149 = vmatprep.subr.mxu0 %v1090
    %1150 = vmatpush1.msra.mxu0 %v1089
    %1151 = vmatprep.subr.mxu0 %v1094
    %1152 = vmatpush1.msra.mxu0 %v1093
    %1153 = vmatprep.subr.mxu0 %v1098
    %1154 = vmatpush1.msra.mxu0 %v1097
    %1155 = vmatprep.subr.mxu0 %v1102
    %1156 = vmatpush1.msra.mxu0 %v1101
    %1157 = vmatprep.subr.mxu0 %v1106
    %1158 = vmatpush1.msra.mxu0 %v1105
    %1159 = vmatprep.subr.mxu0 %v1110
    %1160 = vmatpush1.msra.mxu0 %v1109
    %1161 = vmatprep.subr.mxu0 %v1114
    %1162 = vmatpush1.msra.mxu0 %v1113
    %1163 = vmatprep.subr.mxu0 %v1118
    %1164 = vmatpush1.msra.mxu0 %v1117
    %1165 = vmatprep.subr.mxu0 %v1122
    %1166 = vmatpush1.msra.mxu0 %v1121
    %1167 = vmatprep.subr.mxu0 %v1126
    %1168 = vmatpush1.msra.mxu0 %v1125
    %1169 = vmatprep.subr.mxu0 %v1130
    %1170 = vmatpush1.msra.mxu0 %v1129
    %1171 = vmatprep.subr.mxu0 %v1134
    %1172 = vmatpush1.msra.mxu0 %v1133
    %1173 = vmatprep.subr.mxu0 %v1138
    %1174 = vmatpush1.msra.mxu0 %v1137
    %1175 = vmatprep.subr.mxu0 %v1142
    %1176 = vmatpush1.msra.mxu0 %v1141
    %1177 = vmatprep.subr.mxu0 0.0
    %1178 = vmatpush1.msra.mxu0 0.0
    %1179 = vmatprep.subr.mxu0 0.0
    %1180 = vmatpush1.msra.mxu0 0.0
    %1181 = vmatprep.subr.mxu0 0.0
    %1182 = vmatpush1.msra.mxu0 0.0
    %1183 = vmatprep.subr.mxu0 0.0
    %1184 = vmatpush1.msra.mxu0 0.0
    %1185 = vmatprep.subr.mxu0 0.0
    %1186 = vmatpush1.msra.mxu0 0.0
    %1187 = vmatprep.subr.mxu0 0.0
    %1188 = vmatpush1.msra.mxu0 0.0
    %1189 = vmatprep.subr.mxu0 0.0
    %1190 = vmatpush1.msra.mxu0 0.0
    %1191 = vmatprep.subr.mxu0 0.0
    %1192 = vmatpush1.msra.mxu0 0.0
    %1193 = vmatprep.subr.mxu0 0.0
    %1194 = vmatpush1.msra.mxu0 0.0
    %1195 = vmatprep.subr.mxu0 0.0
    %1196 = vmatpush1.msra.mxu0 0.0
    %1197 = vmatprep.subr.mxu0 0.0
    %1198 = vmatpush1.msra.mxu0 0.0
    %1199 = vmatprep.subr.mxu0 0.0
    %1200 = vmatpush1.msra.mxu0 0.0
    %1201 = vmatprep.subr.mxu0 0.0
    %1202 = vmatpush1.msra.mxu0 0.0
    %1203 = vmatprep.subr.mxu0 0.0
    %1204 = vmatpush1.msra.mxu0 0.0
    %1205 = vmatprep.subr.mxu0 0.0
    %1206 = vmatpush1.msra.mxu0 0.0
    %1207 = vmatprep.subr.mxu0 0.0
    %1208 = vmatpush1.msra.mxu0 0.0
    %1209 = vmatprep.mubr.f32.mxu0 0.0
    %1210 = vmatmul.mubr.f32.gmra.mrb[0].mxu0 %v1080
    %v1211 = vpop.f32.mrb[0].mxu0
    %v1212 = vadd.f32 0.0, %v1211
    %v1213 = vpop.f32.mrb[0].mxu0
    %v1214 = vadd.f32 0.0, %v1213
    %1215 = vdwg.mxu0
    %1216 = vmatprep.subr.mxu0 %v1084
    %1217 = vmatpush1.msra.mxu0 %v1083
    %1218 = vmatprep.subr.mxu0 %v1088
    %1219 = vmatpush1.msra.mxu0 %v1087
    %1220 = vmatprep.subr.mxu0 %v1092
    %1221 = vmatpush1.msra.mxu0 %v1091
    %1222 = vmatprep.subr.mxu0 %v1096
    %1223 = vmatpush1.msra.mxu0 %v1095
    %1224 = vmatprep.subr.mxu0 %v1100
    %1225 = vmatpush1.msra.mxu0 %v1099
    %1226 = vmatprep.subr.mxu0 %v1104
    %1227 = vmatpush1.msra.mxu0 %v1103
    %1228 = vmatprep.subr.mxu0 %v1108
    %1229 = vmatpush1.msra.mxu0 %v1107
    %1230 = vmatprep.subr.mxu0 %v1112
    %1231 = vmatpush1.msra.mxu0 %v1111
    %1232 = vmatprep.subr.mxu0 %v1116
    %1233 = vmatpush1.msra.mxu0 %v1115
    %1234 = vmatprep.subr.mxu0 %v1120
    %1235 = vmatpush1.msra.mxu0 %v1119
    %1236 = vmatprep.subr.mxu0 %v1124
    %1237 = vmatpush1.msra.mxu0 %v1123
    %1238 = vmatprep.subr.mxu0 %v1128
    %1239 = vmatpush1.msra.mxu0 %v1127
    %1240 = vmatprep.subr.mxu0 %v1132
    %1241 = vmatpush1.msra.mxu0 %v1131
    %1242 = vmatprep.subr.mxu0 %v1136
    %1243 = vmatpush1.msra.mxu0 %v1135
    %1244 = vmatprep.subr.mxu0 %v1140
    %1245 = vmatpush1.msra.mxu0 %v1139
    %1246 = vmatprep.subr.mxu0 %v1144
    %1247 = vmatpush1.msra.mxu0 %v1143
    %1248 = vmatprep.subr.mxu0 0.0
    %1249 = vmatpush1.msra.mxu0 0.0
    %1250 = vmatprep.subr.mxu0 0.0
    %1251 = vmatpush1.msra.mxu0 0.0
    %1252 = vmatprep.subr.mxu0 0.0
    %1253 = vmatpush1.msra.mxu0 0.0
    %1254 = vmatprep.subr.mxu0 0.0
    %1255 = vmatpush1.msra.mxu0 0.0
    %1256 = vmatprep.subr.mxu0 0.0
    %1257 = vmatpush1.msra.mxu0 0.0
    %1258 = vmatprep.subr.mxu0 0.0
    %1259 = vmatpush1.msra.mxu0 0.0
    %1260 = vmatprep.subr.mxu0 0.0
    %1261 = vmatpush1.msra.mxu0 0.0
    %1262 = vmatprep.subr.mxu0 0.0
    %1263 = vmatpush1.msra.mxu0 0.0
    %1264 = vmatprep.subr.mxu0 0.0
    %1265 = vmatpush1.msra.mxu0 0.0
    %1266 = vmatprep.subr.mxu0 0.0
    %1267 = vmatpush1.msra.mxu0 0.0
    %1268 = vmatprep.subr.mxu0 0.0
    %1269 = vmatpush1.msra.mxu0 0.0
    %1270 = vmatprep.subr.mxu0 0.0
    %1271 = vmatpush1.msra.mxu0 0.0
    %1272 = vmatprep.subr.mxu0 0.0
    %1273 = vmatpush1.msra.mxu0 0.0
    %1274 = vmatprep.subr.mxu0 0.0
    %1275 = vmatpush1.msra.mxu0 0.0
    %1276 = vmatprep.subr.mxu0 0.0
    %1277 = vmatpush1.msra.mxu0 0.0
    %1278 = vmatprep.subr.mxu0 0.0
    %1279 = vmatpush1.msra.mxu0 0.0
    %1280 = vmatprep.mubr.f32.mxu0 0.0
    %1281 = vmatmul.mubr.f32.gmra.mrb[0].mxu0 %v1080
    %v1282 = vpop.f32.mrb[0].mxu0
    %v1283 = vadd.f32 0.0, %v1282
    %v1284 = vpop.f32.mrb[0].mxu0
    %v1285 = vadd.f32 0.0, %v1284
    %1286 = vdwg.mxu0
    %v1287 = vadd.f32 %v1076, %v1212
    %v1288 = vadd.f32 %v1077, %v1214
    %v1289 = vadd.f32 %v1078, %v1283
    %v1290 = vadd.f32 %v1079, %v1285
    %v1291 = vxor.u32 %v1287, 2147483648
    %v1292 = vmul.f32 %v1291, 1.442695
    %v1293 = vpow.pop %v1292
    %v1294 = vadd.f32 %v1293, 1.0
    %v1295 = vrcp.pop %v1294
    %v1296 = vmul.f32 1.0, %v1295
    %v1297 = vxor.u32 %v1288, 2147483648
    %v1298 = vmul.f32 %v1297, 1.442695
    %v1299 = vpow.pop %v1298
    %v1300 = vadd.f32 %v1299, 1.0
    %v1301 = vrcp.pop %v1300
    %v1302 = vmul.f32 1.0, %v1301
    %v1303 = vtanh.pop %v1289
    %v1304 = vxor.u32 %v1290, 2147483648
    %v1305 = vmul.f32 %v1304, 1.442695
    %v1306 = vpow.pop %v1305
    %v1307 = vadd.f32 %v1306, 1.0
    %v1308 = vrcp.pop %v1307
    %v1309 = vmul.f32 1.0, %v1308
    %v1310 = vld [vmem:[#allocation11] sm:$0xff]
    %v1311 = vmul.f32 %v1302, %v1310
    %v1312 = vmul.f32 %v1296, %v1303
    %v1313 = vadd.f32 %v1311, %v1312
    %v1314 = vtanh.pop %v1313
    %v1315 = vmul.f32 %v1309, %v1314
    %1316 = vst [vmem:[#allocation10] sm:$0xff] %v1315
    %1317 = vst [vmem:[#allocation11] sm:$0xff] %v1313
    %s1318 = smul.u32 3, 4
    %s1319 = smul.addr %s1318, 8
    %s1320 = scalar_lea.vmem [#allocation8], %s1319
    %v1321 = vld [vmem:[%s1320] sm:$0xff]
    %v1322 = vld [vmem:[%s1320 + $0x8] sm:$0xff]
    %v1323 = vld [vmem:[%s1320 + $0x10] sm:$0xff]
    %v1324 = vld [vmem:[%s1320 + $0x18] sm:$0xff]
    %v1325 = vld [vmem:[#allocation10] sm:$0xff]
    %v1326 = vld [vmem:[#allocation17] sm:$0xff]
    %v1327 = vld [vmem:[#allocation17 + $0x8] sm:$0xff]
    %v1328 = vld [vmem:[#allocation17 + $0x10] sm:$0xff]
    %v1329 = vld [vmem:[#allocation17 + $0x18] sm:$0xff]
    %v1330 = vld [vmem:[#allocation17 + $0x20] sm:$0xff]
    %v1331 = vld [vmem:[#allocation17 + $0x28] sm:$0xff]
    %v1332 = vld [vmem:[#allocation17 + $0x30] sm:$0xff]
    %v1333 = vld [vmem:[#allocation17 + $0x38] sm:$0xff]
    %v1334 = vld [vmem:[#allocation17 + $0x40] sm:$0xff]
    %v1335 = vld [vmem:[#allocation17 + $0x48] sm:$0xff]
    %v1336 = vld [vmem:[#allocation17 + $0x50] sm:$0xff]
    %v1337 = vld [vmem:[#allocation17 + $0x58] sm:$0xff]
    %v1338 = vld [vmem:[#allocation17 + $0x60] sm:$0xff]
    %v1339 = vld [vmem:[#allocation17 + $0x68] sm:$0xff]
    %v1340 = vld [vmem:[#allocation17 + $0x70] sm:$0xff]
    %v1341 = vld [vmem:[#allocation17 + $0x78] sm:$0xff]
    %v1342 = vld [vmem:[#allocation17 + $0x80] sm:$0xff]
    %v1343 = vld [vmem:[#allocation17 + $0x88] sm:$0xff]
    %v1344 = vld [vmem:[#allocation17 + $0x90] sm:$0xff]
    %v1345 = vld [vmem:[#allocation17 + $0x98] sm:$0xff]
    %v1346 = vld [vmem:[#allocation17 + $0xa0] sm:$0xff]
    %v1347 = vld [vmem:[#allocation17 + $0xa8] sm:$0xff]
    %v1348 = vld [vmem:[#allocation17 + $0xb0] sm:$0xff]
    %v1349 = vld [vmem:[#allocation17 + $0xb8] sm:$0xff]
    %v1350 = vld [vmem:[#allocation17 + $0xc0] sm:$0xff]
    %v1351 = vld [vmem:[#allocation17 + $0xc8] sm:$0xff]
    %v1352 = vld [vmem:[#allocation17 + $0xd0] sm:$0xff]
    %v1353 = vld [vmem:[#allocation17 + $0xd8] sm:$0xff]
    %v1354 = vld [vmem:[#allocation17 + $0xe0] sm:$0xff]
    %v1355 = vld [vmem:[#allocation17 + $0xe8] sm:$0xff]
    %v1356 = vld [vmem:[#allocation17 + $0xf0] sm:$0xff]
    %v1357 = vld [vmem:[#allocation17 + $0xf8] sm:$0xff]
    %v1358 = vld [vmem:[#allocation17 + $0x100] sm:$0xff]
    %v1359 = vld [vmem:[#allocation17 + $0x108] sm:$0xff]
    %v1360 = vld [vmem:[#allocation17 + $0x110] sm:$0xff]
    %v1361 = vld [vmem:[#allocation17 + $0x118] sm:$0xff]
    %v1362 = vld [vmem:[#allocation17 + $0x120] sm:$0xff]
    %v1363 = vld [vmem:[#allocation17 + $0x128] sm:$0xff]
    %v1364 = vld [vmem:[#allocation17 + $0x130] sm:$0xff]
    %v1365 = vld [vmem:[#allocation17 + $0x138] sm:$0xff]
    %v1366 = vld [vmem:[#allocation17 + $0x140] sm:$0xff]
    %v1367 = vld [vmem:[#allocation17 + $0x148] sm:$0xff]
    %v1368 = vld [vmem:[#allocation17 + $0x150] sm:$0xff]
    %v1369 = vld [vmem:[#allocation17 + $0x158] sm:$0xff]
    %v1370 = vld [vmem:[#allocation17 + $0x160] sm:$0xff]
    %v1371 = vld [vmem:[#allocation17 + $0x168] sm:$0xff]
    %v1372 = vld [vmem:[#allocation17 + $0x170] sm:$0xff]
    %v1373 = vld [vmem:[#allocation17 + $0x178] sm:$0xff]
    %v1374 = vld [vmem:[#allocation17 + $0x180] sm:$0xff]
    %v1375 = vld [vmem:[#allocation17 + $0x188] sm:$0xff]
    %v1376 = vld [vmem:[#allocation17 + $0x190] sm:$0xff]
    %v1377 = vld [vmem:[#allocation17 + $0x198] sm:$0xff]
    %v1378 = vld [vmem:[#allocation17 + $0x1a0] sm:$0xff]
    %v1379 = vld [vmem:[#allocation17 + $0x1a8] sm:$0xff]
    %v1380 = vld [vmem:[#allocation17 + $0x1b0] sm:$0xff]
    %v1381 = vld [vmem:[#allocation17 + $0x1b8] sm:$0xff]
    %v1382 = vld [vmem:[#allocation17 + $0x1c0] sm:$0xff]
    %v1383 = vld [vmem:[#allocation17 + $0x1c8] sm:$0xff]
    %v1384 = vld [vmem:[#allocation17 + $0x1d0] sm:$0xff]
    %v1385 = vld [vmem:[#allocation17 + $0x1d8] sm:$0xff]
    %v1386 = vld [vmem:[#allocation17 + $0x1e0] sm:$0xff]
    %v1387 = vld [vmem:[#allocation17 + $0x1e8] sm:$0xff]
    %v1388 = vld [vmem:[#allocation17 + $0x1f0] sm:$0xff]
    %v1389 = vld [vmem:[#allocation17 + $0x1f8] sm:$0xff]
    %1390 = vmatprep.subr.mxu0 %v1327
    %1391 = vmatpush1.msra.mxu0 %v1326
    %1392 = vmatprep.subr.mxu0 %v1331
    %1393 = vmatpush1.msra.mxu0 %v1330
    %1394 = vmatprep.subr.mxu0 %v1335
    %1395 = vmatpush1.msra.mxu0 %v1334
    %1396 = vmatprep.subr.mxu0 %v1339
    %1397 = vmatpush1.msra.mxu0 %v1338
    %1398 = vmatprep.subr.mxu0 %v1343
    %1399 = vmatpush1.msra.mxu0 %v1342
    %1400 = vmatprep.subr.mxu0 %v1347
    %1401 = vmatpush1.msra.mxu0 %v1346
    %1402 = vmatprep.subr.mxu0 %v1351
    %1403 = vmatpush1.msra.mxu0 %v1350
    %1404 = vmatprep.subr.mxu0 %v1355
    %1405 = vmatpush1.msra.mxu0 %v1354
    %1406 = vmatprep.subr.mxu0 %v1359
    %1407 = vmatpush1.msra.mxu0 %v1358
    %1408 = vmatprep.subr.mxu0 %v1363
    %1409 = vmatpush1.msra.mxu0 %v1362
    %1410 = vmatprep.subr.mxu0 %v1367
    %1411 = vmatpush1.msra.mxu0 %v1366
    %1412 = vmatprep.subr.mxu0 %v1371
    %1413 = vmatpush1.msra.mxu0 %v1370
    %1414 = vmatprep.subr.mxu0 %v1375
    %1415 = vmatpush1.msra.mxu0 %v1374
    %1416 = vmatprep.subr.mxu0 %v1379
    %1417 = vmatpush1.msra.mxu0 %v1378
    %1418 = vmatprep.subr.mxu0 %v1383
    %1419 = vmatpush1.msra.mxu0 %v1382
    %1420 = vmatprep.subr.mxu0 %v1387
    %1421 = vmatpush1.msra.mxu0 %v1386
    %1422 = vmatprep.subr.mxu0 0.0
    %1423 = vmatpush1.msra.mxu0 0.0
    %1424 = vmatprep.subr.mxu0 0.0
    %1425 = vmatpush1.msra.mxu0 0.0
    %1426 = vmatprep.subr.mxu0 0.0
    %1427 = vmatpush1.msra.mxu0 0.0
    %1428 = vmatprep.subr.mxu0 0.0
    %1429 = vmatpush1.msra.mxu0 0.0
    %1430 = vmatprep.subr.mxu0 0.0
    %1431 = vmatpush1.msra.mxu0 0.0
    %1432 = vmatprep.subr.mxu0 0.0
    %1433 = vmatpush1.msra.mxu0 0.0
    %1434 = vmatprep.subr.mxu0 0.0
    %1435 = vmatpush1.msra.mxu0 0.0
    %1436 = vmatprep.subr.mxu0 0.0
    %1437 = vmatpush1.msra.mxu0 0.0
    %1438 = vmatprep.subr.mxu0 0.0
    %1439 = vmatpush1.msra.mxu0 0.0
    %1440 = vmatprep.subr.mxu0 0.0
    %1441 = vmatpush1.msra.mxu0 0.0
    %1442 = vmatprep.subr.mxu0 0.0
    %1443 = vmatpush1.msra.mxu0 0.0
    %1444 = vmatprep.subr.mxu0 0.0
    %1445 = vmatpush1.msra.mxu0 0.0
    %1446 = vmatprep.subr.mxu0 0.0
    %1447 = vmatpush1.msra.mxu0 0.0
    %1448 = vmatprep.subr.mxu0 0.0
    %1449 = vmatpush1.msra.mxu0 0.0
    %1450 = vmatprep.subr.mxu0 0.0
    %1451 = vmatpush1.msra.mxu0 0.0
    %1452 = vmatprep.subr.mxu0 0.0
    %1453 = vmatpush1.msra.mxu0 0.0
    %1454 = vmatprep.mubr.f32.mxu0 0.0
    %1455 = vmatmul.mubr.f32.gmra.mrb[0].mxu0 %v1325
    %v1456 = vpop.f32.mrb[0].mxu0
    %v1457 = vadd.f32 0.0, %v1456
    %v1458 = vpop.f32.mrb[0].mxu0
    %v1459 = vadd.f32 0.0, %v1458
    %1460 = vdwg.mxu0
    %1461 = vmatprep.subr.mxu0 %v1329
    %1462 = vmatpush1.msra.mxu0 %v1328
    %1463 = vmatprep.subr.mxu0 %v1333
    %1464 = vmatpush1.msra.mxu0 %v1332
    %1465 = vmatprep.subr.mxu0 %v1337
    %1466 = vmatpush1.msra.mxu0 %v1336
    %1467 = vmatprep.subr.mxu0 %v1341
    %1468 = vmatpush1.msra.mxu0 %v1340
    %1469 = vmatprep.subr.mxu0 %v1345
    %1470 = vmatpush1.msra.mxu0 %v1344
    %1471 = vmatprep.subr.mxu0 %v1349
    %1472 = vmatpush1.msra.mxu0 %v1348
    %1473 = vmatprep.subr.mxu0 %v1353
    %1474 = vmatpush1.msra.mxu0 %v1352
    %1475 = vmatprep.subr.mxu0 %v1357
    %1476 = vmatpush1.msra.mxu0 %v1356
    %1477 = vmatprep.subr.mxu0 %v1361
    %1478 = vmatpush1.msra.mxu0 %v1360
    %1479 = vmatprep.subr.mxu0 %v1365
    %1480 = vmatpush1.msra.mxu0 %v1364
    %1481 = vmatprep.subr.mxu0 %v1369
    %1482 = vmatpush1.msra.mxu0 %v1368
    %1483 = vmatprep.subr.mxu0 %v1373
    %1484 = vmatpush1.msra.mxu0 %v1372
    %1485 = vmatprep.subr.mxu0 %v1377
    %1486 = vmatpush1.msra.mxu0 %v1376
    %1487 = vmatprep.subr.mxu0 %v1381
    %1488 = vmatpush1.msra.mxu0 %v1380
    %1489 = vmatprep.subr.mxu0 %v1385
    %1490 = vmatpush1.msra.mxu0 %v1384
    %1491 = vmatprep.subr.mxu0 %v1389
    %1492 = vmatpush1.msra.mxu0 %v1388
    %1493 = vmatprep.subr.mxu0 0.0
    %1494 = vmatpush1.msra.mxu0 0.0
    %1495 = vmatprep.subr.mxu0 0.0
    %1496 = vmatpush1.msra.mxu0 0.0
    %1497 = vmatprep.subr.mxu0 0.0
    %1498 = vmatpush1.msra.mxu0 0.0
    %1499 = vmatprep.subr.mxu0 0.0
    %1500 = vmatpush1.msra.mxu0 0.0
    %1501 = vmatprep.subr.mxu0 0.0
    %1502 = vmatpush1.msra.mxu0 0.0
    %1503 = vmatprep.subr.mxu0 0.0
    %1504 = vmatpush1.msra.mxu0 0.0
    %1505 = vmatprep.subr.mxu0 0.0
    %1506 = vmatpush1.msra.mxu0 0.0
    %1507 = vmatprep.subr.mxu0 0.0
    %1508 = vmatpush1.msra.mxu0 0.0
    %1509 = vmatprep.subr.mxu0 0.0
    %1510 = vmatpush1.msra.mxu0 0.0
    %1511 = vmatprep.subr.mxu0 0.0
    %1512 = vmatpush1.msra.mxu0 0.0
    %1513 = vmatprep.subr.mxu0 0.0
    %1514 = vmatpush1.msra.mxu0 0.0
    %1515 = vmatprep.subr.mxu0 0.0
    %1516 = vmatpush1.msra.mxu0 0.0
    %1517 = vmatprep.subr.mxu0 0.0
    %1518 = vmatpush1.msra.mxu0 0.0
    %1519 = vmatprep.subr.mxu0 0.0
    %1520 = vmatpush1.msra.mxu0 0.0
    %1521 = vmatprep.subr.mxu0 0.0
    %1522 = vmatpush1.msra.mxu0 0.0
    %1523 = vmatprep.subr.mxu0 0.0
    %1524 = vmatpush1.msra.mxu0 0.0
    %1525 = vmatprep.mubr.f32.mxu0 0.0
    %1526 = vmatmul.mubr.f32.gmra.mrb[0].mxu0 %v1325
    %v1527 = vpop.f32.mrb[0].mxu0
    %v1528 = vadd.f32 0.0, %v1527
    %v1529 = vpop.f32.mrb[0].mxu0
    %v1530 = vadd.f32 0.0, %v1529
    %1531 = vdwg.mxu0
    %v1532 = vadd.f32 %v1321, %v1457
    %v1533 = vadd.f32 %v1322, %v1459
    %v1534 = vadd.f32 %v1323, %v1528
    %v1535 = vadd.f32 %v1324, %v1530
    %v1536 = vxor.u32 %v1532, 2147483648
    %v1537 = vmul.f32 %v1536, 1.442695
    %v1538 = vpow.pop %v1537
    %v1539 = vadd.f32 %v1538, 1.0
    %v1540 = vrcp.pop %v1539
    %v1541 = vmul.f32 1.0, %v1540
    %v1542 = vxor.u32 %v1533, 2147483648
    %v1543 = vmul.f32 %v1542, 1.442695
    %v1544 = vpow.pop %v1543
    %v1545 = vadd.f32 %v1544, 1.0
    %v1546 = vrcp.pop %v1545
    %v1547 = vmul.f32 1.0, %v1546
    %v1548 = vtanh.pop %v1534
    %v1549 = vxor.u32 %v1535, 2147483648
    %v1550 = vmul.f32 %v1549, 1.442695
    %v1551 = vpow.pop %v1550
    %v1552 = vadd.f32 %v1551, 1.0
    %v1553 = vrcp.pop %v1552
    %v1554 = vmul.f32 1.0, %v1553
    %v1555 = vld [vmem:[#allocation11] sm:$0xff]
    %v1556 = vmul.f32 %v1547, %v1555
    %v1557 = vmul.f32 %v1541, %v1548
    %v1558 = vadd.f32 %v1556, %v1557
    %v1559 = vtanh.pop %v1558
    %v1560 = vmul.f32 %v1554, %v1559
    %1561 = vst [vmem:[#allocation10] sm:$0xff] %v1560
    %1562 = vst [vmem:[#allocation11] sm:$0xff] %v1558
    %s1563 = smul.u32 4, 4
    %s1564 = smul.addr %s1563, 8
    %s1565 = scalar_lea.vmem [#allocation8], %s1564
    %v1566 = vld [vmem:[%s1565] sm:$0xff]
    %v1567 = vld [vmem:[%s1565 + $0x8] sm:$0xff]
    %v1568 = vld [vmem:[%s1565 + $0x10] sm:$0xff]
    %v1569 = vld [vmem:[%s1565 + $0x18] sm:$0xff]
    %v1570 = vld [vmem:[#allocation10] sm:$0xff]
    %v1571 = vld [vmem:[#allocation17] sm:$0xff]
    %v1572 = vld [vmem:[#allocation17 + $0x8] sm:$0xff]
    %v1573 = vld [vmem:[#allocation17 + $0x10] sm:$0xff]
    %v1574 = vld [vmem:[#allocation17 + $0x18] sm:$0xff]
    %v1575 = vld [vmem:[#allocation17 + $0x20] sm:$0xff]
    %v1576 = vld [vmem:[#allocation17 + $0x28] sm:$0xff]
    %v1577 = vld [vmem:[#allocation17 + $0x30] sm:$0xff]
    %v1578 = vld [vmem:[#allocation17 + $0x38] sm:$0xff]
    %v1579 = vld [vmem:[#allocation17 + $0x40] sm:$0xff]
    %v1580 = vld [vmem:[#allocation17 + $0x48] sm:$0xff]
    %v1581 = vld [vmem:[#allocation17 + $0x50] sm:$0xff]
    %v1582 = vld [vmem:[#allocation17 + $0x58] sm:$0xff]
    %v1583 = vld [vmem:[#allocation17 + $0x60] sm:$0xff]
    %v1584 = vld [vmem:[#allocation17 + $0x68] sm:$0xff]
    %v1585 = vld [vmem:[#allocation17 + $0x70] sm:$0xff]
    %v1586 = vld [vmem:[#allocation17 + $0x78] sm:$0xff]
    %v1587 = vld [vmem:[#allocation17 + $0x80] sm:$0xff]
    %v1588 = vld [vmem:[#allocation17 + $0x88] sm:$0xff]
    %v1589 = vld [vmem:[#allocation17 + $0x90] sm:$0xff]
    %v1590 = vld [vmem:[#allocation17 + $0x98] sm:$0xff]
    %v1591 = vld [vmem:[#allocation17 + $0xa0] sm:$0xff]
    %v1592 = vld [vmem:[#allocation17 + $0xa8] sm:$0xff]
    %v1593 = vld [vmem:[#allocation17 + $0xb0] sm:$0xff]
    %v1594 = vld [vmem:[#allocation17 + $0xb8] sm:$0xff]
    %v1595 = vld [vmem:[#allocation17 + $0xc0] sm:$0xff]
    %v1596 = vld [vmem:[#allocation17 + $0xc8] sm:$0xff]
    %v1597 = vld [vmem:[#allocation17 + $0xd0] sm:$0xff]
    %v1598 = vld [vmem:[#allocation17 + $0xd8] sm:$0xff]
    %v1599 = vld [vmem:[#allocation17 + $0xe0] sm:$0xff]
    %v1600 = vld [vmem:[#allocation17 + $0xe8] sm:$0xff]
    %v1601 = vld [vmem:[#allocation17 + $0xf0] sm:$0xff]
    %v1602 = vld [vmem:[#allocation17 + $0xf8] sm:$0xff]
    %v1603 = vld [vmem:[#allocation17 + $0x100] sm:$0xff]
    %v1604 = vld [vmem:[#allocation17 + $0x108] sm:$0xff]
    %v1605 = vld [vmem:[#allocation17 + $0x110] sm:$0xff]
    %v1606 = vld [vmem:[#allocation17 + $0x118] sm:$0xff]
    %v1607 = vld [vmem:[#allocation17 + $0x120] sm:$0xff]
    %v1608 = vld [vmem:[#allocation17 + $0x128] sm:$0xff]
    %v1609 = vld [vmem:[#allocation17 + $0x130] sm:$0xff]
    %v1610 = vld [vmem:[#allocation17 + $0x138] sm:$0xff]
    %v1611 = vld [vmem:[#allocation17 + $0x140] sm:$0xff]
    %v1612 = vld [vmem:[#allocation17 + $0x148] sm:$0xff]
    %v1613 = vld [vmem:[#allocation17 + $0x150] sm:$0xff]
    %v1614 = vld [vmem:[#allocation17 + $0x158] sm:$0xff]
    %v1615 = vld [vmem:[#allocation17 + $0x160] sm:$0xff]
    %v1616 = vld [vmem:[#allocation17 + $0x168] sm:$0xff]
    %v1617 = vld [vmem:[#allocation17 + $0x170] sm:$0xff]
    %v1618 = vld [vmem:[#allocation17 + $0x178] sm:$0xff]
    %v1619 = vld [vmem:[#allocation17 + $0x180] sm:$0xff]
    %v1620 = vld [vmem:[#allocation17 + $0x188] sm:$0xff]
    %v1621 = vld [vmem:[#allocation17 + $0x190] sm:$0xff]
    %v1622 = vld [vmem:[#allocation17 + $0x198] sm:$0xff]
    %v1623 = vld [vmem:[#allocation17 + $0x1a0] sm:$0xff]
    %v1624 = vld [vmem:[#allocation17 + $0x1a8] sm:$0xff]
    %v1625 = vld [vmem:[#allocation17 + $0x1b0] sm:$0xff]
    %v1626 = vld [vmem:[#allocation17 + $0x1b8] sm:$0xff]
    %v1627 = vld [vmem:[#allocation17 + $0x1c0] sm:$0xff]
    %v1628 = vld [vmem:[#allocation17 + $0x1c8] sm:$0xff]
    %v1629 = vld [vmem:[#allocation17 + $0x1d0] sm:$0xff]
    %v1630 = vld [vmem:[#allocation17 + $0x1d8] sm:$0xff]
    %v1631 = vld [vmem:[#allocation17 + $0x1e0] sm:$0xff]
    %v1632 = vld [vmem:[#allocation17 + $0x1e8] sm:$0xff]
    %v1633 = vld [vmem:[#allocation17 + $0x1f0] sm:$0xff]
    %v1634 = vld [vmem:[#allocation17 + $0x1f8] sm:$0xff]
    %1635 = vmatprep.subr.mxu0 %v1572
    %1636 = vmatpush1.msra.mxu0 %v1571
    %1637 = vmatprep.subr.mxu0 %v1576
    %1638 = vmatpush1.msra.mxu0 %v1575
    %1639 = vmatprep.subr.mxu0 %v1580
    %1640 = vmatpush1.msra.mxu0 %v1579
    %1641 = vmatprep.subr.mxu0 %v1584
    %1642 = vmatpush1.msra.mxu0 %v1583
    %1643 = vmatprep.subr.mxu0 %v1588
    %1644 = vmatpush1.msra.mxu0 %v1587
    %1645 = vmatprep.subr.mxu0 %v1592
    %1646 = vmatpush1.msra.mxu0 %v1591
    %1647 = vmatprep.subr.mxu0 %v1596
    %1648 = vmatpush1.msra.mxu0 %v1595
    %1649 = vmatprep.subr.mxu0 %v1600
    %1650 = vmatpush1.msra.mxu0 %v1599
    %1651 = vmatprep.subr.mxu0 %v1604
    %1652 = vmatpush1.msra.mxu0 %v1603
    %1653 = vmatprep.subr.mxu0 %v1608
    %1654 = vmatpush1.msra.mxu0 %v1607
    %1655 = vmatprep.subr.mxu0 %v1612
    %1656 = vmatpush1.msra.mxu0 %v1611
    %1657 = vmatprep.subr.mxu0 %v1616
    %1658 = vmatpush1.msra.mxu0 %v1615
    %1659 = vmatprep.subr.mxu0 %v1620
    %1660 = vmatpush1.msra.mxu0 %v1619
    %1661 = vmatprep.subr.mxu0 %v1624
    %1662 = vmatpush1.msra.mxu0 %v1623
    %1663 = vmatprep.subr.mxu0 %v1628
    %1664 = vmatpush1.msra.mxu0 %v1627
    %1665 = vmatprep.subr.mxu0 %v1632
    %1666 = vmatpush1.msra.mxu0 %v1631
    %1667 = vmatprep.subr.mxu0 0.0
    %1668 = vmatpush1.msra.mxu0 0.0
    %1669 = vmatprep.subr.mxu0 0.0
    %1670 = vmatpush1.msra.mxu0 0.0
    %1671 = vmatprep.subr.mxu0 0.0
    %1672 = vmatpush1.msra.mxu0 0.0
    %1673 = vmatprep.subr.mxu0 0.0
    %1674 = vmatpush1.msra.mxu0 0.0
    %1675 = vmatprep.subr.mxu0 0.0
    %1676 = vmatpush1.msra.mxu0 0.0
    %1677 = vmatprep.subr.mxu0 0.0
    %1678 = vmatpush1.msra.mxu0 0.0
    %1679 = vmatprep.subr.mxu0 0.0
    %1680 = vmatpush1.msra.mxu0 0.0
    %1681 = vmatprep.subr.mxu0 0.0
    %1682 = vmatpush1.msra.mxu0 0.0
    %1683 = vmatprep.subr.mxu0 0.0
    %1684 = vmatpush1.msra.mxu0 0.0
    %1685 = vmatprep.subr.mxu0 0.0
    %1686 = vmatpush1.msra.mxu0 0.0
    %1687 = vmatprep.subr.mxu0 0.0
    %1688 = vmatpush1.msra.mxu0 0.0
    %1689 = vmatprep.subr.mxu0 0.0
    %1690 = vmatpush1.msra.mxu0 0.0
    %1691 = vmatprep.subr.mxu0 0.0
    %1692 = vmatpush1.msra.mxu0 0.0
    %1693 = vmatprep.subr.mxu0 0.0
    %1694 = vmatpush1.msra.mxu0 0.0
    %1695 = vmatprep.subr.mxu0 0.0
    %1696 = vmatpush1.msra.mxu0 0.0
    %1697 = vmatprep.subr.mxu0 0.0
    %1698 = vmatpush1.msra.mxu0 0.0
    %1699 = vmatprep.mubr.f32.mxu0 0.0
    %1700 = vmatmul.mubr.f32.gmra.mrb[0].mxu0 %v1570
    %v1701 = vpop.f32.mrb[0].mxu0
    %v1702 = vadd.f32 0.0, %v1701
    %v1703 = vpop.f32.mrb[0].mxu0
    %v1704 = vadd.f32 0.0, %v1703
    %1705 = vdwg.mxu0
    %1706 = vmatprep.subr.mxu0 %v1574
    %1707 = vmatpush1.msra.mxu0 %v1573
    %1708 = vmatprep.subr.mxu0 %v1578
    %1709 = vmatpush1.msra.mxu0 %v1577
    %1710 = vmatprep.subr.mxu0 %v1582
    %1711 = vmatpush1.msra.mxu0 %v1581
    %1712 = vmatprep.subr.mxu0 %v1586
    %1713 = vmatpush1.msra.mxu0 %v1585
    %1714 = vmatprep.subr.mxu0 %v1590
    %1715 = vmatpush1.msra.mxu0 %v1589
    %1716 = vmatprep.subr.mxu0 %v1594
    %1717 = vmatpush1.msra.mxu0 %v1593
    %1718 = vmatprep.subr.mxu0 %v1598
    %1719 = vmatpush1.msra.mxu0 %v1597
    %1720 = vmatprep.subr.mxu0 %v1602
    %1721 = vmatpush1.msra.mxu0 %v1601
    %1722 = vmatprep.subr.mxu0 %v1606
    %1723 = vmatpush1.msra.mxu0 %v1605
    %1724 = vmatprep.subr.mxu0 %v1610
    %1725 = vmatpush1.msra.mxu0 %v1609
    %1726 = vmatprep.subr.mxu0 %v1614
    %1727 = vmatpush1.msra.mxu0 %v1613
    %1728 = vmatprep.subr.mxu0 %v1618
    %1729 = vmatpush1.msra.mxu0 %v1617
    %1730 = vmatprep.subr.mxu0 %v1622
    %1731 = vmatpush1.msra.mxu0 %v1621
    %1732 = vmatprep.subr.mxu0 %v1626
    %1733 = vmatpush1.msra.mxu0 %v1625
    %1734 = vmatprep.subr.mxu0 %v1630
    %1735 = vmatpush1.msra.mxu0 %v1629
    %1736 = vmatprep.subr.mxu0 %v1634
    %1737 = vmatpush1.msra.mxu0 %v1633
    %1738 = vmatprep.subr.mxu0 0.0
    %1739 = vmatpush1.msra.mxu0 0.0
    %1740 = vmatprep.subr.mxu0 0.0
    %1741 = vmatpush1.msra.mxu0 0.0
    %1742 = vmatprep.subr.mxu0 0.0
    %1743 = vmatpush1.msra.mxu0 0.0
    %1744 = vmatprep.subr.mxu0 0.0
    %1745 = vmatpush1.msra.mxu0 0.0
    %1746 = vmatprep.subr.mxu0 0.0
    %1747 = vmatpush1.msra.mxu0 0.0
    %1748 = vmatprep.subr.mxu0 0.0
    %1749 = vmatpush1.msra.mxu0 0.0
    %1750 = vmatprep.subr.mxu0 0.0
    %1751 = vmatpush1.msra.mxu0 0.0
    %1752 = vmatprep.subr.mxu0 0.0
    %1753 = vmatpush1.msra.mxu0 0.0
    %1754 = vmatprep.subr.mxu0 0.0
    %1755 = vmatpush1.msra.mxu0 0.0
    %1756 = vmatprep.subr.mxu0 0.0
    %1757 = vmatpush1.msra.mxu0 0.0
    %1758 = vmatprep.subr.mxu0 0.0
    %1759 = vmatpush1.msra.mxu0 0.0
    %1760 = vmatprep.subr.mxu0 0.0
    %1761 = vmatpush1.msra.mxu0 0.0
    %1762 = vmatprep.subr.mxu0 0.0
    %1763 = vmatpush1.msra.mxu0 0.0
    %1764 = vmatprep.subr.mxu0 0.0
    %1765 = vmatpush1.msra.mxu0 0.0
    %1766 = vmatprep.subr.mxu0 0.0
    %1767 = vmatpush1.msra.mxu0 0.0
    %1768 = vmatprep.subr.mxu0 0.0
    %1769 = vmatpush1.msra.mxu0 0.0
    %1770 = vmatprep.mubr.f32.mxu0 0.0
    %1771 = vmatmul.mubr.f32.gmra.mrb[0].mxu0 %v1570
    %v1772 = vpop.f32.mrb[0].mxu0
    %v1773 = vadd.f32 0.0, %v1772
    %v1774 = vpop.f32.mrb[0].mxu0
    %v1775 = vadd.f32 0.0, %v1774
    %1776 = vdwg.mxu0
    %v1777 = vadd.f32 %v1566, %v1702
    %v1778 = vadd.f32 %v1567, %v1704
    %v1779 = vadd.f32 %v1568, %v1773
    %v1780 = vadd.f32 %v1569, %v1775
    %v1781 = vxor.u32 %v1777, 2147483648
    %v1782 = vmul.f32 %v1781, 1.442695
    %v1783 = vpow.pop %v1782
    %v1784 = vadd.f32 %v1783, 1.0
    %v1785 = vrcp.pop %v1784
    %v1786 = vmul.f32 1.0, %v1785
    %v1787 = vxor.u32 %v1778, 2147483648
    %v1788 = vmul.f32 %v1787, 1.442695
    %v1789 = vpow.pop %v1788
    %v1790 = vadd.f32 %v1789, 1.0
    %v1791 = vrcp.pop %v1790
    %v1792 = vmul.f32 1.0, %v1791
    %v1793 = vtanh.pop %v1779
    %v1794 = vxor.u32 %v1780, 2147483648
    %v1795 = vmul.f32 %v1794, 1.442695
    %v1796 = vpow.pop %v1795
    %v1797 = vadd.f32 %v1796, 1.0
    %v1798 = vrcp.pop %v1797
    %v1799 = vmul.f32 1.0, %v1798
    %v1800 = vld [vmem:[#allocation11] sm:$0xff]
    %v1801 = vmul.f32 %v1792, %v1800
    %v1802 = vmul.f32 %v1786, %v1793
    %v1803 = vadd.f32 %v1801, %v1802
    %v1804 = vtanh.pop %v1803
    %v1805 = vmul.f32 %v1799, %v1804
    %1806 = vst [vmem:[#allocation10] sm:$0xff] %v1805
    %1807 = vst [vmem:[#allocation11] sm:$0xff] %v1803
    %s1808 = smul.u32 5, 4
    %s1809 = smul.addr %s1808, 8
    %s1810 = scalar_lea.vmem [#allocation8], %s1809
    %v1811 = vld [vmem:[%s1810] sm:$0xff]
    %v1812 = vld [vmem:[%s1810 + $0x8] sm:$0xff]
    %v1813 = vld [vmem:[%s1810 + $0x10] sm:$0xff]
    %v1814 = vld [vmem:[%s1810 + $0x18] sm:$0xff]
    %v1815 = vld [vmem:[#allocation10] sm:$0xff]
    %v1816 = vld [vmem:[#allocation17] sm:$0xff]
    %v1817 = vld [vmem:[#allocation17 + $0x8] sm:$0xff]
    %v1818 = vld [vmem:[#allocation17 + $0x10] sm:$0xff]
    %v1819 = vld [vmem:[#allocation17 + $0x18] sm:$0xff]
    %v1820 = vld [vmem:[#allocation17 + $0x20] sm:$0xff]
    %v1821 = vld [vmem:[#allocation17 + $0x28] sm:$0xff]
    %v1822 = vld [vmem:[#allocation17 + $0x30] sm:$0xff]
    %v1823 = vld [vmem:[#allocation17 + $0x38] sm:$0xff]
    %v1824 = vld [vmem:[#allocation17 + $0x40] sm:$0xff]
    %v1825 = vld [vmem:[#allocation17 + $0x48] sm:$0xff]
    %v1826 = vld [vmem:[#allocation17 + $0x50] sm:$0xff]
    %v1827 = vld [vmem:[#allocation17 + $0x58] sm:$0xff]
    %v1828 = vld [vmem:[#allocation17 + $0x60] sm:$0xff]
    %v1829 = vld [vmem:[#allocation17 + $0x68] sm:$0xff]
    %v1830 = vld [vmem:[#allocation17 + $0x70] sm:$0xff]
    %v1831 = vld [vmem:[#allocation17 + $0x78] sm:$0xff]
    %v1832 = vld [vmem:[#allocation17 + $0x80] sm:$0xff]
    %v1833 = vld [vmem:[#allocation17 + $0x88] sm:$0xff]
    %v1834 = vld [vmem:[#allocation17 + $0x90] sm:$0xff]
    %v1835 = vld [vmem:[#allocation17 + $0x98] sm:$0xff]
    %v1836 = vld [vmem:[#allocation17 + $0xa0] sm:$0xff]
    %v1837 = vld [vmem:[#allocation17 + $0xa8] sm:$0xff]
    %v1838 = vld [vmem:[#allocation17 + $0xb0] sm:$0xff]
    %v1839 = vld [vmem:[#allocation17 + $0xb8] sm:$0xff]
    %v1840 = vld [vmem:[#allocation17 + $0xc0] sm:$0xff]
    %v1841 = vld [vmem:[#allocation17 + $0xc8] sm:$0xff]
    %v1842 = vld [vmem:[#allocation17 + $0xd0] sm:$0xff]
    %v1843 = vld [vmem:[#allocation17 + $0xd8] sm:$0xff]
    %v1844 = vld [vmem:[#allocation17 + $0xe0] sm:$0xff]
    %v1845 = vld [vmem:[#allocation17 + $0xe8] sm:$0xff]
    %v1846 = vld [vmem:[#allocation17 + $0xf0] sm:$0xff]
    %v1847 = vld [vmem:[#allocation17 + $0xf8] sm:$0xff]
    %v1848 = vld [vmem:[#allocation17 + $0x100] sm:$0xff]
    %v1849 = vld [vmem:[#allocation17 + $0x108] sm:$0xff]
    %v1850 = vld [vmem:[#allocation17 + $0x110] sm:$0xff]
    %v1851 = vld [vmem:[#allocation17 + $0x118] sm:$0xff]
    %v1852 = vld [vmem:[#allocation17 + $0x120] sm:$0xff]
    %v1853 = vld [vmem:[#allocation17 + $0x128] sm:$0xff]
    %v1854 = vld [vmem:[#allocation17 + $0x130] sm:$0xff]
    %v1855 = vld [vmem:[#allocation17 + $0x138] sm:$0xff]
    %v1856 = vld [vmem:[#allocation17 + $0x140] sm:$0xff]
    %v1857 = vld [vmem:[#allocation17 + $0x148] sm:$0xff]
    %v1858 = vld [vmem:[#allocation17 + $0x150] sm:$0xff]
    %v1859 = vld [vmem:[#allocation17 + $0x158] sm:$0xff]
    %v1860 = vld [vmem:[#allocation17 + $0x160] sm:$0xff]
    %v1861 = vld [vmem:[#allocation17 + $0x168] sm:$0xff]
    %v1862 = vld [vmem:[#allocation17 + $0x170] sm:$0xff]
    %v1863 = vld [vmem:[#allocation17 + $0x178] sm:$0xff]
    %v1864 = vld [vmem:[#allocation17 + $0x180] sm:$0xff]
    %v1865 = vld [vmem:[#allocation17 + $0x188] sm:$0xff]
    %v1866 = vld [vmem:[#allocation17 + $0x190] sm:$0xff]
    %v1867 = vld [vmem:[#allocation17 + $0x198] sm:$0xff]
    %v1868 = vld [vmem:[#allocation17 + $0x1a0] sm:$0xff]
    %v1869 = vld [vmem:[#allocation17 + $0x1a8] sm:$0xff]
    %v1870 = vld [vmem:[#allocation17 + $0x1b0] sm:$0xff]
    %v1871 = vld [vmem:[#allocation17 + $0x1b8] sm:$0xff]
    %v1872 = vld [vmem:[#allocation17 + $0x1c0] sm:$0xff]
    %v1873 = vld [vmem:[#allocation17 + $0x1c8] sm:$0xff]
    %v1874 = vld [vmem:[#allocation17 + $0x1d0] sm:$0xff]
    %v1875 = vld [vmem:[#allocation17 + $0x1d8] sm:$0xff]
    %v1876 = vld [vmem:[#allocation17 + $0x1e0] sm:$0xff]
    %v1877 = vld [vmem:[#allocation17 + $0x1e8] sm:$0xff]
    %v1878 = vld [vmem:[#allocation17 + $0x1f0] sm:$0xff]
    %v1879 = vld [vmem:[#allocation17 + $0x1f8] sm:$0xff]
    %1880 = vmatprep.subr.mxu0 %v1817
    %1881 = vmatpush1.msra.mxu0 %v1816
    %1882 = vmatprep.subr.mxu0 %v1821
    %1883 = vmatpush1.msra.mxu0 %v1820
    %1884 = vmatprep.subr.mxu0 %v1825
    %1885 = vmatpush1.msra.mxu0 %v1824
    %1886 = vmatprep.subr.mxu0 %v1829
    %1887 = vmatpush1.msra.mxu0 %v1828
    %1888 = vmatprep.subr.mxu0 %v1833
    %1889 = vmatpush1.msra.mxu0 %v1832
    %1890 = vmatprep.subr.mxu0 %v1837
    %1891 = vmatpush1.msra.mxu0 %v1836
    %1892 = vmatprep.subr.mxu0 %v1841
    %1893 = vmatpush1.msra.mxu0 %v1840
    %1894 = vmatprep.subr.mxu0 %v1845
    %1895 = vmatpush1.msra.mxu0 %v1844
    %1896 = vmatprep.subr.mxu0 %v1849
    %1897 = vmatpush1.msra.mxu0 %v1848
    %1898 = vmatprep.subr.mxu0 %v1853
    %1899 = vmatpush1.msra.mxu0 %v1852
    %1900 = vmatprep.subr.mxu0 %v1857
    %1901 = vmatpush1.msra.mxu0 %v1856
    %1902 = vmatprep.subr.mxu0 %v1861
    %1903 = vmatpush1.msra.mxu0 %v1860
    %1904 = vmatprep.subr.mxu0 %v1865
    %1905 = vmatpush1.msra.mxu0 %v1864
    %1906 = vmatprep.subr.mxu0 %v1869
    %1907 = vmatpush1.msra.mxu0 %v1868
    %1908 = vmatprep.subr.mxu0 %v1873
    %1909 = vmatpush1.msra.mxu0 %v1872
    %1910 = vmatprep.subr.mxu0 %v1877
    %1911 = vmatpush1.msra.mxu0 %v1876
    %1912 = vmatprep.subr.mxu0 0.0
    %1913 = vmatpush1.msra.mxu0 0.0
    %1914 = vmatprep.subr.mxu0 0.0
    %1915 = vmatpush1.msra.mxu0 0.0
    %1916 = vmatprep.subr.mxu0 0.0
    %1917 = vmatpush1.msra.mxu0 0.0
    %1918 = vmatprep.subr.mxu0 0.0
    %1919 = vmatpush1.msra.mxu0 0.0
    %1920 = vmatprep.subr.mxu0 0.0
    %1921 = vmatpush1.msra.mxu0 0.0
    %1922 = vmatprep.subr.mxu0 0.0
    %1923 = vmatpush1.msra.mxu0 0.0
    %1924 = vmatprep.subr.mxu0 0.0
    %1925 = vmatpush1.msra.mxu0 0.0
    %1926 = vmatprep.subr.mxu0 0.0
    %1927 = vmatpush1.msra.mxu0 0.0
    %1928 = vmatprep.subr.mxu0 0.0
    %1929 = vmatpush1.msra.mxu0 0.0
    %1930 = vmatprep.subr.mxu0 0.0
    %1931 = vmatpush1.msra.mxu0 0.0
    %1932 = vmatprep.subr.mxu0 0.0
    %1933 = vmatpush1.msra.mxu0 0.0
    %1934 = vmatprep.subr.mxu0 0.0
    %1935 = vmatpush1.msra.mxu0 0.0
    %1936 = vmatprep.subr.mxu0 0.0
    %1937 = vmatpush1.msra.mxu0 0.0
    %1938 = vmatprep.subr.mxu0 0.0
    %1939 = vmatpush1.msra.mxu0 0.0
    %1940 = vmatprep.subr.mxu0 0.0
    %1941 = vmatpush1.msra.mxu0 0.0
    %1942 = vmatprep.subr.mxu0 0.0
    %1943 = vmatpush1.msra.mxu0 0.0
    %1944 = vmatprep.mubr.f32.mxu0 0.0
    %1945 = vmatmul.mubr.f32.gmra.mrb[0].mxu0 %v1815
    %v1946 = vpop.f32.mrb[0].mxu0
    %v1947 = vadd.f32 0.0, %v1946
    %v1948 = vpop.f32.mrb[0].mxu0
    %v1949 = vadd.f32 0.0, %v1948
    %1950 = vdwg.mxu0
    %1951 = vmatprep.subr.mxu0 %v1819
    %1952 = vmatpush1.msra.mxu0 %v1818
    %1953 = vmatprep.subr.mxu0 %v1823
    %1954 = vmatpush1.msra.mxu0 %v1822
    %1955 = vmatprep.subr.mxu0 %v1827
    %1956 = vmatpush1.msra.mxu0 %v1826
    %1957 = vmatprep.subr.mxu0 %v1831
    %1958 = vmatpush1.msra.mxu0 %v1830
    %1959 = vmatprep.subr.mxu0 %v1835
    %1960 = vmatpush1.msra.mxu0 %v1834
    %1961 = vmatprep.subr.mxu0 %v1839
    %1962 = vmatpush1.msra.mxu0 %v1838
    %1963 = vmatprep.subr.mxu0 %v1843
    %1964 = vmatpush1.msra.mxu0 %v1842
    %1965 = vmatprep.subr.mxu0 %v1847
    %1966 = vmatpush1.msra.mxu0 %v1846
    %1967 = vmatprep.subr.mxu0 %v1851
    %1968 = vmatpush1.msra.mxu0 %v1850
    %1969 = vmatprep.subr.mxu0 %v1855
    %1970 = vmatpush1.msra.mxu0 %v1854
    %1971 = vmatprep.subr.mxu0 %v1859
    %1972 = vmatpush1.msra.mxu0 %v1858
    %1973 = vmatprep.subr.mxu0 %v1863
    %1974 = vmatpush1.msra.mxu0 %v1862
    %1975 = vmatprep.subr.mxu0 %v1867
    %1976 = vmatpush1.msra.mxu0 %v1866
    %1977 = vmatprep.subr.mxu0 %v1871
    %1978 = vmatpush1.msra.mxu0 %v1870
    %1979 = vmatprep.subr.mxu0 %v1875
    %1980 = vmatpush1.msra.mxu0 %v1874
    %1981 = vmatprep.subr.mxu0 %v1879
    %1982 = vmatpush1.msra.mxu0 %v1878
    %1983 = vmatprep.subr.mxu0 0.0
    %1984 = vmatpush1.msra.mxu0 0.0
    %1985 = vmatprep.subr.mxu0 0.0
    %1986 = vmatpush1.msra.mxu0 0.0
    %1987 = vmatprep.subr.mxu0 0.0
    %1988 = vmatpush1.msra.mxu0 0.0
    %1989 = vmatprep.subr.mxu0 0.0
    %1990 = vmatpush1.msra.mxu0 0.0
    %1991 = vmatprep.subr.mxu0 0.0
    %1992 = vmatpush1.msra.mxu0 0.0
    %1993 = vmatprep.subr.mxu0 0.0
    %1994 = vmatpush1.msra.mxu0 0.0
    %1995 = vmatprep.subr.mxu0 0.0
    %1996 = vmatpush1.msra.mxu0 0.0
    %1997 = vmatprep.subr.mxu0 0.0
    %1998 = vmatpush1.msra.mxu0 0.0
    %1999 = vmatprep.subr.mxu0 0.0
    %2000 = vmatpush1.msra.mxu0 0.0
    %2001 = vmatprep.subr.mxu0 0.0
    %2002 = vmatpush1.msra.mxu0 0.0
    %2003 = vmatprep.subr.mxu0 0.0
    %2004 = vmatpush1.msra.mxu0 0.0
    %2005 = vmatprep.subr.mxu0 0.0
    %2006 = vmatpush1.msra.mxu0 0.0
    %2007 = vmatprep.subr.mxu0 0.0
    %2008 = vmatpush1.msra.mxu0 0.0
    %2009 = vmatprep.subr.mxu0 0.0
    %2010 = vmatpush1.msra.mxu0 0.0
    %2011 = vmatprep.subr.mxu0 0.0
    %2012 = vmatpush1.msra.mxu0 0.0
    %2013 = vmatprep.subr.mxu0 0.0
    %2014 = vmatpush1.msra.mxu0 0.0
    %2015 = vmatprep.mubr.f32.mxu0 0.0
    %2016 = vmatmul.mubr.f32.gmra.mrb[0].mxu0 %v1815
    %v2017 = vpop.f32.mrb[0].mxu0
    %v2018 = vadd.f32 0.0, %v2017
    %v2019 = vpop.f32.mrb[0].mxu0
    %v2020 = vadd.f32 0.0, %v2019
    %2021 = vdwg.mxu0
    %v2022 = vadd.f32 %v1811, %v1947
    %v2023 = vadd.f32 %v1812, %v1949
    %v2024 = vadd.f32 %v1813, %v2018
    %v2025 = vadd.f32 %v1814, %v2020
    %v2026 = vxor.u32 %v2022, 2147483648
    %v2027 = vmul.f32 %v2026, 1.442695
    %v2028 = vpow.pop %v2027
    %v2029 = vadd.f32 %v2028, 1.0
    %v2030 = vrcp.pop %v2029
    %v2031 = vmul.f32 1.0, %v2030
    %v2032 = vxor.u32 %v2023, 2147483648
    %v2033 = vmul.f32 %v2032, 1.442695
    %v2034 = vpow.pop %v2033
    %v2035 = vadd.f32 %v2034, 1.0
    %v2036 = vrcp.pop %v2035
    %v2037 = vmul.f32 1.0, %v2036
    %v2038 = vtanh.pop %v2024
    %v2039 = vxor.u32 %v2025, 2147483648
    %v2040 = vmul.f32 %v2039, 1.442695
    %v2041 = vpow.pop %v2040
    %v2042 = vadd.f32 %v2041, 1.0
    %v2043 = vrcp.pop %v2042
    %v2044 = vmul.f32 1.0, %v2043
    %v2045 = vld [vmem:[#allocation11] sm:$0xff]
    %v2046 = vmul.f32 %v2037, %v2045
    %v2047 = vmul.f32 %v2031, %v2038
    %v2048 = vadd.f32 %v2046, %v2047
    %v2049 = vtanh.pop %v2048
    %v2050 = vmul.f32 %v2044, %v2049
    %2051 = vst [vmem:[#allocation10] sm:$0xff] %v2050
    %2052 = vst [vmem:[#allocation11] sm:$0xff] %v2048
    %s2053 = smul.u32 6, 4
    %s2054 = smul.addr %s2053, 8
    %s2055 = scalar_lea.vmem [#allocation8], %s2054
    %v2056 = vld [vmem:[%s2055] sm:$0xff]
    %v2057 = vld [vmem:[%s2055 + $0x8] sm:$0xff]
    %v2058 = vld [vmem:[%s2055 + $0x10] sm:$0xff]
    %v2059 = vld [vmem:[%s2055 + $0x18] sm:$0xff]
    %v2060 = vld [vmem:[#allocation10] sm:$0xff]
    %v2061 = vld [vmem:[#allocation17] sm:$0xff]
    %v2062 = vld [vmem:[#allocation17 + $0x8] sm:$0xff]
    %v2063 = vld [vmem:[#allocation17 + $0x10] sm:$0xff]
    %v2064 = vld [vmem:[#allocation17 + $0x18] sm:$0xff]
    %v2065 = vld [vmem:[#allocation17 + $0x20] sm:$0xff]
    %v2066 = vld [vmem:[#allocation17 + $0x28] sm:$0xff]
    %v2067 = vld [vmem:[#allocation17 + $0x30] sm:$0xff]
    %v2068 = vld [vmem:[#allocation17 + $0x38] sm:$0xff]
    %v2069 = vld [vmem:[#allocation17 + $0x40] sm:$0xff]
    %v2070 = vld [vmem:[#allocation17 + $0x48] sm:$0xff]
    %v2071 = vld [vmem:[#allocation17 + $0x50] sm:$0xff]
    %v2072 = vld [vmem:[#allocation17 + $0x58] sm:$0xff]
    %v2073 = vld [vmem:[#allocation17 + $0x60] sm:$0xff]
    %v2074 = vld [vmem:[#allocation17 + $0x68] sm:$0xff]
    %v2075 = vld [vmem:[#allocation17 + $0x70] sm:$0xff]
    %v2076 = vld [vmem:[#allocation17 + $0x78] sm:$0xff]
    %v2077 = vld [vmem:[#allocation17 + $0x80] sm:$0xff]
    %v2078 = vld [vmem:[#allocation17 + $0x88] sm:$0xff]
    %v2079 = vld [vmem:[#allocation17 + $0x90] sm:$0xff]
    %v2080 = vld [vmem:[#allocation17 + $0x98] sm:$0xff]
    %v2081 = vld [vmem:[#allocation17 + $0xa0] sm:$0xff]
    %v2082 = vld [vmem:[#allocation17 + $0xa8] sm:$0xff]
    %v2083 = vld [vmem:[#allocation17 + $0xb0] sm:$0xff]
    %v2084 = vld [vmem:[#allocation17 + $0xb8] sm:$0xff]
    %v2085 = vld [vmem:[#allocation17 + $0xc0] sm:$0xff]
    %v2086 = vld [vmem:[#allocation17 + $0xc8] sm:$0xff]
    %v2087 = vld [vmem:[#allocation17 + $0xd0] sm:$0xff]
    %v2088 = vld [vmem:[#allocation17 + $0xd8] sm:$0xff]
    %v2089 = vld [vmem:[#allocation17 + $0xe0] sm:$0xff]
    %v2090 = vld [vmem:[#allocation17 + $0xe8] sm:$0xff]
    %v2091 = vld [vmem:[#allocation17 + $0xf0] sm:$0xff]
    %v2092 = vld [vmem:[#allocation17 + $0xf8] sm:$0xff]
    %v2093 = vld [vmem:[#allocation17 + $0x100] sm:$0xff]
    %v2094 = vld [vmem:[#allocation17 + $0x108] sm:$0xff]
    %v2095 = vld [vmem:[#allocation17 + $0x110] sm:$0xff]
    %v2096 = vld [vmem:[#allocation17 + $0x118] sm:$0xff]
    %v2097 = vld [vmem:[#allocation17 + $0x120] sm:$0xff]
    %v2098 = vld [vmem:[#allocation17 + $0x128] sm:$0xff]
    %v2099 = vld [vmem:[#allocation17 + $0x130] sm:$0xff]
    %v2100 = vld [vmem:[#allocation17 + $0x138] sm:$0xff]
    %v2101 = vld [vmem:[#allocation17 + $0x140] sm:$0xff]
    %v2102 = vld [vmem:[#allocation17 + $0x148] sm:$0xff]
    %v2103 = vld [vmem:[#allocation17 + $0x150] sm:$0xff]
    %v2104 = vld [vmem:[#allocation17 + $0x158] sm:$0xff]
    %v2105 = vld [vmem:[#allocation17 + $0x160] sm:$0xff]
    %v2106 = vld [vmem:[#allocation17 + $0x168] sm:$0xff]
    %v2107 = vld [vmem:[#allocation17 + $0x170] sm:$0xff]
    %v2108 = vld [vmem:[#allocation17 + $0x178] sm:$0xff]
    %v2109 = vld [vmem:[#allocation17 + $0x180] sm:$0xff]
    %v2110 = vld [vmem:[#allocation17 + $0x188] sm:$0xff]
    %v2111 = vld [vmem:[#allocation17 + $0x190] sm:$0xff]
    %v2112 = vld [vmem:[#allocation17 + $0x198] sm:$0xff]
    %v2113 = vld [vmem:[#allocation17 + $0x1a0] sm:$0xff]
    %v2114 = vld [vmem:[#allocation17 + $0x1a8] sm:$0xff]
    %v2115 = vld [vmem:[#allocation17 + $0x1b0] sm:$0xff]
    %v2116 = vld [vmem:[#allocation17 + $0x1b8] sm:$0xff]
    %v2117 = vld [vmem:[#allocation17 + $0x1c0] sm:$0xff]
    %v2118 = vld [vmem:[#allocation17 + $0x1c8] sm:$0xff]
    %v2119 = vld [vmem:[#allocation17 + $0x1d0] sm:$0xff]
    %v2120 = vld [vmem:[#allocation17 + $0x1d8] sm:$0xff]
    %v2121 = vld [vmem:[#allocation17 + $0x1e0] sm:$0xff]
    %v2122 = vld [vmem:[#allocation17 + $0x1e8] sm:$0xff]
    %v2123 = vld [vmem:[#allocation17 + $0x1f0] sm:$0xff]
    %v2124 = vld [vmem:[#allocation17 + $0x1f8] sm:$0xff]
    %2125 = vmatprep.subr.mxu0 %v2062
    %2126 = vmatpush1.msra.mxu0 %v2061
    %2127 = vmatprep.subr.mxu0 %v2066
    %2128 = vmatpush1.msra.mxu0 %v2065
    %2129 = vmatprep.subr.mxu0 %v2070
    %2130 = vmatpush1.msra.mxu0 %v2069
    %2131 = vmatprep.subr.mxu0 %v2074
    %2132 = vmatpush1.msra.mxu0 %v2073
    %2133 = vmatprep.subr.mxu0 %v2078
    %2134 = vmatpush1.msra.mxu0 %v2077
    %2135 = vmatprep.subr.mxu0 %v2082
    %2136 = vmatpush1.msra.mxu0 %v2081
    %2137 = vmatprep.subr.mxu0 %v2086
    %2138 = vmatpush1.msra.mxu0 %v2085
    %2139 = vmatprep.subr.mxu0 %v2090
    %2140 = vmatpush1.msra.mxu0 %v2089
    %2141 = vmatprep.subr.mxu0 %v2094
    %2142 = vmatpush1.msra.mxu0 %v2093
    %2143 = vmatprep.subr.mxu0 %v2098
    %2144 = vmatpush1.msra.mxu0 %v2097
    %2145 = vmatprep.subr.mxu0 %v2102
    %2146 = vmatpush1.msra.mxu0 %v2101
    %2147 = vmatprep.subr.mxu0 %v2106
    %2148 = vmatpush1.msra.mxu0 %v2105
    %2149 = vmatprep.subr.mxu0 %v2110
    %2150 = vmatpush1.msra.mxu0 %v2109
    %2151 = vmatprep.subr.mxu0 %v2114
    %2152 = vmatpush1.msra.mxu0 %v2113
    %2153 = vmatprep.subr.mxu0 %v2118
    %2154 = vmatpush1.msra.mxu0 %v2117
    %2155 = vmatprep.subr.mxu0 %v2122
    %2156 = vmatpush1.msra.mxu0 %v2121
    %2157 = vmatprep.subr.mxu0 0.0
    %2158 = vmatpush1.msra.mxu0 0.0
    %2159 = vmatprep.subr.mxu0 0.0
    %2160 = vmatpush1.msra.mxu0 0.0
    %2161 = vmatprep.subr.mxu0 0.0
    %2162 = vmatpush1.msra.mxu0 0.0
    %2163 = vmatprep.subr.mxu0 0.0
    %2164 = vmatpush1.msra.mxu0 0.0
    %2165 = vmatprep.subr.mxu0 0.0
    %2166 = vmatpush1.msra.mxu0 0.0
    %2167 = vmatprep.subr.mxu0 0.0
    %2168 = vmatpush1.msra.mxu0 0.0
    %2169 = vmatprep.subr.mxu0 0.0
    %2170 = vmatpush1.msra.mxu0 0.0
    %2171 = vmatprep.subr.mxu0 0.0
    %2172 = vmatpush1.msra.mxu0 0.0
    %2173 = vmatprep.subr.mxu0 0.0
    %2174 = vmatpush1.msra.mxu0 0.0
    %2175 = vmatprep.subr.mxu0 0.0
    %2176 = vmatpush1.msra.mxu0 0.0
    %2177 = vmatprep.subr.mxu0 0.0
    %2178 = vmatpush1.msra.mxu0 0.0
    %2179 = vmatprep.subr.mxu0 0.0
    %2180 = vmatpush1.msra.mxu0 0.0
    %2181 = vmatprep.subr.mxu0 0.0
    %2182 = vmatpush1.msra.mxu0 0.0
    %2183 = vmatprep.subr.mxu0 0.0
    %2184 = vmatpush1.msra.mxu0 0.0
    %2185 = vmatprep.subr.mxu0 0.0
    %2186 = vmatpush1.msra.mxu0 0.0
    %2187 = vmatprep.subr.mxu0 0.0
    %2188 = vmatpush1.msra.mxu0 0.0
    %2189 = vmatprep.mubr.f32.mxu0 0.0
    %2190 = vmatmul.mubr.f32.gmra.mrb[0].mxu0 %v2060
    %v2191 = vpop.f32.mrb[0].mxu0
    %v2192 = vadd.f32 0.0, %v2191
    %v2193 = vpop.f32.mrb[0].mxu0
    %v2194 = vadd.f32 0.0, %v2193
    %2195 = vdwg.mxu0
    %2196 = vmatprep.subr.mxu0 %v2064
    %2197 = vmatpush1.msra.mxu0 %v2063
    %2198 = vmatprep.subr.mxu0 %v2068
    %2199 = vmatpush1.msra.mxu0 %v2067
    %2200 = vmatprep.subr.mxu0 %v2072
    %2201 = vmatpush1.msra.mxu0 %v2071
    %2202 = vmatprep.subr.mxu0 %v2076
    %2203 = vmatpush1.msra.mxu0 %v2075
    %2204 = vmatprep.subr.mxu0 %v2080
    %2205 = vmatpush1.msra.mxu0 %v2079
    %2206 = vmatprep.subr.mxu0 %v2084
    %2207 = vmatpush1.msra.mxu0 %v2083
    %2208 = vmatprep.subr.mxu0 %v2088
    %2209 = vmatpush1.msra.mxu0 %v2087
    %2210 = vmatprep.subr.mxu0 %v2092
    %2211 = vmatpush1.msra.mxu0 %v2091
    %2212 = vmatprep.subr.mxu0 %v2096
    %2213 = vmatpush1.msra.mxu0 %v2095
    %2214 = vmatprep.subr.mxu0 %v2100
    %2215 = vmatpush1.msra.mxu0 %v2099
    %2216 = vmatprep.subr.mxu0 %v2104
    %2217 = vmatpush1.msra.mxu0 %v2103
    %2218 = vmatprep.subr.mxu0 %v2108
    %2219 = vmatpush1.msra.mxu0 %v2107
    %2220 = vmatprep.subr.mxu0 %v2112
    %2221 = vmatpush1.msra.mxu0 %v2111
    %2222 = vmatprep.subr.mxu0 %v2116
    %2223 = vmatpush1.msra.mxu0 %v2115
    %2224 = vmatprep.subr.mxu0 %v2120
    %2225 = vmatpush1.msra.mxu0 %v2119
    %2226 = vmatprep.subr.mxu0 %v2124
    %2227 = vmatpush1.msra.mxu0 %v2123
    %2228 = vmatprep.subr.mxu0 0.0
    %2229 = vmatpush1.msra.mxu0 0.0
    %2230 = vmatprep.subr.mxu0 0.0
    %2231 = vmatpush1.msra.mxu0 0.0
    %2232 = vmatprep.subr.mxu0 0.0
    %2233 = vmatpush1.msra.mxu0 0.0
    %2234 = vmatprep.subr.mxu0 0.0
    %2235 = vmatpush1.msra.mxu0 0.0
    %2236 = vmatprep.subr.mxu0 0.0
    %2237 = vmatpush1.msra.mxu0 0.0
    %2238 = vmatprep.subr.mxu0 0.0
    %2239 = vmatpush1.msra.mxu0 0.0
    %2240 = vmatprep.subr.mxu0 0.0
    %2241 = vmatpush1.msra.mxu0 0.0
    %2242 = vmatprep.subr.mxu0 0.0
    %2243 = vmatpush1.msra.mxu0 0.0
    %2244 = vmatprep.subr.mxu0 0.0
    %2245 = vmatpush1.msra.mxu0 0.0
    %2246 = vmatprep.subr.mxu0 0.0
    %2247 = vmatpush1.msra.mxu0 0.0
    %2248 = vmatprep.subr.mxu0 0.0
    %2249 = vmatpush1.msra.mxu0 0.0
    %2250 = vmatprep.subr.mxu0 0.0
    %2251 = vmatpush1.msra.mxu0 0.0
    %2252 = vmatprep.subr.mxu0 0.0
    %2253 = vmatpush1.msra.mxu0 0.0
    %2254 = vmatprep.subr.mxu0 0.0
    %2255 = vmatpush1.msra.mxu0 0.0
    %2256 = vmatprep.subr.mxu0 0.0
    %2257 = vmatpush1.msra.mxu0 0.0
    %2258 = vmatprep.subr.mxu0 0.0
    %2259 = vmatpush1.msra.mxu0 0.0
    %2260 = vmatprep.mubr.f32.mxu0 0.0
    %2261 = vmatmul.mubr.f32.gmra.mrb[0].mxu0 %v2060
    %v2262 = vpop.f32.mrb[0].mxu0
    %v2263 = vadd.f32 0.0, %v2262
    %v2264 = vpop.f32.mrb[0].mxu0
    %v2265 = vadd.f32 0.0, %v2264
    %2266 = vdwg.mxu0
    %v2267 = vadd.f32 %v2056, %v2192
    %v2268 = vadd.f32 %v2057, %v2194
    %v2269 = vadd.f32 %v2058, %v2263
    %v2270 = vadd.f32 %v2059, %v2265
    %v2271 = vxor.u32 %v2267, 2147483648
    %v2272 = vmul.f32 %v2271, 1.442695
    %v2273 = vpow.pop %v2272
    %v2274 = vadd.f32 %v2273, 1.0
    %v2275 = vrcp.pop %v2274
    %v2276 = vmul.f32 1.0, %v2275
    %v2277 = vxor.u32 %v2268, 2147483648
    %v2278 = vmul.f32 %v2277, 1.442695
    %v2279 = vpow.pop %v2278
    %v2280 = vadd.f32 %v2279, 1.0
    %v2281 = vrcp.pop %v2280
    %v2282 = vmul.f32 1.0, %v2281
    %v2283 = vtanh.pop %v2269
    %v2284 = vxor.u32 %v2270, 2147483648
    %v2285 = vmul.f32 %v2284, 1.442695
    %v2286 = vpow.pop %v2285
    %v2287 = vadd.f32 %v2286, 1.0
    %v2288 = vrcp.pop %v2287
    %v2289 = vmul.f32 1.0, %v2288
    %v2290 = vld [vmem:[#allocation11] sm:$0xff]
    %v2291 = vmul.f32 %v2282, %v2290
    %v2292 = vmul.f32 %v2276, %v2283
    %v2293 = vadd.f32 %v2291, %v2292
    %v2294 = vtanh.pop %v2293
    %v2295 = vmul.f32 %v2289, %v2294
    %2296 = vst [vmem:[#allocation10] sm:$0xff] %v2295
    %2297 = vst [vmem:[#allocation11] sm:$0xff] %v2293
    %s2298 = smul.u32 7, 4
    %s2299 = smul.addr %s2298, 8
    %s2300 = scalar_lea.vmem [#allocation8], %s2299
    %v2301 = vld [vmem:[%s2300] sm:$0xff]
    %v2302 = vld [vmem:[%s2300 + $0x8] sm:$0xff]
    %v2303 = vld [vmem:[%s2300 + $0x10] sm:$0xff]
    %v2304 = vld [vmem:[%s2300 + $0x18] sm:$0xff]
    %v2305 = vld [vmem:[#allocation10] sm:$0xff]
    %v2306 = vld [vmem:[#allocation17] sm:$0xff]
    %v2307 = vld [vmem:[#allocation17 + $0x8] sm:$0xff]
    %v2308 = vld [vmem:[#allocation17 + $0x10] sm:$0xff]
    %v2309 = vld [vmem:[#allocation17 + $0x18] sm:$0xff]
    %v2310 = vld [vmem:[#allocation17 + $0x20] sm:$0xff]
    %v2311 = vld [vmem:[#allocation17 + $0x28] sm:$0xff]
    %v2312 = vld [vmem:[#allocation17 + $0x30] sm:$0xff]
    %v2313 = vld [vmem:[#allocation17 + $0x38] sm:$0xff]
    %v2314 = vld [vmem:[#allocation17 + $0x40] sm:$0xff]
    %v2315 = vld [vmem:[#allocation17 + $0x48] sm:$0xff]
    %v2316 = vld [vmem:[#allocation17 + $0x50] sm:$0xff]
    %v2317 = vld [vmem:[#allocation17 + $0x58] sm:$0xff]
    %v2318 = vld [vmem:[#allocation17 + $0x60] sm:$0xff]
    %v2319 = vld [vmem:[#allocation17 + $0x68] sm:$0xff]
    %v2320 = vld [vmem:[#allocation17 + $0x70] sm:$0xff]
    %v2321 = vld [vmem:[#allocation17 + $0x78] sm:$0xff]
    %v2322 = vld [vmem:[#allocation17 + $0x80] sm:$0xff]
    %v2323 = vld [vmem:[#allocation17 + $0x88] sm:$0xff]
    %v2324 = vld [vmem:[#allocation17 + $0x90] sm:$0xff]
    %v2325 = vld [vmem:[#allocation17 + $0x98] sm:$0xff]
    %v2326 = vld [vmem:[#allocation17 + $0xa0] sm:$0xff]
    %v2327 = vld [vmem:[#allocation17 + $0xa8] sm:$0xff]
    %v2328 = vld [vmem:[#allocation17 + $0xb0] sm:$0xff]
    %v2329 = vld [vmem:[#allocation17 + $0xb8] sm:$0xff]
    %v2330 = vld [vmem:[#allocation17 + $0xc0] sm:$0xff]
    %v2331 = vld [vmem:[#allocation17 + $0xc8] sm:$0xff]
    %v2332 = vld [vmem:[#allocation17 + $0xd0] sm:$0xff]
    %v2333 = vld [vmem:[#allocation17 + $0xd8] sm:$0xff]
    %v2334 = vld [vmem:[#allocation17 + $0xe0] sm:$0xff]
    %v2335 = vld [vmem:[#allocation17 + $0xe8] sm:$0xff]
    %v2336 = vld [vmem:[#allocation17 + $0xf0] sm:$0xff]
    %v2337 = vld [vmem:[#allocation17 + $0xf8] sm:$0xff]
    %v2338 = vld [vmem:[#allocation17 + $0x100] sm:$0xff]
    %v2339 = vld [vmem:[#allocation17 + $0x108] sm:$0xff]
    %v2340 = vld [vmem:[#allocation17 + $0x110] sm:$0xff]
    %v2341 = vld [vmem:[#allocation17 + $0x118] sm:$0xff]
    %v2342 = vld [vmem:[#allocation17 + $0x120] sm:$0xff]
    %v2343 = vld [vmem:[#allocation17 + $0x128] sm:$0xff]
    %v2344 = vld [vmem:[#allocation17 + $0x130] sm:$0xff]
    %v2345 = vld [vmem:[#allocation17 + $0x138] sm:$0xff]
    %v2346 = vld [vmem:[#allocation17 + $0x140] sm:$0xff]
    %v2347 = vld [vmem:[#allocation17 + $0x148] sm:$0xff]
    %v2348 = vld [vmem:[#allocation17 + $0x150] sm:$0xff]
    %v2349 = vld [vmem:[#allocation17 + $0x158] sm:$0xff]
    %v2350 = vld [vmem:[#allocation17 + $0x160] sm:$0xff]
    %v2351 = vld [vmem:[#allocation17 + $0x168] sm:$0xff]
    %v2352 = vld [vmem:[#allocation17 + $0x170] sm:$0xff]
    %v2353 = vld [vmem:[#allocation17 + $0x178] sm:$0xff]
    %v2354 = vld [vmem:[#allocation17 + $0x180] sm:$0xff]
    %v2355 = vld [vmem:[#allocation17 + $0x188] sm:$0xff]
    %v2356 = vld [vmem:[#allocation17 + $0x190] sm:$0xff]
    %v2357 = vld [vmem:[#allocation17 + $0x198] sm:$0xff]
    %v2358 = vld [vmem:[#allocation17 + $0x1a0] sm:$0xff]
    %v2359 = vld [vmem:[#allocation17 + $0x1a8] sm:$0xff]
    %v2360 = vld [vmem:[#allocation17 + $0x1b0] sm:$0xff]
    %v2361 = vld [vmem:[#allocation17 + $0x1b8] sm:$0xff]
    %v2362 = vld [vmem:[#allocation17 + $0x1c0] sm:$0xff]
    %v2363 = vld [vmem:[#allocation17 + $0x1c8] sm:$0xff]
    %v2364 = vld [vmem:[#allocation17 + $0x1d0] sm:$0xff]
    %v2365 = vld [vmem:[#allocation17 + $0x1d8] sm:$0xff]
    %v2366 = vld [vmem:[#allocation17 + $0x1e0] sm:$0xff]
    %v2367 = vld [vmem:[#allocation17 + $0x1e8] sm:$0xff]
    %v2368 = vld [vmem:[#allocation17 + $0x1f0] sm:$0xff]
    %v2369 = vld [vmem:[#allocation17 + $0x1f8] sm:$0xff]
    %2370 = vmatprep.subr.mxu0 %v2307
    %2371 = vmatpush1.msra.mxu0 %v2306
    %2372 = vmatprep.subr.mxu0 %v2311
    %2373 = vmatpush1.msra.mxu0 %v2310
    %2374 = vmatprep.subr.mxu0 %v2315
    %2375 = vmatpush1.msra.mxu0 %v2314
    %2376 = vmatprep.subr.mxu0 %v2319
    %2377 = vmatpush1.msra.mxu0 %v2318
    %2378 = vmatprep.subr.mxu0 %v2323
    %2379 = vmatpush1.msra.mxu0 %v2322
    %2380 = vmatprep.subr.mxu0 %v2327
    %2381 = vmatpush1.msra.mxu0 %v2326
    %2382 = vmatprep.subr.mxu0 %v2331
    %2383 = vmatpush1.msra.mxu0 %v2330
    %2384 = vmatprep.subr.mxu0 %v2335
    %2385 = vmatpush1.msra.mxu0 %v2334
    %2386 = vmatprep.subr.mxu0 %v2339
    %2387 = vmatpush1.msra.mxu0 %v2338
    %2388 = vmatprep.subr.mxu0 %v2343
    %2389 = vmatpush1.msra.mxu0 %v2342
    %2390 = vmatprep.subr.mxu0 %v2347
    %2391 = vmatpush1.msra.mxu0 %v2346
    %2392 = vmatprep.subr.mxu0 %v2351
    %2393 = vmatpush1.msra.mxu0 %v2350
    %2394 = vmatprep.subr.mxu0 %v2355
    %2395 = vmatpush1.msra.mxu0 %v2354
    %2396 = vmatprep.subr.mxu0 %v2359
    %2397 = vmatpush1.msra.mxu0 %v2358
    %2398 = vmatprep.subr.mxu0 %v2363
    %2399 = vmatpush1.msra.mxu0 %v2362
    %2400 = vmatprep.subr.mxu0 %v2367
    %2401 = vmatpush1.msra.mxu0 %v2366
    %2402 = vmatprep.subr.mxu0 0.0
    %2403 = vmatpush1.msra.mxu0 0.0
    %2404 = vmatprep.subr.mxu0 0.0
    %2405 = vmatpush1.msra.mxu0 0.0
    %2406 = vmatprep.subr.mxu0 0.0
    %2407 = vmatpush1.msra.mxu0 0.0
    %2408 = vmatprep.subr.mxu0 0.0
    %2409 = vmatpush1.msra.mxu0 0.0
    %2410 = vmatprep.subr.mxu0 0.0
    %2411 = vmatpush1.msra.mxu0 0.0
    %2412 = vmatprep.subr.mxu0 0.0
    %2413 = vmatpush1.msra.mxu0 0.0
    %2414 = vmatprep.subr.mxu0 0.0
    %2415 = vmatpush1.msra.mxu0 0.0
    %2416 = vmatprep.subr.mxu0 0.0
    %2417 = vmatpush1.msra.mxu0 0.0
    %2418 = vmatprep.subr.mxu0 0.0
    %2419 = vmatpush1.msra.mxu0 0.0
    %2420 = vmatprep.subr.mxu0 0.0
    %2421 = vmatpush1.msra.mxu0 0.0
    %2422 = vmatprep.subr.mxu0 0.0
    %2423 = vmatpush1.msra.mxu0 0.0
    %2424 = vmatprep.subr.mxu0 0.0
    %2425 = vmatpush1.msra.mxu0 0.0
    %2426 = vmatprep.subr.mxu0 0.0
    %2427 = vmatpush1.msra.mxu0 0.0
    %2428 = vmatprep.subr.mxu0 0.0
    %2429 = vmatpush1.msra.mxu0 0.0
    %2430 = vmatprep.subr.mxu0 0.0
    %2431 = vmatpush1.msra.mxu0 0.0
    %2432 = vmatprep.subr.mxu0 0.0
    %2433 = vmatpush1.msra.mxu0 0.0
    %2434 = vmatprep.mubr.f32.mxu0 0.0
    %2435 = vmatmul.mubr.f32.gmra.mrb[0].mxu0 %v2305
    %v2436 = vpop.f32.mrb[0].mxu0
    %v2437 = vadd.f32 0.0, %v2436
    %v2438 = vpop.f32.mrb[0].mxu0
    %v2439 = vadd.f32 0.0, %v2438
    %2440 = vdwg.mxu0
    %2441 = vmatprep.subr.mxu0 %v2309
    %2442 = vmatpush1.msra.mxu0 %v2308
    %2443 = vmatprep.subr.mxu0 %v2313
    %2444 = vmatpush1.msra.mxu0 %v2312
    %2445 = vmatprep.subr.mxu0 %v2317
    %2446 = vmatpush1.msra.mxu0 %v2316
    %2447 = vmatprep.subr.mxu0 %v2321
    %2448 = vmatpush1.msra.mxu0 %v2320
    %2449 = vmatprep.subr.mxu0 %v2325
    %2450 = vmatpush1.msra.mxu0 %v2324
    %2451 = vmatprep.subr.mxu0 %v2329
    %2452 = vmatpush1.msra.mxu0 %v2328
    %2453 = vmatprep.subr.mxu0 %v2333
    %2454 = vmatpush1.msra.mxu0 %v2332
    %2455 = vmatprep.subr.mxu0 %v2337
    %2456 = vmatpush1.msra.mxu0 %v2336
    %2457 = vmatprep.subr.mxu0 %v2341
    %2458 = vmatpush1.msra.mxu0 %v2340
    %2459 = vmatprep.subr.mxu0 %v2345
    %2460 = vmatpush1.msra.mxu0 %v2344
    %2461 = vmatprep.subr.mxu0 %v2349
    %2462 = vmatpush1.msra.mxu0 %v2348
    %2463 = vmatprep.subr.mxu0 %v2353
    %2464 = vmatpush1.msra.mxu0 %v2352
    %2465 = vmatprep.subr.mxu0 %v2357
    %2466 = vmatpush1.msra.mxu0 %v2356
    %2467 = vmatprep.subr.mxu0 %v2361
    %2468 = vmatpush1.msra.mxu0 %v2360
    %2469 = vmatprep.subr.mxu0 %v2365
    %2470 = vmatpush1.msra.mxu0 %v2364
    %2471 = vmatprep.subr.mxu0 %v2369
    %2472 = vmatpush1.msra.mxu0 %v2368
    %2473 = vmatprep.subr.mxu0 0.0
    %2474 = vmatpush1.msra.mxu0 0.0
    %2475 = vmatprep.subr.mxu0 0.0
    %2476 = vmatpush1.msra.mxu0 0.0
    %2477 = vmatprep.subr.mxu0 0.0
    %2478 = vmatpush1.msra.mxu0 0.0
    %2479 = vmatprep.subr.mxu0 0.0
    %2480 = vmatpush1.msra.mxu0 0.0
    %2481 = vmatprep.subr.mxu0 0.0
    %2482 = vmatpush1.msra.mxu0 0.0
    %2483 = vmatprep.subr.mxu0 0.0
    %2484 = vmatpush1.msra.mxu0 0.0
    %2485 = vmatprep.subr.mxu0 0.0
    %2486 = vmatpush1.msra.mxu0 0.0
    %2487 = vmatprep.subr.mxu0 0.0
    %2488 = vmatpush1.msra.mxu0 0.0
    %2489 = vmatprep.subr.mxu0 0.0
    %2490 = vmatpush1.msra.mxu0 0.0
    %2491 = vmatprep.subr.mxu0 0.0
    %2492 = vmatpush1.msra.mxu0 0.0
    %2493 = vmatprep.subr.mxu0 0.0
    %2494 = vmatpush1.msra.mxu0 0.0
    %2495 = vmatprep.subr.mxu0 0.0
    %2496 = vmatpush1.msra.mxu0 0.0
    %2497 = vmatprep.subr.mxu0 0.0
    %2498 = vmatpush1.msra.mxu0 0.0
    %2499 = vmatprep.subr.mxu0 0.0
    %2500 = vmatpush1.msra.mxu0 0.0
    %2501 = vmatprep.subr.mxu0 0.0
    %2502 = vmatpush1.msra.mxu0 0.0
    %2503 = vmatprep.subr.mxu0 0.0
    %2504 = vmatpush1.msra.mxu0 0.0
    %2505 = vmatprep.mubr.f32.mxu0 0.0
    %2506 = vmatmul.mubr.f32.gmra.mrb[0].mxu0 %v2305
    %v2507 = vpop.f32.mrb[0].mxu0
    %v2508 = vadd.f32 0.0, %v2507
    %v2509 = vpop.f32.mrb[0].mxu0
    %v2510 = vadd.f32 0.0, %v2509
    %2511 = vdwg.mxu0
    %v2512 = vadd.f32 %v2301, %v2437
    %v2513 = vadd.f32 %v2302, %v2439
    %v2514 = vadd.f32 %v2303, %v2508
    %v2515 = vadd.f32 %v2304, %v2510
    %v2516 = vxor.u32 %v2512, 2147483648
    %v2517 = vmul.f32 %v2516, 1.442695
    %v2518 = vpow.pop %v2517
    %v2519 = vadd.f32 %v2518, 1.0
    %v2520 = vrcp.pop %v2519
    %v2521 = vmul.f32 1.0, %v2520
    %v2522 = vxor.u32 %v2513, 2147483648
    %v2523 = vmul.f32 %v2522, 1.442695
    %v2524 = vpow.pop %v2523
    %v2525 = vadd.f32 %v2524, 1.0
    %v2526 = vrcp.pop %v2525
    %v2527 = vmul.f32 1.0, %v2526
    %v2528 = vtanh.pop %v2514
    %v2529 = vxor.u32 %v2515, 2147483648
    %v2530 = vmul.f32 %v2529, 1.442695
    %v2531 = vpow.pop %v2530
    %v2532 = vadd.f32 %v2531, 1.0
    %v2533 = vrcp.pop %v2532
    %v2534 = vmul.f32 1.0, %v2533
    %v2535 = vld [vmem:[#allocation11] sm:$0xff]
    %v2536 = vmul.f32 %v2527, %v2535
    %v2537 = vmul.f32 %v2521, %v2528
    %v2538 = vadd.f32 %v2536, %v2537
    %v2539 = vtanh.pop %v2538
    %v2540 = vmul.f32 %v2534, %v2539
    %2541 = vst [vmem:[#allocation10] sm:$0xff] %v2540
    %2542 = vst [vmem:[#allocation11] sm:$0xff] %v2538
    %s2543 = smul.u32 8, 16
    %s2544 = smul.u32 %s2543, 4
    %s2545 = sshll.u32 %s2544, 4
    %2546 = dma.done [#allocation7], %s2545
    %s2547 = sshll.u32 %s2544, 4
    %2548 = dma.done %s76, %s2547
    %s2549 = smul.u32 8, 1
    %s2550 = smul.u32 %s2549, 4
    %s2551 = sshll.u32 %s2550, 4
    %2552 = dma.done %s88, %s2551
    %v2553 = vld [vmem:[#allocation10] sm:$0xff]
    %v2554 = vld [vmem:[#allocation2] sm:$0xff]
    %v2555 = vld [vmem:[#allocation2 + $0x8] sm:$0xff]
    %v2556 = vld [vmem:[#allocation2 + $0x10] sm:$0xff]
    %v2557 = vld [vmem:[#allocation2 + $0x18] sm:$0xff]
    %v2558 = vld [vmem:[#allocation2 + $0x20] sm:$0xff]
    %v2559 = vld [vmem:[#allocation2 + $0x28] sm:$0xff]
    %v2560 = vld [vmem:[#allocation2 + $0x30] sm:$0xff]
    %v2561 = vld [vmem:[#allocation2 + $0x38] sm:$0xff]
    %v2562 = vld [vmem:[#allocation2 + $0x40] sm:$0xff]
    %v2563 = vld [vmem:[#allocation2 + $0x48] sm:$0xff]
    %v2564 = vld [vmem:[#allocation2 + $0x50] sm:$0xff]
    %v2565 = vld [vmem:[#allocation2 + $0x58] sm:$0xff]
    %v2566 = vld [vmem:[#allocation2 + $0x60] sm:$0xff]
    %v2567 = vld [vmem:[#allocation2 + $0x68] sm:$0xff]
    %v2568 = vld [vmem:[#allocation2 + $0x70] sm:$0xff]
    %v2569 = vld [vmem:[#allocation2 + $0x78] sm:$0xff]
    %v2570 = vld [vmem:[#allocation2 + $0x80] sm:$0xff]
    %v2571 = vld [vmem:[#allocation2 + $0x88] sm:$0xff]
    %v2572 = vld [vmem:[#allocation2 + $0x90] sm:$0xff]
    %v2573 = vld [vmem:[#allocation2 + $0x98] sm:$0xff]
    %v2574 = vld [vmem:[#allocation2 + $0xa0] sm:$0xff]
    %v2575 = vld [vmem:[#allocation2 + $0xa8] sm:$0xff]
    %v2576 = vld [vmem:[#allocation2 + $0xb0] sm:$0xff]
    %v2577 = vld [vmem:[#allocation2 + $0xb8] sm:$0xff]
    %v2578 = vld [vmem:[#allocation2 + $0xc0] sm:$0xff]
    %v2579 = vld [vmem:[#allocation2 + $0xc8] sm:$0xff]
    %v2580 = vld [vmem:[#allocation2 + $0xd0] sm:$0xff]
    %v2581 = vld [vmem:[#allocation2 + $0xd8] sm:$0xff]
    %v2582 = vld [vmem:[#allocation2 + $0xe0] sm:$0xff]
    %v2583 = vld [vmem:[#allocation2 + $0xe8] sm:$0xff]
    %v2584 = vld [vmem:[#allocation2 + $0xf0] sm:$0xff]
    %v2585 = vld [vmem:[#allocation2 + $0xf8] sm:$0xff]
    %v2586 = vld [vmem:[#allocation2 + $0x100] sm:$0xff]
    %v2587 = vld [vmem:[#allocation2 + $0x108] sm:$0xff]
    %v2588 = vld [vmem:[#allocation2 + $0x110] sm:$0xff]
    %v2589 = vld [vmem:[#allocation2 + $0x118] sm:$0xff]
    %v2590 = vld [vmem:[#allocation2 + $0x120] sm:$0xff]
    %v2591 = vld [vmem:[#allocation2 + $0x128] sm:$0xff]
    %v2592 = vld [vmem:[#allocation2 + $0x130] sm:$0xff]
    %v2593 = vld [vmem:[#allocation2 + $0x138] sm:$0xff]
    %v2594 = vld [vmem:[#allocation2 + $0x140] sm:$0xff]
    %v2595 = vld [vmem:[#allocation2 + $0x148] sm:$0xff]
    %v2596 = vld [vmem:[#allocation2 + $0x150] sm:$0xff]
    %v2597 = vld [vmem:[#allocation2 + $0x158] sm:$0xff]
    %v2598 = vld [vmem:[#allocation2 + $0x160] sm:$0xff]
    %v2599 = vld [vmem:[#allocation2 + $0x168] sm:$0xff]
    %v2600 = vld [vmem:[#allocation2 + $0x170] sm:$0xff]
    %v2601 = vld [vmem:[#allocation2 + $0x178] sm:$0xff]
    %v2602 = vld [vmem:[#allocation2 + $0x180] sm:$0xff]
    %v2603 = vld [vmem:[#allocation2 + $0x188] sm:$0xff]
    %v2604 = vld [vmem:[#allocation2 + $0x190] sm:$0xff]
    %v2605 = vld [vmem:[#allocation2 + $0x198] sm:$0xff]
    %v2606 = vld [vmem:[#allocation2 + $0x1a0] sm:$0xff]
    %v2607 = vld [vmem:[#allocation2 + $0x1a8] sm:$0xff]
    %v2608 = vld [vmem:[#allocation2 + $0x1b0] sm:$0xff]
    %v2609 = vld [vmem:[#allocation2 + $0x1b8] sm:$0xff]
    %v2610 = vld [vmem:[#allocation2 + $0x1c0] sm:$0xff]
    %v2611 = vld [vmem:[#allocation2 + $0x1c8] sm:$0xff]
    %v2612 = vld [vmem:[#allocation2 + $0x1d0] sm:$0xff]
    %v2613 = vld [vmem:[#allocation2 + $0x1d8] sm:$0xff]
    %v2614 = vld [vmem:[#allocation2 + $0x1e0] sm:$0xff]
    %v2615 = vld [vmem:[#allocation2 + $0x1e8] sm:$0xff]
    %v2616 = vld [vmem:[#allocation2 + $0x1f0] sm:$0xff]
    %v2617 = vld [vmem:[#allocation2 + $0x1f8] sm:$0xff]
    %v2618 = vld [vmem:[#allocation4] sm:$0xff]
    %v2619 = vld [vmem:[#allocation4 + $0x8] sm:$0xff]
    %v2620 = vld [vmem:[#allocation4 + $0x10] sm:$0xff]
    %v2621 = vld [vmem:[#allocation4 + $0x18] sm:$0xff]
    %2622 = vmatprep.subr.mxu0 %v2555
    %2623 = vmatpush1.msra.mxu0 %v2554
    %2624 = vmatprep.subr.mxu0 %v2559
    %2625 = vmatpush1.msra.mxu0 %v2558
    %2626 = vmatprep.subr.mxu0 %v2563
    %2627 = vmatpush1.msra.mxu0 %v2562
    %2628 = vmatprep.subr.mxu0 %v2567
    %2629 = vmatpush1.msra.mxu0 %v2566
    %2630 = vmatprep.subr.mxu0 %v2571
    %2631 = vmatpush1.msra.mxu0 %v2570
    %2632 = vmatprep.subr.mxu0 %v2575
    %2633 = vmatpush1.msra.mxu0 %v2574
    %2634 = vmatprep.subr.mxu0 %v2579
    %2635 = vmatpush1.msra.mxu0 %v2578
    %2636 = vmatprep.subr.mxu0 %v2583
    %2637 = vmatpush1.msra.mxu0 %v2582
    %2638 = vmatprep.subr.mxu0 %v2587
    %2639 = vmatpush1.msra.mxu0 %v2586
    %2640 = vmatprep.subr.mxu0 %v2591
    %2641 = vmatpush1.msra.mxu0 %v2590
    %2642 = vmatprep.subr.mxu0 %v2595
    %2643 = vmatpush1.msra.mxu0 %v2594
    %2644 = vmatprep.subr.mxu0 %v2599
    %2645 = vmatpush1.msra.mxu0 %v2598
    %2646 = vmatprep.subr.mxu0 %v2603
    %2647 = vmatpush1.msra.mxu0 %v2602
    %2648 = vmatprep.subr.mxu0 %v2607
    %2649 = vmatpush1.msra.mxu0 %v2606
    %2650 = vmatprep.subr.mxu0 %v2611
    %2651 = vmatpush1.msra.mxu0 %v2610
    %2652 = vmatprep.subr.mxu0 %v2615
    %2653 = vmatpush1.msra.mxu0 %v2614
    %2654 = vmatprep.subr.mxu0 0.0
    %2655 = vmatpush1.msra.mxu0 0.0
    %2656 = vmatprep.subr.mxu0 0.0
    %2657 = vmatpush1.msra.mxu0 0.0
    %2658 = vmatprep.subr.mxu0 0.0
    %2659 = vmatpush1.msra.mxu0 0.0
    %2660 = vmatprep.subr.mxu0 0.0
    %2661 = vmatpush1.msra.mxu0 0.0
    %2662 = vmatprep.subr.mxu0 0.0
    %2663 = vmatpush1.msra.mxu0 0.0
    %2664 = vmatprep.subr.mxu0 0.0
    %2665 = vmatpush1.msra.mxu0 0.0
    %2666 = vmatprep.subr.mxu0 0.0
    %2667 = vmatpush1.msra.mxu0 0.0
    %2668 = vmatprep.subr.mxu0 0.0
    %2669 = vmatpush1.msra.mxu0 0.0
    %2670 = vmatprep.subr.mxu0 0.0
    %2671 = vmatpush1.msra.mxu0 0.0
    %2672 = vmatprep.subr.mxu0 0.0
    %2673 = vmatpush1.msra.mxu0 0.0
    %2674 = vmatprep.subr.mxu0 0.0
    %2675 = vmatpush1.msra.mxu0 0.0
    %2676 = vmatprep.subr.mxu0 0.0
    %2677 = vmatpush1.msra.mxu0 0.0
    %2678 = vmatprep.subr.mxu0 0.0
    %2679 = vmatpush1.msra.mxu0 0.0
    %2680 = vmatprep.subr.mxu0 0.0
    %2681 = vmatpush1.msra.mxu0 0.0
    %2682 = vmatprep.subr.mxu0 0.0
    %2683 = vmatpush1.msra.mxu0 0.0
    %2684 = vmatprep.subr.mxu0 0.0
    %2685 = vmatpush1.msra.mxu0 0.0
    %2686 = vmatprep.mubr.f32.mxu0 0.0
    %2687 = vmatmul.mubr.f32.gmra.mrb[0].mxu0 %v2553
    %v2688 = vpop.f32.mrb[0].mxu0
    %v2689 = vadd.f32 %v2618, %v2688
    %v2690 = vpop.f32.mrb[0].mxu0
    %v2691 = vadd.f32 %v2619, %v2690
    %2692 = vdwg.mxu0
    %2693 = vmatprep.subr.mxu0 %v2557
    %2694 = vmatpush1.msra.mxu0 %v2556
    %2695 = vmatprep.subr.mxu0 %v2561
    %2696 = vmatpush1.msra.mxu0 %v2560
    %2697 = vmatprep.subr.mxu0 %v2565
    %2698 = vmatpush1.msra.mxu0 %v2564
    %2699 = vmatprep.subr.mxu0 %v2569
    %2700 = vmatpush1.msra.mxu0 %v2568
    %2701 = vmatprep.subr.mxu0 %v2573
    %2702 = vmatpush1.msra.mxu0 %v2572
    %2703 = vmatprep.subr.mxu0 %v2577
    %2704 = vmatpush1.msra.mxu0 %v2576
    %2705 = vmatprep.subr.mxu0 %v2581
    %2706 = vmatpush1.msra.mxu0 %v2580
    %2707 = vmatprep.subr.mxu0 %v2585
    %2708 = vmatpush1.msra.mxu0 %v2584
    %2709 = vmatprep.subr.mxu0 %v2589
    %2710 = vmatpush1.msra.mxu0 %v2588
    %2711 = vmatprep.subr.mxu0 %v2593
    %2712 = vmatpush1.msra.mxu0 %v2592
    %2713 = vmatprep.subr.mxu0 %v2597
    %2714 = vmatpush1.msra.mxu0 %v2596
    %2715 = vmatprep.subr.mxu0 %v2601
    %2716 = vmatpush1.msra.mxu0 %v2600
    %2717 = vmatprep.subr.mxu0 %v2605
    %2718 = vmatpush1.msra.mxu0 %v2604
    %2719 = vmatprep.subr.mxu0 %v2609
    %2720 = vmatpush1.msra.mxu0 %v2608
    %2721 = vmatprep.subr.mxu0 %v2613
    %2722 = vmatpush1.msra.mxu0 %v2612
    %2723 = vmatprep.subr.mxu0 %v2617
    %2724 = vmatpush1.msra.mxu0 %v2616
    %2725 = vmatprep.subr.mxu0 0.0
    %2726 = vmatpush1.msra.mxu0 0.0
    %2727 = vmatprep.subr.mxu0 0.0
    %2728 = vmatpush1.msra.mxu0 0.0
    %2729 = vmatprep.subr.mxu0 0.0
    %2730 = vmatpush1.msra.mxu0 0.0
    %2731 = vmatprep.subr.mxu0 0.0
    %2732 = vmatpush1.msra.mxu0 0.0
    %2733 = vmatprep.subr.mxu0 0.0
    %2734 = vmatpush1.msra.mxu0 0.0
    %2735 = vmatprep.subr.mxu0 0.0
    %2736 = vmatpush1.msra.mxu0 0.0
    %2737 = vmatprep.subr.mxu0 0.0
    %2738 = vmatpush1.msra.mxu0 0.0
    %2739 = vmatprep.subr.mxu0 0.0
    %2740 = vmatpush1.msra.mxu0 0.0
    %2741 = vmatprep.subr.mxu0 0.0
    %2742 = vmatpush1.msra.mxu0 0.0
    %2743 = vmatprep.subr.mxu0 0.0
    %2744 = vmatpush1.msra.mxu0 0.0
    %2745 = vmatprep.subr.mxu0 0.0
    %2746 = vmatpush1.msra.mxu0 0.0
    %2747 = vmatprep.subr.mxu0 0.0
    %2748 = vmatpush1.msra.mxu0 0.0
    %2749 = vmatprep.subr.mxu0 0.0
    %2750 = vmatpush1.msra.mxu0 0.0
    %2751 = vmatprep.subr.mxu0 0.0
    %2752 = vmatpush1.msra.mxu0 0.0
    %2753 = vmatprep.subr.mxu0 0.0
    %2754 = vmatpush1.msra.mxu0 0.0
    %2755 = vmatprep.subr.mxu0 0.0
    %2756 = vmatpush1.msra.mxu0 0.0
    %2757 = vmatprep.mubr.f32.mxu0 0.0
    %2758 = vmatmul.mubr.f32.gmra.mrb[0].mxu0 %v2553
    %v2759 = vpop.f32.mrb[0].mxu0
    %v2760 = vadd.f32 %v2620, %v2759
    %v2761 = vpop.f32.mrb[0].mxu0
    %v2762 = vadd.f32 %v2621, %v2761
    %2763 = vdwg.mxu0
    %v2764 = vxor.u32 %v2689, 2147483648
    %v2765 = vmul.f32 %v2764, 1.442695
    %v2766 = vpow.pop %v2765
    %v2767 = vadd.f32 %v2766, 1.0
    %v2768 = vrcp.pop %v2767
    %v2769 = vmul.f32 1.0, %v2768
    %v2770 = vxor.u32 %v2691, 2147483648
    %v2771 = vmul.f32 %v2770, 1.442695
    %v2772 = vpow.pop %v2771
    %v2773 = vadd.f32 %v2772, 1.0
    %v2774 = vrcp.pop %v2773
    %v2775 = vmul.f32 1.0, %v2774
    %v2776 = vtanh.pop %v2760
    %v2777 = vxor.u32 %v2762, 2147483648
    %v2778 = vmul.f32 %v2777, 1.442695
    %v2779 = vpow.pop %v2778
    %v2780 = vadd.f32 %v2779, 1.0
    %v2781 = vrcp.pop %v2780
    %v2782 = vmul.f32 1.0, %v2781
    %v2783 = vld [vmem:[#allocation11] sm:$0xff]
    %v2784 = vmul.f32 %v2775, %v2783
    %v2785 = vmul.f32 %v2769, %v2776
    %v2786 = vadd.f32 %v2784, %v2785
    %v2787 = vtanh.pop %v2786
    %v2788 = vmul.f32 %v2782, %v2787
    %2789 = vst [vmem:[#allocation10] sm:$0xff] %v2788
    %2790 = vst [vmem:[#allocation11] sm:$0xff] %v2786
    %v2791 = vld [vmem:[#allocation10] sm:$0xff]
    %2792 = vst [vmem:[#allocation9] sm:$0xff] %v2791
    %v2793 = vld [vmem:[#allocation10] sm:$0xff]
    %v2794 = vld [vmem:[#allocation3] sm:$0xff]
    %v2795 = vld [vmem:[#allocation3 + $0x8] sm:$0xff]
    %v2796 = vld [vmem:[#allocation3 + $0x10] sm:$0xff]
    %v2797 = vld [vmem:[#allocation3 + $0x18] sm:$0xff]
    %v2798 = vld [vmem:[#allocation3 + $0x20] sm:$0xff]
    %v2799 = vld [vmem:[#allocation3 + $0x28] sm:$0xff]
    %v2800 = vld [vmem:[#allocation3 + $0x30] sm:$0xff]
    %v2801 = vld [vmem:[#allocation3 + $0x38] sm:$0xff]
    %v2802 = vld [vmem:[#allocation3 + $0x40] sm:$0xff]
    %v2803 = vld [vmem:[#allocation3 + $0x48] sm:$0xff]
    %v2804 = vld [vmem:[#allocation3 + $0x50] sm:$0xff]
    %v2805 = vld [vmem:[#allocation3 + $0x58] sm:$0xff]
    %v2806 = vld [vmem:[#allocation3 + $0x60] sm:$0xff]
    %v2807 = vld [vmem:[#allocation3 + $0x68] sm:$0xff]
    %v2808 = vld [vmem:[#allocation3 + $0x70] sm:$0xff]
    %v2809 = vld [vmem:[#allocation3 + $0x78] sm:$0xff]
    %v2810 = vld [vmem:[#allocation3 + $0x80] sm:$0xff]
    %v2811 = vld [vmem:[#allocation3 + $0x88] sm:$0xff]
    %v2812 = vld [vmem:[#allocation3 + $0x90] sm:$0xff]
    %v2813 = vld [vmem:[#allocation3 + $0x98] sm:$0xff]
    %v2814 = vld [vmem:[#allocation3 + $0xa0] sm:$0xff]
    %v2815 = vld [vmem:[#allocation3 + $0xa8] sm:$0xff]
    %v2816 = vld [vmem:[#allocation3 + $0xb0] sm:$0xff]
    %v2817 = vld [vmem:[#allocation3 + $0xb8] sm:$0xff]
    %v2818 = vld [vmem:[#allocation3 + $0xc0] sm:$0xff]
    %v2819 = vld [vmem:[#allocation3 + $0xc8] sm:$0xff]
    %v2820 = vld [vmem:[#allocation3 + $0xd0] sm:$0xff]
    %v2821 = vld [vmem:[#allocation3 + $0xd8] sm:$0xff]
    %v2822 = vld [vmem:[#allocation3 + $0xe0] sm:$0xff]
    %v2823 = vld [vmem:[#allocation3 + $0xe8] sm:$0xff]
    %v2824 = vld [vmem:[#allocation3 + $0xf0] sm:$0xff]
    %v2825 = vld [vmem:[#allocation3 + $0xf8] sm:$0xff]
    %v2826 = vld [vmem:[#allocation3 + $0x100] sm:$0xff]
    %v2827 = vld [vmem:[#allocation3 + $0x108] sm:$0xff]
    %v2828 = vld [vmem:[#allocation3 + $0x110] sm:$0xff]
    %v2829 = vld [vmem:[#allocation3 + $0x118] sm:$0xff]
    %v2830 = vld [vmem:[#allocation3 + $0x120] sm:$0xff]
    %v2831 = vld [vmem:[#allocation3 + $0x128] sm:$0xff]
    %v2832 = vld [vmem:[#allocation3 + $0x130] sm:$0xff]
    %v2833 = vld [vmem:[#allocation3 + $0x138] sm:$0xff]
    %v2834 = vld [vmem:[#allocation3 + $0x140] sm:$0xff]
    %v2835 = vld [vmem:[#allocation3 + $0x148] sm:$0xff]
    %v2836 = vld [vmem:[#allocation3 + $0x150] sm:$0xff]
    %v2837 = vld [vmem:[#allocation3 + $0x158] sm:$0xff]
    %v2838 = vld [vmem:[#allocation3 + $0x160] sm:$0xff]
    %v2839 = vld [vmem:[#allocation3 + $0x168] sm:$0xff]
    %v2840 = vld [vmem:[#allocation3 + $0x170] sm:$0xff]
    %v2841 = vld [vmem:[#allocation3 + $0x178] sm:$0xff]
    %v2842 = vld [vmem:[#allocation3 + $0x180] sm:$0xff]
    %v2843 = vld [vmem:[#allocation3 + $0x188] sm:$0xff]
    %v2844 = vld [vmem:[#allocation3 + $0x190] sm:$0xff]
    %v2845 = vld [vmem:[#allocation3 + $0x198] sm:$0xff]
    %v2846 = vld [vmem:[#allocation3 + $0x1a0] sm:$0xff]
    %v2847 = vld [vmem:[#allocation3 + $0x1a8] sm:$0xff]
    %v2848 = vld [vmem:[#allocation3 + $0x1b0] sm:$0xff]
    %v2849 = vld [vmem:[#allocation3 + $0x1b8] sm:$0xff]
    %v2850 = vld [vmem:[#allocation3 + $0x1c0] sm:$0xff]
    %v2851 = vld [vmem:[#allocation3 + $0x1c8] sm:$0xff]
    %v2852 = vld [vmem:[#allocation3 + $0x1d0] sm:$0xff]
    %v2853 = vld [vmem:[#allocation3 + $0x1d8] sm:$0xff]
    %v2854 = vld [vmem:[#allocation3 + $0x1e0] sm:$0xff]
    %v2855 = vld [vmem:[#allocation3 + $0x1e8] sm:$0xff]
    %v2856 = vld [vmem:[#allocation3 + $0x1f0] sm:$0xff]
    %v2857 = vld [vmem:[#allocation3 + $0x1f8] sm:$0xff]
    %v2858 = vld [vmem:[#allocation4] sm:$0xff]
    %v2859 = vld [vmem:[#allocation4 + $0x8] sm:$0xff]
    %v2860 = vld [vmem:[#allocation4 + $0x10] sm:$0xff]
    %v2861 = vld [vmem:[#allocation4 + $0x18] sm:$0xff]
    %2862 = vmatprep.subr.mxu0 %v2795
    %2863 = vmatpush1.msra.mxu0 %v2794
    %2864 = vmatprep.subr.mxu0 %v2799
    %2865 = vmatpush1.msra.mxu0 %v2798
    %2866 = vmatprep.subr.mxu0 %v2803
    %2867 = vmatpush1.msra.mxu0 %v2802
    %2868 = vmatprep.subr.mxu0 %v2807
    %2869 = vmatpush1.msra.mxu0 %v2806
    %2870 = vmatprep.subr.mxu0 %v2811
    %2871 = vmatpush1.msra.mxu0 %v2810
    %2872 = vmatprep.subr.mxu0 %v2815
    %2873 = vmatpush1.msra.mxu0 %v2814
    %2874 = vmatprep.subr.mxu0 %v2819
    %2875 = vmatpush1.msra.mxu0 %v2818
    %2876 = vmatprep.subr.mxu0 %v2823
    %2877 = vmatpush1.msra.mxu0 %v2822
    %2878 = vmatprep.subr.mxu0 %v2827
    %2879 = vmatpush1.msra.mxu0 %v2826
    %2880 = vmatprep.subr.mxu0 %v2831
    %2881 = vmatpush1.msra.mxu0 %v2830
    %2882 = vmatprep.subr.mxu0 %v2835
    %2883 = vmatpush1.msra.mxu0 %v2834
    %2884 = vmatprep.subr.mxu0 %v2839
    %2885 = vmatpush1.msra.mxu0 %v2838
    %2886 = vmatprep.subr.mxu0 %v2843
    %2887 = vmatpush1.msra.mxu0 %v2842
    %2888 = vmatprep.subr.mxu0 %v2847
    %2889 = vmatpush1.msra.mxu0 %v2846
    %2890 = vmatprep.subr.mxu0 %v2851
    %2891 = vmatpush1.msra.mxu0 %v2850
    %2892 = vmatprep.subr.mxu0 %v2855
    %2893 = vmatpush1.msra.mxu0 %v2854
    %2894 = vmatprep.subr.mxu0 0.0
    %2895 = vmatpush1.msra.mxu0 0.0
    %2896 = vmatprep.subr.mxu0 0.0
    %2897 = vmatpush1.msra.mxu0 0.0
    %2898 = vmatprep.subr.mxu0 0.0
    %2899 = vmatpush1.msra.mxu0 0.0
    %2900 = vmatprep.subr.mxu0 0.0
    %2901 = vmatpush1.msra.mxu0 0.0
    %2902 = vmatprep.subr.mxu0 0.0
    %2903 = vmatpush1.msra.mxu0 0.0
    %2904 = vmatprep.subr.mxu0 0.0
    %2905 = vmatpush1.msra.mxu0 0.0
    %2906 = vmatprep.subr.mxu0 0.0
    %2907 = vmatpush1.msra.mxu0 0.0
    %2908 = vmatprep.subr.mxu0 0.0
    %2909 = vmatpush1.msra.mxu0 0.0
    %2910 = vmatprep.subr.mxu0 0.0
    %2911 = vmatpush1.msra.mxu0 0.0
    %2912 = vmatprep.subr.mxu0 0.0
    %2913 = vmatpush1.msra.mxu0 0.0
    %2914 = vmatprep.subr.mxu0 0.0
    %2915 = vmatpush1.msra.mxu0 0.0
    %2916 = vmatprep.subr.mxu0 0.0
    %2917 = vmatpush1.msra.mxu0 0.0
    %2918 = vmatprep.subr.mxu0 0.0
    %2919 = vmatpush1.msra.mxu0 0.0
    %2920 = vmatprep.subr.mxu0 0.0
    %2921 = vmatpush1.msra.mxu0 0.0
    %2922 = vmatprep.subr.mxu0 0.0
    %2923 = vmatpush1.msra.mxu0 0.0
    %2924 = vmatprep.subr.mxu0 0.0
    %2925 = vmatpush1.msra.mxu0 0.0
    %2926 = vmatprep.mubr.f32.mxu0 0.0
    %2927 = vmatmul.mubr.f32.gmra.mrb[0].mxu0 %v2793
    %v2928 = vpop.f32.mrb[0].mxu0
    %v2929 = vadd.f32 %v2858, %v2928
    %v2930 = vpop.f32.mrb[0].mxu0
    %v2931 = vadd.f32 %v2859, %v2930
    %2932 = vdwg.mxu0
    %2933 = vmatprep.subr.mxu0 %v2797
    %2934 = vmatpush1.msra.mxu0 %v2796
    %2935 = vmatprep.subr.mxu0 %v2801
    %2936 = vmatpush1.msra.mxu0 %v2800
    %2937 = vmatprep.subr.mxu0 %v2805
    %2938 = vmatpush1.msra.mxu0 %v2804
    %2939 = vmatprep.subr.mxu0 %v2809
    %2940 = vmatpush1.msra.mxu0 %v2808
    %2941 = vmatprep.subr.mxu0 %v2813
    %2942 = vmatpush1.msra.mxu0 %v2812
    %2943 = vmatprep.subr.mxu0 %v2817
    %2944 = vmatpush1.msra.mxu0 %v2816
    %2945 = vmatprep.subr.mxu0 %v2821
    %2946 = vmatpush1.msra.mxu0 %v2820
    %2947 = vmatprep.subr.mxu0 %v2825
    %2948 = vmatpush1.msra.mxu0 %v2824
    %2949 = vmatprep.subr.mxu0 %v2829
    %2950 = vmatpush1.msra.mxu0 %v2828
    %2951 = vmatprep.subr.mxu0 %v2833
    %2952 = vmatpush1.msra.mxu0 %v2832
    %2953 = vmatprep.subr.mxu0 %v2837
    %2954 = vmatpush1.msra.mxu0 %v2836
    %2955 = vmatprep.subr.mxu0 %v2841
    %2956 = vmatpush1.msra.mxu0 %v2840
    %2957 = vmatprep.subr.mxu0 %v2845
    %2958 = vmatpush1.msra.mxu0 %v2844
    %2959 = vmatprep.subr.mxu0 %v2849
    %2960 = vmatpush1.msra.mxu0 %v2848
    %2961 = vmatprep.subr.mxu0 %v2853
    %2962 = vmatpush1.msra.mxu0 %v2852
    %2963 = vmatprep.subr.mxu0 %v2857
    %2964 = vmatpush1.msra.mxu0 %v2856
    %2965 = vmatprep.subr.mxu0 0.0
    %2966 = vmatpush1.msra.mxu0 0.0
    %2967 = vmatprep.subr.mxu0 0.0
    %2968 = vmatpush1.msra.mxu0 0.0
    %2969 = vmatprep.subr.mxu0 0.0
    %2970 = vmatpush1.msra.mxu0 0.0
    %2971 = vmatprep.subr.mxu0 0.0
    %2972 = vmatpush1.msra.mxu0 0.0
    %2973 = vmatprep.subr.mxu0 0.0
    %2974 = vmatpush1.msra.mxu0 0.0
    %2975 = vmatprep.subr.mxu0 0.0
    %2976 = vmatpush1.msra.mxu0 0.0
    %2977 = vmatprep.subr.mxu0 0.0
    %2978 = vmatpush1.msra.mxu0 0.0
    %2979 = vmatprep.subr.mxu0 0.0
    %2980 = vmatpush1.msra.mxu0 0.0
    %2981 = vmatprep.subr.mxu0 0.0
    %2982 = vmatpush1.msra.mxu0 0.0
    %2983 = vmatprep.subr.mxu0 0.0
    %2984 = vmatpush1.msra.mxu0 0.0
    %2985 = vmatprep.subr.mxu0 0.0
    %2986 = vmatpush1.msra.mxu0 0.0
    %2987 = vmatprep.subr.mxu0 0.0
    %2988 = vmatpush1.msra.mxu0 0.0
    %2989 = vmatprep.subr.mxu0 0.0
    %2990 = vmatpush1.msra.mxu0 0.0
    %2991 = vmatprep.subr.mxu0 0.0
    %2992 = vmatpush1.msra.mxu0 0.0
    %2993 = vmatprep.subr.mxu0 0.0
    %2994 = vmatpush1.msra.mxu0 0.0
    %2995 = vmatprep.subr.mxu0 0.0
    %2996 = vmatpush1.msra.mxu0 0.0
    %2997 = vmatprep.mubr.f32.mxu0 0.0
    %2998 = vmatmul.mubr.f32.gmra.mrb[0].mxu0 %v2793
    %v2999 = vpop.f32.mrb[0].mxu0
    %v3000 = vadd.f32 %v2860, %v2999
    %v3001 = vpop.f32.mrb[0].mxu0
    %v3002 = vadd.f32 %v2861, %v3001
    %3003 = vdwg.mxu0
    %v3004 = vxor.u32 %v2929, 2147483648
    %v3005 = vmul.f32 %v3004, 1.442695
    %v3006 = vpow.pop %v3005
    %v3007 = vadd.f32 %v3006, 1.0
    %v3008 = vrcp.pop %v3007
    %v3009 = vmul.f32 1.0, %v3008
    %v3010 = vxor.u32 %v2931, 2147483648
    %v3011 = vmul.f32 %v3010, 1.442695
    %v3012 = vpow.pop %v3011
    %v3013 = vadd.f32 %v3012, 1.0
    %v3014 = vrcp.pop %v3013
    %v3015 = vmul.f32 1.0, %v3014
    %v3016 = vtanh.pop %v3000
    %v3017 = vxor.u32 %v3002, 2147483648
    %v3018 = vmul.f32 %v3017, 1.442695
    %v3019 = vpow.pop %v3018
    %v3020 = vadd.f32 %v3019, 1.0
    %v3021 = vrcp.pop %v3020
    %v3022 = vmul.f32 1.0, %v3021
    %v3023 = vld [vmem:[#allocation11] sm:$0xff]
    %v3024 = vmul.f32 %v3015, %v3023
    %v3025 = vmul.f32 %v3009, %v3016
    %v3026 = vadd.f32 %v3024, %v3025
    %v3027 = vtanh.pop %v3026
    %v3028 = vmul.f32 %v3022, %v3027
    %3029 = vst [vmem:[#allocation10] sm:$0xff] %v3028
    %3030 = vst [vmem:[#allocation11] sm:$0xff] %v3026
    %v3031 = vld [vmem:[#allocation10] sm:$0xff]
    %s3032 = scalar_lea.vmem [#allocation9], 8
    %3033 = vst [vmem:[%s3032] sm:$0xff] %v3031
    %v3034 = vld [vmem:[#allocation10] sm:$0xff]
    %v3035 = vld [vmem:[#allocation3] sm:$0xff]
    %v3036 = vld [vmem:[#allocation3 + $0x8] sm:$0xff]
    %v3037 = vld [vmem:[#allocation3 + $0x10] sm:$0xff]
    %v3038 = vld [vmem:[#allocation3 + $0x18] sm:$0xff]
    %v3039 = vld [vmem:[#allocation3 + $0x20] sm:$0xff]
    %v3040 = vld [vmem:[#allocation3 + $0x28] sm:$0xff]
    %v3041 = vld [vmem:[#allocation3 + $0x30] sm:$0xff]
    %v3042 = vld [vmem:[#allocation3 + $0x38] sm:$0xff]
    %v3043 = vld [vmem:[#allocation3 + $0x40] sm:$0xff]
    %v3044 = vld [vmem:[#allocation3 + $0x48] sm:$0xff]
    %v3045 = vld [vmem:[#allocation3 + $0x50] sm:$0xff]
    %v3046 = vld [vmem:[#allocation3 + $0x58] sm:$0xff]
    %v3047 = vld [vmem:[#allocation3 + $0x60] sm:$0xff]
    %v3048 = vld [vmem:[#allocation3 + $0x68] sm:$0xff]
    %v3049 = vld [vmem:[#allocation3 + $0x70] sm:$0xff]
    %v3050 = vld [vmem:[#allocation3 + $0x78] sm:$0xff]
    %v3051 = vld [vmem:[#allocation3 + $0x80] sm:$0xff]
    %v3052 = vld [vmem:[#allocation3 + $0x88] sm:$0xff]
    %v3053 = vld [vmem:[#allocation3 + $0x90] sm:$0xff]
    %v3054 = vld [vmem:[#allocation3 + $0x98] sm:$0xff]
    %v3055 = vld [vmem:[#allocation3 + $0xa0] sm:$0xff]
    %v3056 = vld [vmem:[#allocation3 + $0xa8] sm:$0xff]
    %v3057 = vld [vmem:[#allocation3 + $0xb0] sm:$0xff]
    %v3058 = vld [vmem:[#allocation3 + $0xb8] sm:$0xff]
    %v3059 = vld [vmem:[#allocation3 + $0xc0] sm:$0xff]
    %v3060 = vld [vmem:[#allocation3 + $0xc8] sm:$0xff]
    %v3061 = vld [vmem:[#allocation3 + $0xd0] sm:$0xff]
    %v3062 = vld [vmem:[#allocation3 + $0xd8] sm:$0xff]
    %v3063 = vld [vmem:[#allocation3 + $0xe0] sm:$0xff]
    %v3064 = vld [vmem:[#allocation3 + $0xe8] sm:$0xff]
    %v3065 = vld [vmem:[#allocation3 + $0xf0] sm:$0xff]
    %v3066 = vld [vmem:[#allocation3 + $0xf8] sm:$0xff]
    %v3067 = vld [vmem:[#allocation3 + $0x100] sm:$0xff]
    %v3068 = vld [vmem:[#allocation3 + $0x108] sm:$0xff]
    %v3069 = vld [vmem:[#allocation3 + $0x110] sm:$0xff]
    %v3070 = vld [vmem:[#allocation3 + $0x118] sm:$0xff]
    %v3071 = vld [vmem:[#allocation3 + $0x120] sm:$0xff]
    %v3072 = vld [vmem:[#allocation3 + $0x128] sm:$0xff]
    %v3073 = vld [vmem:[#allocation3 + $0x130] sm:$0xff]
    %v3074 = vld [vmem:[#allocation3 + $0x138] sm:$0xff]
    %v3075 = vld [vmem:[#allocation3 + $0x140] sm:$0xff]
    %v3076 = vld [vmem:[#allocation3 + $0x148] sm:$0xff]
    %v3077 = vld [vmem:[#allocation3 + $0x150] sm:$0xff]
    %v3078 = vld [vmem:[#allocation3 + $0x158] sm:$0xff]
    %v3079 = vld [vmem:[#allocation3 + $0x160] sm:$0xff]
    %v3080 = vld [vmem:[#allocation3 + $0x168] sm:$0xff]
    %v3081 = vld [vmem:[#allocation3 + $0x170] sm:$0xff]
    %v3082 = vld [vmem:[#allocation3 + $0x178] sm:$0xff]
    %v3083 = vld [vmem:[#allocation3 + $0x180] sm:$0xff]
    %v3084 = vld [vmem:[#allocation3 + $0x188] sm:$0xff]
    %v3085 = vld [vmem:[#allocation3 + $0x190] sm:$0xff]
    %v3086 = vld [vmem:[#allocation3 + $0x198] sm:$0xff]
    %v3087 = vld [vmem:[#allocation3 + $0x1a0] sm:$0xff]
    %v3088 = vld [vmem:[#allocation3 + $0x1a8] sm:$0xff]
    %v3089 = vld [vmem:[#allocation3 + $0x1b0] sm:$0xff]
    %v3090 = vld [vmem:[#allocation3 + $0x1b8] sm:$0xff]
    %v3091 = vld [vmem:[#allocation3 + $0x1c0] sm:$0xff]
    %v3092 = vld [vmem:[#allocation3 + $0x1c8] sm:$0xff]
    %v3093 = vld [vmem:[#allocation3 + $0x1d0] sm:$0xff]
    %v3094 = vld [vmem:[#allocation3 + $0x1d8] sm:$0xff]
    %v3095 = vld [vmem:[#allocation3 + $0x1e0] sm:$0xff]
    %v3096 = vld [vmem:[#allocation3 + $0x1e8] sm:$0xff]
    %v3097 = vld [vmem:[#allocation3 + $0x1f0] sm:$0xff]
    %v3098 = vld [vmem:[#allocation3 + $0x1f8] sm:$0xff]
    %v3099 = vld [vmem:[#allocation4] sm:$0xff]
    %v3100 = vld [vmem:[#allocation4 + $0x8] sm:$0xff]
    %v3101 = vld [vmem:[#allocation4 + $0x10] sm:$0xff]
    %v3102 = vld [vmem:[#allocation4 + $0x18] sm:$0xff]
    %3103 = vmatprep.subr.mxu0 %v3036
    %3104 = vmatpush1.msra.mxu0 %v3035
    %3105 = vmatprep.subr.mxu0 %v3040
    %3106 = vmatpush1.msra.mxu0 %v3039
    %3107 = vmatprep.subr.mxu0 %v3044
    %3108 = vmatpush1.msra.mxu0 %v3043
    %3109 = vmatprep.subr.mxu0 %v3048
    %3110 = vmatpush1.msra.mxu0 %v3047
    %3111 = vmatprep.subr.mxu0 %v3052
    %3112 = vmatpush1.msra.mxu0 %v3051
    %3113 = vmatprep.subr.mxu0 %v3056
    %3114 = vmatpush1.msra.mxu0 %v3055
    %3115 = vmatprep.subr.mxu0 %v3060
    %3116 = vmatpush1.msra.mxu0 %v3059
    %3117 = vmatprep.subr.mxu0 %v3064
    %3118 = vmatpush1.msra.mxu0 %v3063
    %3119 = vmatprep.subr.mxu0 %v3068
    %3120 = vmatpush1.msra.mxu0 %v3067
    %3121 = vmatprep.subr.mxu0 %v3072
    %3122 = vmatpush1.msra.mxu0 %v3071
    %3123 = vmatprep.subr.mxu0 %v3076
    %3124 = vmatpush1.msra.mxu0 %v3075
    %3125 = vmatprep.subr.mxu0 %v3080
    %3126 = vmatpush1.msra.mxu0 %v3079
    %3127 = vmatprep.subr.mxu0 %v3084
    %3128 = vmatpush1.msra.mxu0 %v3083
    %3129 = vmatprep.subr.mxu0 %v3088
    %3130 = vmatpush1.msra.mxu0 %v3087
    %3131 = vmatprep.subr.mxu0 %v3092
    %3132 = vmatpush1.msra.mxu0 %v3091
    %3133 = vmatprep.subr.mxu0 %v3096
    %3134 = vmatpush1.msra.mxu0 %v3095
    %3135 = vmatprep.subr.mxu0 0.0
    %3136 = vmatpush1.msra.mxu0 0.0
    %3137 = vmatprep.subr.mxu0 0.0
    %3138 = vmatpush1.msra.mxu0 0.0
    %3139 = vmatprep.subr.mxu0 0.0
    %3140 = vmatpush1.msra.mxu0 0.0
    %3141 = vmatprep.subr.mxu0 0.0
    %3142 = vmatpush1.msra.mxu0 0.0
    %3143 = vmatprep.subr.mxu0 0.0
    %3144 = vmatpush1.msra.mxu0 0.0
    %3145 = vmatprep.subr.mxu0 0.0
    %3146 = vmatpush1.msra.mxu0 0.0
    %3147 = vmatprep.subr.mxu0 0.0
    %3148 = vmatpush1.msra.mxu0 0.0
    %3149 = vmatprep.subr.mxu0 0.0
    %3150 = vmatpush1.msra.mxu0 0.0
    %3151 = vmatprep.subr.mxu0 0.0
    %3152 = vmatpush1.msra.mxu0 0.0
    %3153 = vmatprep.subr.mxu0 0.0
    %3154 = vmatpush1.msra.mxu0 0.0
    %3155 = vmatprep.subr.mxu0 0.0
    %3156 = vmatpush1.msra.mxu0 0.0
    %3157 = vmatprep.subr.mxu0 0.0
    %3158 = vmatpush1.msra.mxu0 0.0
    %3159 = vmatprep.subr.mxu0 0.0
    %3160 = vmatpush1.msra.mxu0 0.0
    %3161 = vmatprep.subr.mxu0 0.0
    %3162 = vmatpush1.msra.mxu0 0.0
    %3163 = vmatprep.subr.mxu0 0.0
    %3164 = vmatpush1.msra.mxu0 0.0
    %3165 = vmatprep.subr.mxu0 0.0
    %3166 = vmatpush1.msra.mxu0 0.0
    %3167 = vmatprep.mubr.f32.mxu0 0.0
    %3168 = vmatmul.mubr.f32.gmra.mrb[0].mxu0 %v3034
    %v3169 = vpop.f32.mrb[0].mxu0
    %v3170 = vadd.f32 %v3099, %v3169
    %v3171 = vpop.f32.mrb[0].mxu0
    %v3172 = vadd.f32 %v3100, %v3171
    %3173 = vdwg.mxu0
    %3174 = vmatprep.subr.mxu0 %v3038
    %3175 = vmatpush1.msra.mxu0 %v3037
    %3176 = vmatprep.subr.mxu0 %v3042
    %3177 = vmatpush1.msra.mxu0 %v3041
    %3178 = vmatprep.subr.mxu0 %v3046
    %3179 = vmatpush1.msra.mxu0 %v3045
    %3180 = vmatprep.subr.mxu0 %v3050
    %3181 = vmatpush1.msra.mxu0 %v3049
    %3182 = vmatprep.subr.mxu0 %v3054
    %3183 = vmatpush1.msra.mxu0 %v3053
    %3184 = vmatprep.subr.mxu0 %v3058
    %3185 = vmatpush1.msra.mxu0 %v3057
    %3186 = vmatprep.subr.mxu0 %v3062
    %3187 = vmatpush1.msra.mxu0 %v3061
    %3188 = vmatprep.subr.mxu0 %v3066
    %3189 = vmatpush1.msra.mxu0 %v3065
    %3190 = vmatprep.subr.mxu0 %v3070
    %3191 = vmatpush1.msra.mxu0 %v3069
    %3192 = vmatprep.subr.mxu0 %v3074
    %3193 = vmatpush1.msra.mxu0 %v3073
    %3194 = vmatprep.subr.mxu0 %v3078
    %3195 = vmatpush1.msra.mxu0 %v3077
    %3196 = vmatprep.subr.mxu0 %v3082
    %3197 = vmatpush1.msra.mxu0 %v3081
    %3198 = vmatprep.subr.mxu0 %v3086
    %3199 = vmatpush1.msra.mxu0 %v3085
    %3200 = vmatprep.subr.mxu0 %v3090
    %3201 = vmatpush1.msra.mxu0 %v3089
    %3202 = vmatprep.subr.mxu0 %v3094
    %3203 = vmatpush1.msra.mxu0 %v3093
    %3204 = vmatprep.subr.mxu0 %v3098
    %3205 = vmatpush1.msra.mxu0 %v3097
    %3206 = vmatprep.subr.mxu0 0.0
    %3207 = vmatpush1.msra.mxu0 0.0
    %3208 = vmatprep.subr.mxu0 0.0
    %3209 = vmatpush1.msra.mxu0 0.0
    %3210 = vmatprep.subr.mxu0 0.0
    %3211 = vmatpush1.msra.mxu0 0.0
    %3212 = vmatprep.subr.mxu0 0.0
    %3213 = vmatpush1.msra.mxu0 0.0
    %3214 = vmatprep.subr.mxu0 0.0
    %3215 = vmatpush1.msra.mxu0 0.0
    %3216 = vmatprep.subr.mxu0 0.0
    %3217 = vmatpush1.msra.mxu0 0.0
    %3218 = vmatprep.subr.mxu0 0.0
    %3219 = vmatpush1.msra.mxu0 0.0
    %3220 = vmatprep.subr.mxu0 0.0
    %3221 = vmatpush1.msra.mxu0 0.0
    %3222 = vmatprep.subr.mxu0 0.0
    %3223 = vmatpush1.msra.mxu0 0.0
    %3224 = vmatprep.subr.mxu0 0.0
    %3225 = vmatpush1.msra.mxu0 0.0
    %3226 = vmatprep.subr.mxu0 0.0
    %3227 = vmatpush1.msra.mxu0 0.0
    %3228 = vmatprep.subr.mxu0 0.0
    %3229 = vmatpush1.msra.mxu0 0.0
    %3230 = vmatprep.subr.mxu0 0.0
    %3231 = vmatpush1.msra.mxu0 0.0
    %3232 = vmatprep.subr.mxu0 0.0
    %3233 = vmatpush1.msra.mxu0 0.0
    %3234 = vmatprep.subr.mxu0 0.0
    %3235 = vmatpush1.msra.mxu0 0.0
    %3236 = vmatprep.subr.mxu0 0.0
    %3237 = vmatpush1.msra.mxu0 0.0
    %3238 = vmatprep.mubr.f32.mxu0 0.0
    %3239 = vmatmul.mubr.f32.gmra.mrb[0].mxu0 %v3034
    %v3240 = vpop.f32.mrb[0].mxu0
    %v3241 = vadd.f32 %v3101, %v3240
    %v3242 = vpop.f32.mrb[0].mxu0
    %v3243 = vadd.f32 %v3102, %v3242
    %3244 = vdwg.mxu0
    %v3245 = vxor.u32 %v3170, 2147483648
    %v3246 = vmul.f32 %v3245, 1.442695
    %v3247 = vpow.pop %v3246
    %v3248 = vadd.f32 %v3247, 1.0
    %v3249 = vrcp.pop %v3248
    %v3250 = vmul.f32 1.0, %v3249
    %v3251 = vxor.u32 %v3172, 2147483648
    %v3252 = vmul.f32 %v3251, 1.442695
    %v3253 = vpow.pop %v3252
    %v3254 = vadd.f32 %v3253, 1.0
    %v3255 = vrcp.pop %v3254
    %v3256 = vmul.f32 1.0, %v3255
    %v3257 = vtanh.pop %v3241
    %v3258 = vxor.u32 %v3243, 2147483648
    %v3259 = vmul.f32 %v3258, 1.442695
    %v3260 = vpow.pop %v3259
    %v3261 = vadd.f32 %v3260, 1.0
    %v3262 = vrcp.pop %v3261
    %v3263 = vmul.f32 1.0, %v3262
    %v3264 = vld [vmem:[#allocation11] sm:$0xff]
    %v3265 = vmul.f32 %v3256, %v3264
    %v3266 = vmul.f32 %v3250, %v3257
    %v3267 = vadd.f32 %v3265, %v3266
    %v3268 = vtanh.pop %v3267
    %v3269 = vmul.f32 %v3263, %v3268
    %3270 = vst [vmem:[#allocation10] sm:$0xff] %v3269
    %3271 = vst [vmem:[#allocation11] sm:$0xff] %v3267
    %v3272 = vld [vmem:[#allocation10] sm:$0xff]
    %s3273 = scalar_lea.vmem [#allocation9], 16
    %3274 = vst [vmem:[%s3273] sm:$0xff] %v3272
    %v3275 = vld [vmem:[#allocation10] sm:$0xff]
    %v3276 = vld [vmem:[#allocation3] sm:$0xff]
    %v3277 = vld [vmem:[#allocation3 + $0x8] sm:$0xff]
    %v3278 = vld [vmem:[#allocation3 + $0x10] sm:$0xff]
    %v3279 = vld [vmem:[#allocation3 + $0x18] sm:$0xff]
    %v3280 = vld [vmem:[#allocation3 + $0x20] sm:$0xff]
    %v3281 = vld [vmem:[#allocation3 + $0x28] sm:$0xff]
    %v3282 = vld [vmem:[#allocation3 + $0x30] sm:$0xff]
    %v3283 = vld [vmem:[#allocation3 + $0x38] sm:$0xff]
    %v3284 = vld [vmem:[#allocation3 + $0x40] sm:$0xff]
    %v3285 = vld [vmem:[#allocation3 + $0x48] sm:$0xff]
    %v3286 = vld [vmem:[#allocation3 + $0x50] sm:$0xff]
    %v3287 = vld [vmem:[#allocation3 + $0x58] sm:$0xff]
    %v3288 = vld [vmem:[#allocation3 + $0x60] sm:$0xff]
    %v3289 = vld [vmem:[#allocation3 + $0x68] sm:$0xff]
    %v3290 = vld [vmem:[#allocation3 + $0x70] sm:$0xff]
    %v3291 = vld [vmem:[#allocation3 + $0x78] sm:$0xff]
    %v3292 = vld [vmem:[#allocation3 + $0x80] sm:$0xff]
    %v3293 = vld [vmem:[#allocation3 + $0x88] sm:$0xff]
    %v3294 = vld [vmem:[#allocation3 + $0x90] sm:$0xff]
    %v3295 = vld [vmem:[#allocation3 + $0x98] sm:$0xff]
    %v3296 = vld [vmem:[#allocation3 + $0xa0] sm:$0xff]
    %v3297 = vld [vmem:[#allocation3 + $0xa8] sm:$0xff]
    %v3298 = vld [vmem:[#allocation3 + $0xb0] sm:$0xff]
    %v3299 = vld [vmem:[#allocation3 + $0xb8] sm:$0xff]
    %v3300 = vld [vmem:[#allocation3 + $0xc0] sm:$0xff]
    %v3301 = vld [vmem:[#allocation3 + $0xc8] sm:$0xff]
    %v3302 = vld [vmem:[#allocation3 + $0xd0] sm:$0xff]
    %v3303 = vld [vmem:[#allocation3 + $0xd8] sm:$0xff]
    %v3304 = vld [vmem:[#allocation3 + $0xe0] sm:$0xff]
    %v3305 = vld [vmem:[#allocation3 + $0xe8] sm:$0xff]
    %v3306 = vld [vmem:[#allocation3 + $0xf0] sm:$0xff]
    %v3307 = vld [vmem:[#allocation3 + $0xf8] sm:$0xff]
    %v3308 = vld [vmem:[#allocation3 + $0x100] sm:$0xff]
    %v3309 = vld [vmem:[#allocation3 + $0x108] sm:$0xff]
    %v3310 = vld [vmem:[#allocation3 + $0x110] sm:$0xff]
    %v3311 = vld [vmem:[#allocation3 + $0x118] sm:$0xff]
    %v3312 = vld [vmem:[#allocation3 + $0x120] sm:$0xff]
    %v3313 = vld [vmem:[#allocation3 + $0x128] sm:$0xff]
    %v3314 = vld [vmem:[#allocation3 + $0x130] sm:$0xff]
    %v3315 = vld [vmem:[#allocation3 + $0x138] sm:$0xff]
    %v3316 = vld [vmem:[#allocation3 + $0x140] sm:$0xff]
    %v3317 = vld [vmem:[#allocation3 + $0x148] sm:$0xff]
    %v3318 = vld [vmem:[#allocation3 + $0x150] sm:$0xff]
    %v3319 = vld [vmem:[#allocation3 + $0x158] sm:$0xff]
    %v3320 = vld [vmem:[#allocation3 + $0x160] sm:$0xff]
    %v3321 = vld [vmem:[#allocation3 + $0x168] sm:$0xff]
    %v3322 = vld [vmem:[#allocation3 + $0x170] sm:$0xff]
    %v3323 = vld [vmem:[#allocation3 + $0x178] sm:$0xff]
    %v3324 = vld [vmem:[#allocation3 + $0x180] sm:$0xff]
    %v3325 = vld [vmem:[#allocation3 + $0x188] sm:$0xff]
    %v3326 = vld [vmem:[#allocation3 + $0x190] sm:$0xff]
    %v3327 = vld [vmem:[#allocation3 + $0x198] sm:$0xff]
    %v3328 = vld [vmem:[#allocation3 + $0x1a0] sm:$0xff]
    %v3329 = vld [vmem:[#allocation3 + $0x1a8] sm:$0xff]
    %v3330 = vld [vmem:[#allocation3 + $0x1b0] sm:$0xff]
    %v3331 = vld [vmem:[#allocation3 + $0x1b8] sm:$0xff]
    %v3332 = vld [vmem:[#allocation3 + $0x1c0] sm:$0xff]
    %v3333 = vld [vmem:[#allocation3 + $0x1c8] sm:$0xff]
    %v3334 = vld [vmem:[#allocation3 + $0x1d0] sm:$0xff]
    %v3335 = vld [vmem:[#allocation3 + $0x1d8] sm:$0xff]
    %v3336 = vld [vmem:[#allocation3 + $0x1e0] sm:$0xff]
    %v3337 = vld [vmem:[#allocation3 + $0x1e8] sm:$0xff]
    %v3338 = vld [vmem:[#allocation3 + $0x1f0] sm:$0xff]
    %v3339 = vld [vmem:[#allocation3 + $0x1f8] sm:$0xff]
    %v3340 = vld [vmem:[#allocation4] sm:$0xff]
    %v3341 = vld [vmem:[#allocation4 + $0x8] sm:$0xff]
    %v3342 = vld [vmem:[#allocation4 + $0x10] sm:$0xff]
    %v3343 = vld [vmem:[#allocation4 + $0x18] sm:$0xff]
    %3344 = vmatprep.subr.mxu0 %v3277
    %3345 = vmatpush1.msra.mxu0 %v3276
    %3346 = vmatprep.subr.mxu0 %v3281
    %3347 = vmatpush1.msra.mxu0 %v3280
    %3348 = vmatprep.subr.mxu0 %v3285
    %3349 = vmatpush1.msra.mxu0 %v3284
    %3350 = vmatprep.subr.mxu0 %v3289
    %3351 = vmatpush1.msra.mxu0 %v3288
    %3352 = vmatprep.subr.mxu0 %v3293
    %3353 = vmatpush1.msra.mxu0 %v3292
    %3354 = vmatprep.subr.mxu0 %v3297
    %3355 = vmatpush1.msra.mxu0 %v3296
    %3356 = vmatprep.subr.mxu0 %v3301
    %3357 = vmatpush1.msra.mxu0 %v3300
    %3358 = vmatprep.subr.mxu0 %v3305
    %3359 = vmatpush1.msra.mxu0 %v3304
    %3360 = vmatprep.subr.mxu0 %v3309
    %3361 = vmatpush1.msra.mxu0 %v3308
    %3362 = vmatprep.subr.mxu0 %v3313
    %3363 = vmatpush1.msra.mxu0 %v3312
    %3364 = vmatprep.subr.mxu0 %v3317
    %3365 = vmatpush1.msra.mxu0 %v3316
    %3366 = vmatprep.subr.mxu0 %v3321
    %3367 = vmatpush1.msra.mxu0 %v3320
    %3368 = vmatprep.subr.mxu0 %v3325
    %3369 = vmatpush1.msra.mxu0 %v3324
    %3370 = vmatprep.subr.mxu0 %v3329
    %3371 = vmatpush1.msra.mxu0 %v3328
    %3372 = vmatprep.subr.mxu0 %v3333
    %3373 = vmatpush1.msra.mxu0 %v3332
    %3374 = vmatprep.subr.mxu0 %v3337
    %3375 = vmatpush1.msra.mxu0 %v3336
    %3376 = vmatprep.subr.mxu0 0.0
    %3377 = vmatpush1.msra.mxu0 0.0
    %3378 = vmatprep.subr.mxu0 0.0
    %3379 = vmatpush1.msra.mxu0 0.0
    %3380 = vmatprep.subr.mxu0 0.0
    %3381 = vmatpush1.msra.mxu0 0.0
    %3382 = vmatprep.subr.mxu0 0.0
    %3383 = vmatpush1.msra.mxu0 0.0
    %3384 = vmatprep.subr.mxu0 0.0
    %3385 = vmatpush1.msra.mxu0 0.0
    %3386 = vmatprep.subr.mxu0 0.0
    %3387 = vmatpush1.msra.mxu0 0.0
    %3388 = vmatprep.subr.mxu0 0.0
    %3389 = vmatpush1.msra.mxu0 0.0
    %3390 = vmatprep.subr.mxu0 0.0
    %3391 = vmatpush1.msra.mxu0 0.0
    %3392 = vmatprep.subr.mxu0 0.0
    %3393 = vmatpush1.msra.mxu0 0.0
    %3394 = vmatprep.subr.mxu0 0.0
    %3395 = vmatpush1.msra.mxu0 0.0
    %3396 = vmatprep.subr.mxu0 0.0
    %3397 = vmatpush1.msra.mxu0 0.0
    %3398 = vmatprep.subr.mxu0 0.0
    %3399 = vmatpush1.msra.mxu0 0.0
    %3400 = vmatprep.subr.mxu0 0.0
    %3401 = vmatpush1.msra.mxu0 0.0
    %3402 = vmatprep.subr.mxu0 0.0
    %3403 = vmatpush1.msra.mxu0 0.0
    %3404 = vmatprep.subr.mxu0 0.0
    %3405 = vmatpush1.msra.mxu0 0.0
    %3406 = vmatprep.subr.mxu0 0.0
    %3407 = vmatpush1.msra.mxu0 0.0
    %3408 = vmatprep.mubr.f32.mxu0 0.0
    %3409 = vmatmul.mubr.f32.gmra.mrb[0].mxu0 %v3275
    %v3410 = vpop.f32.mrb[0].mxu0
    %v3411 = vadd.f32 %v3340, %v3410
    %v3412 = vpop.f32.mrb[0].mxu0
    %v3413 = vadd.f32 %v3341, %v3412
    %3414 = vdwg.mxu0
    %3415 = vmatprep.subr.mxu0 %v3279
    %3416 = vmatpush1.msra.mxu0 %v3278
    %3417 = vmatprep.subr.mxu0 %v3283
    %3418 = vmatpush1.msra.mxu0 %v3282
    %3419 = vmatprep.subr.mxu0 %v3287
    %3420 = vmatpush1.msra.mxu0 %v3286
    %3421 = vmatprep.subr.mxu0 %v3291
    %3422 = vmatpush1.msra.mxu0 %v3290
    %3423 = vmatprep.subr.mxu0 %v3295
    %3424 = vmatpush1.msra.mxu0 %v3294
    %3425 = vmatprep.subr.mxu0 %v3299
    %3426 = vmatpush1.msra.mxu0 %v3298
    %3427 = vmatprep.subr.mxu0 %v3303
    %3428 = vmatpush1.msra.mxu0 %v3302
    %3429 = vmatprep.subr.mxu0 %v3307
    %3430 = vmatpush1.msra.mxu0 %v3306
    %3431 = vmatprep.subr.mxu0 %v3311
    %3432 = vmatpush1.msra.mxu0 %v3310
    %3433 = vmatprep.subr.mxu0 %v3315
    %3434 = vmatpush1.msra.mxu0 %v3314
    %3435 = vmatprep.subr.mxu0 %v3319
    %3436 = vmatpush1.msra.mxu0 %v3318
    %3437 = vmatprep.subr.mxu0 %v3323
    %3438 = vmatpush1.msra.mxu0 %v3322
    %3439 = vmatprep.subr.mxu0 %v3327
    %3440 = vmatpush1.msra.mxu0 %v3326
    %3441 = vmatprep.subr.mxu0 %v3331
    %3442 = vmatpush1.msra.mxu0 %v3330
    %3443 = vmatprep.subr.mxu0 %v3335
    %3444 = vmatpush1.msra.mxu0 %v3334
    %3445 = vmatprep.subr.mxu0 %v3339
    %3446 = vmatpush1.msra.mxu0 %v3338
    %3447 = vmatprep.subr.mxu0 0.0
    %3448 = vmatpush1.msra.mxu0 0.0
    %3449 = vmatprep.subr.mxu0 0.0
    %3450 = vmatpush1.msra.mxu0 0.0
    %3451 = vmatprep.subr.mxu0 0.0
    %3452 = vmatpush1.msra.mxu0 0.0
    %3453 = vmatprep.subr.mxu0 0.0
    %3454 = vmatpush1.msra.mxu0 0.0
    %3455 = vmatprep.subr.mxu0 0.0
    %3456 = vmatpush1.msra.mxu0 0.0
    %3457 = vmatprep.subr.mxu0 0.0
    %3458 = vmatpush1.msra.mxu0 0.0
    %3459 = vmatprep.subr.mxu0 0.0
    %3460 = vmatpush1.msra.mxu0 0.0
    %3461 = vmatprep.subr.mxu0 0.0
    %3462 = vmatpush1.msra.mxu0 0.0
    %3463 = vmatprep.subr.mxu0 0.0
    %3464 = vmatpush1.msra.mxu0 0.0
    %3465 = vmatprep.subr.mxu0 0.0
    %3466 = vmatpush1.msra.mxu0 0.0
    %3467 = vmatprep.subr.mxu0 0.0
    %3468 = vmatpush1.msra.mxu0 0.0
    %3469 = vmatprep.subr.mxu0 0.0
    %3470 = vmatpush1.msra.mxu0 0.0
    %3471 = vmatprep.subr.mxu0 0.0
    %3472 = vmatpush1.msra.mxu0 0.0
    %3473 = vmatprep.subr.mxu0 0.0
    %3474 = vmatpush1.msra.mxu0 0.0
    %3475 = vmatprep.subr.mxu0 0.0
    %3476 = vmatpush1.msra.mxu0 0.0
    %3477 = vmatprep.subr.mxu0 0.0
    %3478 = vmatpush1.msra.mxu0 0.0
    %3479 = vmatprep.mubr.f32.mxu0 0.0
    %3480 = vmatmul.mubr.f32.gmra.mrb[0].mxu0 %v3275
    %v3481 = vpop.f32.mrb[0].mxu0
    %v3482 = vadd.f32 %v3342, %v3481
    %v3483 = vpop.f32.mrb[0].mxu0
    %v3484 = vadd.f32 %v3343, %v3483
    %3485 = vdwg.mxu0
    %v3486 = vxor.u32 %v3411, 2147483648
    %v3487 = vmul.f32 %v3486, 1.442695
    %v3488 = vpow.pop %v3487
    %v3489 = vadd.f32 %v3488, 1.0
    %v3490 = vrcp.pop %v3489
    %v3491 = vmul.f32 1.0, %v3490
    %v3492 = vxor.u32 %v3413, 2147483648
    %v3493 = vmul.f32 %v3492, 1.442695
    %v3494 = vpow.pop %v3493
    %v3495 = vadd.f32 %v3494, 1.0
    %v3496 = vrcp.pop %v3495
    %v3497 = vmul.f32 1.0, %v3496
    %v3498 = vtanh.pop %v3482
    %v3499 = vxor.u32 %v3484, 2147483648
    %v3500 = vmul.f32 %v3499, 1.442695
    %v3501 = vpow.pop %v3500
    %v3502 = vadd.f32 %v3501, 1.0
    %v3503 = vrcp.pop %v3502
    %v3504 = vmul.f32 1.0, %v3503
    %v3505 = vld [vmem:[#allocation11] sm:$0xff]
    %v3506 = vmul.f32 %v3497, %v3505
    %v3507 = vmul.f32 %v3491, %v3498
    %v3508 = vadd.f32 %v3506, %v3507
    %v3509 = vtanh.pop %v3508
    %v3510 = vmul.f32 %v3504, %v3509
    %3511 = vst [vmem:[#allocation10] sm:$0xff] %v3510
    %3512 = vst [vmem:[#allocation11] sm:$0xff] %v3508
    %v3513 = vld [vmem:[#allocation10] sm:$0xff]
    %s3514 = scalar_lea.vmem [#allocation9], 24
    %3515 = vst [vmem:[%s3514] sm:$0xff] %v3513
    %v3516 = vld [vmem:[#allocation10] sm:$0xff]
    %v3517 = vld [vmem:[#allocation3] sm:$0xff]
    %v3518 = vld [vmem:[#allocation3 + $0x8] sm:$0xff]
    %v3519 = vld [vmem:[#allocation3 + $0x10] sm:$0xff]
    %v3520 = vld [vmem:[#allocation3 + $0x18] sm:$0xff]
    %v3521 = vld [vmem:[#allocation3 + $0x20] sm:$0xff]
    %v3522 = vld [vmem:[#allocation3 + $0x28] sm:$0xff]
    %v3523 = vld [vmem:[#allocation3 + $0x30] sm:$0xff]
    %v3524 = vld [vmem:[#allocation3 + $0x38] sm:$0xff]
    %v3525 = vld [vmem:[#allocation3 + $0x40] sm:$0xff]
    %v3526 = vld [vmem:[#allocation3 + $0x48] sm:$0xff]
    %v3527 = vld [vmem:[#allocation3 + $0x50] sm:$0xff]
    %v3528 = vld [vmem:[#allocation3 + $0x58] sm:$0xff]
    %v3529 = vld [vmem:[#allocation3 + $0x60] sm:$0xff]
    %v3530 = vld [vmem:[#allocation3 + $0x68] sm:$0xff]
    %v3531 = vld [vmem:[#allocation3 + $0x70] sm:$0xff]
    %v3532 = vld [vmem:[#allocation3 + $0x78] sm:$0xff]
    %v3533 = vld [vmem:[#allocation3 + $0x80] sm:$0xff]
    %v3534 = vld [vmem:[#allocation3 + $0x88] sm:$0xff]
    %v3535 = vld [vmem:[#allocation3 + $0x90] sm:$0xff]
    %v3536 = vld [vmem:[#allocation3 + $0x98] sm:$0xff]
    %v3537 = vld [vmem:[#allocation3 + $0xa0] sm:$0xff]
    %v3538 = vld [vmem:[#allocation3 + $0xa8] sm:$0xff]
    %v3539 = vld [vmem:[#allocation3 + $0xb0] sm:$0xff]
    %v3540 = vld [vmem:[#allocation3 + $0xb8] sm:$0xff]
    %v3541 = vld [vmem:[#allocation3 + $0xc0] sm:$0xff]
    %v3542 = vld [vmem:[#allocation3 + $0xc8] sm:$0xff]
    %v3543 = vld [vmem:[#allocation3 + $0xd0] sm:$0xff]
    %v3544 = vld [vmem:[#allocation3 + $0xd8] sm:$0xff]
    %v3545 = vld [vmem:[#allocation3 + $0xe0] sm:$0xff]
    %v3546 = vld [vmem:[#allocation3 + $0xe8] sm:$0xff]
    %v3547 = vld [vmem:[#allocation3 + $0xf0] sm:$0xff]
    %v3548 = vld [vmem:[#allocation3 + $0xf8] sm:$0xff]
    %v3549 = vld [vmem:[#allocation3 + $0x100] sm:$0xff]
    %v3550 = vld [vmem:[#allocation3 + $0x108] sm:$0xff]
    %v3551 = vld [vmem:[#allocation3 + $0x110] sm:$0xff]
    %v3552 = vld [vmem:[#allocation3 + $0x118] sm:$0xff]
    %v3553 = vld [vmem:[#allocation3 + $0x120] sm:$0xff]
    %v3554 = vld [vmem:[#allocation3 + $0x128] sm:$0xff]
    %v3555 = vld [vmem:[#allocation3 + $0x130] sm:$0xff]
    %v3556 = vld [vmem:[#allocation3 + $0x138] sm:$0xff]
    %v3557 = vld [vmem:[#allocation3 + $0x140] sm:$0xff]
    %v3558 = vld [vmem:[#allocation3 + $0x148] sm:$0xff]
    %v3559 = vld [vmem:[#allocation3 + $0x150] sm:$0xff]
    %v3560 = vld [vmem:[#allocation3 + $0x158] sm:$0xff]
    %v3561 = vld [vmem:[#allocation3 + $0x160] sm:$0xff]
    %v3562 = vld [vmem:[#allocation3 + $0x168] sm:$0xff]
    %v3563 = vld [vmem:[#allocation3 + $0x170] sm:$0xff]
    %v3564 = vld [vmem:[#allocation3 + $0x178] sm:$0xff]
    %v3565 = vld [vmem:[#allocation3 + $0x180] sm:$0xff]
    %v3566 = vld [vmem:[#allocation3 + $0x188] sm:$0xff]
    %v3567 = vld [vmem:[#allocation3 + $0x190] sm:$0xff]
    %v3568 = vld [vmem:[#allocation3 + $0x198] sm:$0xff]
    %v3569 = vld [vmem:[#allocation3 + $0x1a0] sm:$0xff]
    %v3570 = vld [vmem:[#allocation3 + $0x1a8] sm:$0xff]
    %v3571 = vld [vmem:[#allocation3 + $0x1b0] sm:$0xff]
    %v3572 = vld [vmem:[#allocation3 + $0x1b8] sm:$0xff]
    %v3573 = vld [vmem:[#allocation3 + $0x1c0] sm:$0xff]
    %v3574 = vld [vmem:[#allocation3 + $0x1c8] sm:$0xff]
    %v3575 = vld [vmem:[#allocation3 + $0x1d0] sm:$0xff]
    %v3576 = vld [vmem:[#allocation3 + $0x1d8] sm:$0xff]
    %v3577 = vld [vmem:[#allocation3 + $0x1e0] sm:$0xff]
    %v3578 = vld [vmem:[#allocation3 + $0x1e8] sm:$0xff]
    %v3579 = vld [vmem:[#allocation3 + $0x1f0] sm:$0xff]
    %v3580 = vld [vmem:[#allocation3 + $0x1f8] sm:$0xff]
    %v3581 = vld [vmem:[#allocation4] sm:$0xff]
    %v3582 = vld [vmem:[#allocation4 + $0x8] sm:$0xff]
    %v3583 = vld [vmem:[#allocation4 + $0x10] sm:$0xff]
    %v3584 = vld [vmem:[#allocation4 + $0x18] sm:$0xff]
    %3585 = vmatprep.subr.mxu0 %v3518
    %3586 = vmatpush1.msra.mxu0 %v3517
    %3587 = vmatprep.subr.mxu0 %v3522
    %3588 = vmatpush1.msra.mxu0 %v3521
    %3589 = vmatprep.subr.mxu0 %v3526
    %3590 = vmatpush1.msra.mxu0 %v3525
    %3591 = vmatprep.subr.mxu0 %v3530
    %3592 = vmatpush1.msra.mxu0 %v3529
    %3593 = vmatprep.subr.mxu0 %v3534
    %3594 = vmatpush1.msra.mxu0 %v3533
    %3595 = vmatprep.subr.mxu0 %v3538
    %3596 = vmatpush1.msra.mxu0 %v3537
    %3597 = vmatprep.subr.mxu0 %v3542
    %3598 = vmatpush1.msra.mxu0 %v3541
    %3599 = vmatprep.subr.mxu0 %v3546
    %3600 = vmatpush1.msra.mxu0 %v3545
    %3601 = vmatprep.subr.mxu0 %v3550
    %3602 = vmatpush1.msra.mxu0 %v3549
    %3603 = vmatprep.subr.mxu0 %v3554
    %3604 = vmatpush1.msra.mxu0 %v3553
    %3605 = vmatprep.subr.mxu0 %v3558
    %3606 = vmatpush1.msra.mxu0 %v3557
    %3607 = vmatprep.subr.mxu0 %v3562
    %3608 = vmatpush1.msra.mxu0 %v3561
    %3609 = vmatprep.subr.mxu0 %v3566
    %3610 = vmatpush1.msra.mxu0 %v3565
    %3611 = vmatprep.subr.mxu0 %v3570
    %3612 = vmatpush1.msra.mxu0 %v3569
    %3613 = vmatprep.subr.mxu0 %v3574
    %3614 = vmatpush1.msra.mxu0 %v3573
    %3615 = vmatprep.subr.mxu0 %v3578
    %3616 = vmatpush1.msra.mxu0 %v3577
    %3617 = vmatprep.subr.mxu0 0.0
    %3618 = vmatpush1.msra.mxu0 0.0
    %3619 = vmatprep.subr.mxu0 0.0
    %3620 = vmatpush1.msra.mxu0 0.0
    %3621 = vmatprep.subr.mxu0 0.0
    %3622 = vmatpush1.msra.mxu0 0.0
    %3623 = vmatprep.subr.mxu0 0.0
    %3624 = vmatpush1.msra.mxu0 0.0
    %3625 = vmatprep.subr.mxu0 0.0
    %3626 = vmatpush1.msra.mxu0 0.0
    %3627 = vmatprep.subr.mxu0 0.0
    %3628 = vmatpush1.msra.mxu0 0.0
    %3629 = vmatprep.subr.mxu0 0.0
    %3630 = vmatpush1.msra.mxu0 0.0
    %3631 = vmatprep.subr.mxu0 0.0
    %3632 = vmatpush1.msra.mxu0 0.0
    %3633 = vmatprep.subr.mxu0 0.0
    %3634 = vmatpush1.msra.mxu0 0.0
    %3635 = vmatprep.subr.mxu0 0.0
    %3636 = vmatpush1.msra.mxu0 0.0
    %3637 = vmatprep.subr.mxu0 0.0
    %3638 = vmatpush1.msra.mxu0 0.0
    %3639 = vmatprep.subr.mxu0 0.0
    %3640 = vmatpush1.msra.mxu0 0.0
    %3641 = vmatprep.subr.mxu0 0.0
    %3642 = vmatpush1.msra.mxu0 0.0
    %3643 = vmatprep.subr.mxu0 0.0
    %3644 = vmatpush1.msra.mxu0 0.0
    %3645 = vmatprep.subr.mxu0 0.0
    %3646 = vmatpush1.msra.mxu0 0.0
    %3647 = vmatprep.subr.mxu0 0.0
    %3648 = vmatpush1.msra.mxu0 0.0
    %3649 = vmatprep.mubr.f32.mxu0 0.0
    %3650 = vmatmul.mubr.f32.gmra.mrb[0].mxu0 %v3516
    %v3651 = vpop.f32.mrb[0].mxu0
    %v3652 = vadd.f32 %v3581, %v3651
    %v3653 = vpop.f32.mrb[0].mxu0
    %v3654 = vadd.f32 %v3582, %v3653
    %3655 = vdwg.mxu0
    %3656 = vmatprep.subr.mxu0 %v3520
    %3657 = vmatpush1.msra.mxu0 %v3519
    %3658 = vmatprep.subr.mxu0 %v3524
    %3659 = vmatpush1.msra.mxu0 %v3523
    %3660 = vmatprep.subr.mxu0 %v3528
    %3661 = vmatpush1.msra.mxu0 %v3527
    %3662 = vmatprep.subr.mxu0 %v3532
    %3663 = vmatpush1.msra.mxu0 %v3531
    %3664 = vmatprep.subr.mxu0 %v3536
    %3665 = vmatpush1.msra.mxu0 %v3535
    %3666 = vmatprep.subr.mxu0 %v3540
    %3667 = vmatpush1.msra.mxu0 %v3539
    %3668 = vmatprep.subr.mxu0 %v3544
    %3669 = vmatpush1.msra.mxu0 %v3543
    %3670 = vmatprep.subr.mxu0 %v3548
    %3671 = vmatpush1.msra.mxu0 %v3547
    %3672 = vmatprep.subr.mxu0 %v3552
    %3673 = vmatpush1.msra.mxu0 %v3551
    %3674 = vmatprep.subr.mxu0 %v3556
    %3675 = vmatpush1.msra.mxu0 %v3555
    %3676 = vmatprep.subr.mxu0 %v3560
    %3677 = vmatpush1.msra.mxu0 %v3559
    %3678 = vmatprep.subr.mxu0 %v3564
    %3679 = vmatpush1.msra.mxu0 %v3563
    %3680 = vmatprep.subr.mxu0 %v3568
    %3681 = vmatpush1.msra.mxu0 %v3567
    %3682 = vmatprep.subr.mxu0 %v3572
    %3683 = vmatpush1.msra.mxu0 %v3571
    %3684 = vmatprep.subr.mxu0 %v3576
    %3685 = vmatpush1.msra.mxu0 %v3575
    %3686 = vmatprep.subr.mxu0 %v3580
    %3687 = vmatpush1.msra.mxu0 %v3579
    %3688 = vmatprep.subr.mxu0 0.0
    %3689 = vmatpush1.msra.mxu0 0.0
    %3690 = vmatprep.subr.mxu0 0.0
    %3691 = vmatpush1.msra.mxu0 0.0
    %3692 = vmatprep.subr.mxu0 0.0
    %3693 = vmatpush1.msra.mxu0 0.0
    %3694 = vmatprep.subr.mxu0 0.0
    %3695 = vmatpush1.msra.mxu0 0.0
    %3696 = vmatprep.subr.mxu0 0.0
    %3697 = vmatpush1.msra.mxu0 0.0
    %3698 = vmatprep.subr.mxu0 0.0
    %3699 = vmatpush1.msra.mxu0 0.0
    %3700 = vmatprep.subr.mxu0 0.0
    %3701 = vmatpush1.msra.mxu0 0.0
    %3702 = vmatprep.subr.mxu0 0.0
    %3703 = vmatpush1.msra.mxu0 0.0
    %3704 = vmatprep.subr.mxu0 0.0
    %3705 = vmatpush1.msra.mxu0 0.0
    %3706 = vmatprep.subr.mxu0 0.0
    %3707 = vmatpush1.msra.mxu0 0.0
    %3708 = vmatprep.subr.mxu0 0.0
    %3709 = vmatpush1.msra.mxu0 0.0
    %3710 = vmatprep.subr.mxu0 0.0
    %3711 = vmatpush1.msra.mxu0 0.0
    %3712 = vmatprep.subr.mxu0 0.0
    %3713 = vmatpush1.msra.mxu0 0.0
    %3714 = vmatprep.subr.mxu0 0.0
    %3715 = vmatpush1.msra.mxu0 0.0
    %3716 = vmatprep.subr.mxu0 0.0
    %3717 = vmatpush1.msra.mxu0 0.0
    %3718 = vmatprep.subr.mxu0 0.0
    %3719 = vmatpush1.msra.mxu0 0.0
    %3720 = vmatprep.mubr.f32.mxu0 0.0
    %3721 = vmatmul.mubr.f32.gmra.mrb[0].mxu0 %v3516
    %v3722 = vpop.f32.mrb[0].mxu0
    %v3723 = vadd.f32 %v3583, %v3722
    %v3724 = vpop.f32.mrb[0].mxu0
    %v3725 = vadd.f32 %v3584, %v3724
    %3726 = vdwg.mxu0
    %v3727 = vxor.u32 %v3652, 2147483648
    %v3728 = vmul.f32 %v3727, 1.442695
    %v3729 = vpow.pop %v3728
    %v3730 = vadd.f32 %v3729, 1.0
    %v3731 = vrcp.pop %v3730
    %v3732 = vmul.f32 1.0, %v3731
    %v3733 = vxor.u32 %v3654, 2147483648
    %v3734 = vmul.f32 %v3733, 1.442695
    %v3735 = vpow.pop %v3734
    %v3736 = vadd.f32 %v3735, 1.0
    %v3737 = vrcp.pop %v3736
    %v3738 = vmul.f32 1.0, %v3737
    %v3739 = vtanh.pop %v3723
    %v3740 = vxor.u32 %v3725, 2147483648
    %v3741 = vmul.f32 %v3740, 1.442695
    %v3742 = vpow.pop %v3741
    %v3743 = vadd.f32 %v3742, 1.0
    %v3744 = vrcp.pop %v3743
    %v3745 = vmul.f32 1.0, %v3744
    %v3746 = vld [vmem:[#allocation11] sm:$0xff]
    %v3747 = vmul.f32 %v3738, %v3746
    %v3748 = vmul.f32 %v3732, %v3739
    %v3749 = vadd.f32 %v3747, %v3748
    %v3750 = vtanh.pop %v3749
    %v3751 = vmul.f32 %v3745, %v3750
    %3752 = vst [vmem:[#allocation10] sm:$0xff] %v3751
    %3753 = vst [vmem:[#allocation11] sm:$0xff] %v3749
    %v3754 = vld [vmem:[#allocation10] sm:$0xff]
    %s3755 = scalar_lea.vmem [#allocation9], 32
    %3756 = vst [vmem:[%s3755] sm:$0xff] %v3754
    %v3757 = vld [vmem:[#allocation10] sm:$0xff]
    %v3758 = vld [vmem:[#allocation3] sm:$0xff]
    %v3759 = vld [vmem:[#allocation3 + $0x8] sm:$0xff]
    %v3760 = vld [vmem:[#allocation3 + $0x10] sm:$0xff]
    %v3761 = vld [vmem:[#allocation3 + $0x18] sm:$0xff]
    %v3762 = vld [vmem:[#allocation3 + $0x20] sm:$0xff]
    %v3763 = vld [vmem:[#allocation3 + $0x28] sm:$0xff]
    %v3764 = vld [vmem:[#allocation3 + $0x30] sm:$0xff]
    %v3765 = vld [vmem:[#allocation3 + $0x38] sm:$0xff]
    %v3766 = vld [vmem:[#allocation3 + $0x40] sm:$0xff]
    %v3767 = vld [vmem:[#allocation3 + $0x48] sm:$0xff]
    %v3768 = vld [vmem:[#allocation3 + $0x50] sm:$0xff]
    %v3769 = vld [vmem:[#allocation3 + $0x58] sm:$0xff]
    %v3770 = vld [vmem:[#allocation3 + $0x60] sm:$0xff]
    %v3771 = vld [vmem:[#allocation3 + $0x68] sm:$0xff]
    %v3772 = vld [vmem:[#allocation3 + $0x70] sm:$0xff]
    %v3773 = vld [vmem:[#allocation3 + $0x78] sm:$0xff]
    %v3774 = vld [vmem:[#allocation3 + $0x80] sm:$0xff]
    %v3775 = vld [vmem:[#allocation3 + $0x88] sm:$0xff]
    %v3776 = vld [vmem:[#allocation3 + $0x90] sm:$0xff]
    %v3777 = vld [vmem:[#allocation3 + $0x98] sm:$0xff]
    %v3778 = vld [vmem:[#allocation3 + $0xa0] sm:$0xff]
    %v3779 = vld [vmem:[#allocation3 + $0xa8] sm:$0xff]
    %v3780 = vld [vmem:[#allocation3 + $0xb0] sm:$0xff]
    %v3781 = vld [vmem:[#allocation3 + $0xb8] sm:$0xff]
    %v3782 = vld [vmem:[#allocation3 + $0xc0] sm:$0xff]
    %v3783 = vld [vmem:[#allocation3 + $0xc8] sm:$0xff]
    %v3784 = vld [vmem:[#allocation3 + $0xd0] sm:$0xff]
    %v3785 = vld [vmem:[#allocation3 + $0xd8] sm:$0xff]
    %v3786 = vld [vmem:[#allocation3 + $0xe0] sm:$0xff]
    %v3787 = vld [vmem:[#allocation3 + $0xe8] sm:$0xff]
    %v3788 = vld [vmem:[#allocation3 + $0xf0] sm:$0xff]
    %v3789 = vld [vmem:[#allocation3 + $0xf8] sm:$0xff]
    %v3790 = vld [vmem:[#allocation3 + $0x100] sm:$0xff]
    %v3791 = vld [vmem:[#allocation3 + $0x108] sm:$0xff]
    %v3792 = vld [vmem:[#allocation3 + $0x110] sm:$0xff]
    %v3793 = vld [vmem:[#allocation3 + $0x118] sm:$0xff]
    %v3794 = vld [vmem:[#allocation3 + $0x120] sm:$0xff]
    %v3795 = vld [vmem:[#allocation3 + $0x128] sm:$0xff]
    %v3796 = vld [vmem:[#allocation3 + $0x130] sm:$0xff]
    %v3797 = vld [vmem:[#allocation3 + $0x138] sm:$0xff]
    %v3798 = vld [vmem:[#allocation3 + $0x140] sm:$0xff]
    %v3799 = vld [vmem:[#allocation3 + $0x148] sm:$0xff]
    %v3800 = vld [vmem:[#allocation3 + $0x150] sm:$0xff]
    %v3801 = vld [vmem:[#allocation3 + $0x158] sm:$0xff]
    %v3802 = vld [vmem:[#allocation3 + $0x160] sm:$0xff]
    %v3803 = vld [vmem:[#allocation3 + $0x168] sm:$0xff]
    %v3804 = vld [vmem:[#allocation3 + $0x170] sm:$0xff]
    %v3805 = vld [vmem:[#allocation3 + $0x178] sm:$0xff]
    %v3806 = vld [vmem:[#allocation3 + $0x180] sm:$0xff]
    %v3807 = vld [vmem:[#allocation3 + $0x188] sm:$0xff]
    %v3808 = vld [vmem:[#allocation3 + $0x190] sm:$0xff]
    %v3809 = vld [vmem:[#allocation3 + $0x198] sm:$0xff]
    %v3810 = vld [vmem:[#allocation3 + $0x1a0] sm:$0xff]
    %v3811 = vld [vmem:[#allocation3 + $0x1a8] sm:$0xff]
    %v3812 = vld [vmem:[#allocation3 + $0x1b0] sm:$0xff]
    %v3813 = vld [vmem:[#allocation3 + $0x1b8] sm:$0xff]
    %v3814 = vld [vmem:[#allocation3 + $0x1c0] sm:$0xff]
    %v3815 = vld [vmem:[#allocation3 + $0x1c8] sm:$0xff]
    %v3816 = vld [vmem:[#allocation3 + $0x1d0] sm:$0xff]
    %v3817 = vld [vmem:[#allocation3 + $0x1d8] sm:$0xff]
    %v3818 = vld [vmem:[#allocation3 + $0x1e0] sm:$0xff]
    %v3819 = vld [vmem:[#allocation3 + $0x1e8] sm:$0xff]
    %v3820 = vld [vmem:[#allocation3 + $0x1f0] sm:$0xff]
    %v3821 = vld [vmem:[#allocation3 + $0x1f8] sm:$0xff]
    %v3822 = vld [vmem:[#allocation4] sm:$0xff]
    %v3823 = vld [vmem:[#allocation4 + $0x8] sm:$0xff]
    %v3824 = vld [vmem:[#allocation4 + $0x10] sm:$0xff]
    %v3825 = vld [vmem:[#allocation4 + $0x18] sm:$0xff]
    %3826 = vmatprep.subr.mxu0 %v3759
    %3827 = vmatpush1.msra.mxu0 %v3758
    %3828 = vmatprep.subr.mxu0 %v3763
    %3829 = vmatpush1.msra.mxu0 %v3762
    %3830 = vmatprep.subr.mxu0 %v3767
    %3831 = vmatpush1.msra.mxu0 %v3766
    %3832 = vmatprep.subr.mxu0 %v3771
    %3833 = vmatpush1.msra.mxu0 %v3770
    %3834 = vmatprep.subr.mxu0 %v3775
    %3835 = vmatpush1.msra.mxu0 %v3774
    %3836 = vmatprep.subr.mxu0 %v3779
    %3837 = vmatpush1.msra.mxu0 %v3778
    %3838 = vmatprep.subr.mxu0 %v3783
    %3839 = vmatpush1.msra.mxu0 %v3782
    %3840 = vmatprep.subr.mxu0 %v3787
    %3841 = vmatpush1.msra.mxu0 %v3786
    %3842 = vmatprep.subr.mxu0 %v3791
    %3843 = vmatpush1.msra.mxu0 %v3790
    %3844 = vmatprep.subr.mxu0 %v3795
    %3845 = vmatpush1.msra.mxu0 %v3794
    %3846 = vmatprep.subr.mxu0 %v3799
    %3847 = vmatpush1.msra.mxu0 %v3798
    %3848 = vmatprep.subr.mxu0 %v3803
    %3849 = vmatpush1.msra.mxu0 %v3802
    %3850 = vmatprep.subr.mxu0 %v3807
    %3851 = vmatpush1.msra.mxu0 %v3806
    %3852 = vmatprep.subr.mxu0 %v3811
    %3853 = vmatpush1.msra.mxu0 %v3810
    %3854 = vmatprep.subr.mxu0 %v3815
    %3855 = vmatpush1.msra.mxu0 %v3814
    %3856 = vmatprep.subr.mxu0 %v3819
    %3857 = vmatpush1.msra.mxu0 %v3818
    %3858 = vmatprep.subr.mxu0 0.0
    %3859 = vmatpush1.msra.mxu0 0.0
    %3860 = vmatprep.subr.mxu0 0.0
    %3861 = vmatpush1.msra.mxu0 0.0
    %3862 = vmatprep.subr.mxu0 0.0
    %3863 = vmatpush1.msra.mxu0 0.0
    %3864 = vmatprep.subr.mxu0 0.0
    %3865 = vmatpush1.msra.mxu0 0.0
    %3866 = vmatprep.subr.mxu0 0.0
    %3867 = vmatpush1.msra.mxu0 0.0
    %3868 = vmatprep.subr.mxu0 0.0
    %3869 = vmatpush1.msra.mxu0 0.0
    %3870 = vmatprep.subr.mxu0 0.0
    %3871 = vmatpush1.msra.mxu0 0.0
    %3872 = vmatprep.subr.mxu0 0.0
    %3873 = vmatpush1.msra.mxu0 0.0
    %3874 = vmatprep.subr.mxu0 0.0
    %3875 = vmatpush1.msra.mxu0 0.0
    %3876 = vmatprep.subr.mxu0 0.0
    %3877 = vmatpush1.msra.mxu0 0.0
    %3878 = vmatprep.subr.mxu0 0.0
    %3879 = vmatpush1.msra.mxu0 0.0
    %3880 = vmatprep.subr.mxu0 0.0
    %3881 = vmatpush1.msra.mxu0 0.0
    %3882 = vmatprep.subr.mxu0 0.0
    %3883 = vmatpush1.msra.mxu0 0.0
    %3884 = vmatprep.subr.mxu0 0.0
    %3885 = vmatpush1.msra.mxu0 0.0
    %3886 = vmatprep.subr.mxu0 0.0
    %3887 = vmatpush1.msra.mxu0 0.0
    %3888 = vmatprep.subr.mxu0 0.0
    %3889 = vmatpush1.msra.mxu0 0.0
    %3890 = vmatprep.mubr.f32.mxu0 0.0
    %3891 = vmatmul.mubr.f32.gmra.mrb[0].mxu0 %v3757
    %v3892 = vpop.f32.mrb[0].mxu0
    %v3893 = vadd.f32 %v3822, %v3892
    %v3894 = vpop.f32.mrb[0].mxu0
    %v3895 = vadd.f32 %v3823, %v3894
    %3896 = vdwg.mxu0
    %3897 = vmatprep.subr.mxu0 %v3761
    %3898 = vmatpush1.msra.mxu0 %v3760
    %3899 = vmatprep.subr.mxu0 %v3765
    %3900 = vmatpush1.msra.mxu0 %v3764
    %3901 = vmatprep.subr.mxu0 %v3769
    %3902 = vmatpush1.msra.mxu0 %v3768
    %3903 = vmatprep.subr.mxu0 %v3773
    %3904 = vmatpush1.msra.mxu0 %v3772
    %3905 = vmatprep.subr.mxu0 %v3777
    %3906 = vmatpush1.msra.mxu0 %v3776
    %3907 = vmatprep.subr.mxu0 %v3781
    %3908 = vmatpush1.msra.mxu0 %v3780
    %3909 = vmatprep.subr.mxu0 %v3785
    %3910 = vmatpush1.msra.mxu0 %v3784
    %3911 = vmatprep.subr.mxu0 %v3789
    %3912 = vmatpush1.msra.mxu0 %v3788
    %3913 = vmatprep.subr.mxu0 %v3793
    %3914 = vmatpush1.msra.mxu0 %v3792
    %3915 = vmatprep.subr.mxu0 %v3797
    %3916 = vmatpush1.msra.mxu0 %v3796
    %3917 = vmatprep.subr.mxu0 %v3801
    %3918 = vmatpush1.msra.mxu0 %v3800
    %3919 = vmatprep.subr.mxu0 %v3805
    %3920 = vmatpush1.msra.mxu0 %v3804
    %3921 = vmatprep.subr.mxu0 %v3809
    %3922 = vmatpush1.msra.mxu0 %v3808
    %3923 = vmatprep.subr.mxu0 %v3813
    %3924 = vmatpush1.msra.mxu0 %v3812
    %3925 = vmatprep.subr.mxu0 %v3817
    %3926 = vmatpush1.msra.mxu0 %v3816
    %3927 = vmatprep.subr.mxu0 %v3821
    %3928 = vmatpush1.msra.mxu0 %v3820
    %3929 = vmatprep.subr.mxu0 0.0
    %3930 = vmatpush1.msra.mxu0 0.0
    %3931 = vmatprep.subr.mxu0 0.0
    %3932 = vmatpush1.msra.mxu0 0.0
    %3933 = vmatprep.subr.mxu0 0.0
    %3934 = vmatpush1.msra.mxu0 0.0
    %3935 = vmatprep.subr.mxu0 0.0
    %3936 = vmatpush1.msra.mxu0 0.0
    %3937 = vmatprep.subr.mxu0 0.0
    %3938 = vmatpush1.msra.mxu0 0.0
    %3939 = vmatprep.subr.mxu0 0.0
    %3940 = vmatpush1.msra.mxu0 0.0
    %3941 = vmatprep.subr.mxu0 0.0
    %3942 = vmatpush1.msra.mxu0 0.0
    %3943 = vmatprep.subr.mxu0 0.0
    %3944 = vmatpush1.msra.mxu0 0.0
    %3945 = vmatprep.subr.mxu0 0.0
    %3946 = vmatpush1.msra.mxu0 0.0
    %3947 = vmatprep.subr.mxu0 0.0
    %3948 = vmatpush1.msra.mxu0 0.0
    %3949 = vmatprep.subr.mxu0 0.0
    %3950 = vmatpush1.msra.mxu0 0.0
    %3951 = vmatprep.subr.mxu0 0.0
    %3952 = vmatpush1.msra.mxu0 0.0
    %3953 = vmatprep.subr.mxu0 0.0
    %3954 = vmatpush1.msra.mxu0 0.0
    %3955 = vmatprep.subr.mxu0 0.0
    %3956 = vmatpush1.msra.mxu0 0.0
    %3957 = vmatprep.subr.mxu0 0.0
    %3958 = vmatpush1.msra.mxu0 0.0
    %3959 = vmatprep.subr.mxu0 0.0
    %3960 = vmatpush1.msra.mxu0 0.0
    %3961 = vmatprep.mubr.f32.mxu0 0.0
    %3962 = vmatmul.mubr.f32.gmra.mrb[0].mxu0 %v3757
    %v3963 = vpop.f32.mrb[0].mxu0
    %v3964 = vadd.f32 %v3824, %v3963
    %v3965 = vpop.f32.mrb[0].mxu0
    %v3966 = vadd.f32 %v3825, %v3965
    %3967 = vdwg.mxu0
    %v3968 = vxor.u32 %v3893, 2147483648
    %v3969 = vmul.f32 %v3968, 1.442695
    %v3970 = vpow.pop %v3969
    %v3971 = vadd.f32 %v3970, 1.0
    %v3972 = vrcp.pop %v3971
    %v3973 = vmul.f32 1.0, %v3972
    %v3974 = vxor.u32 %v3895, 2147483648
    %v3975 = vmul.f32 %v3974, 1.442695
    %v3976 = vpow.pop %v3975
    %v3977 = vadd.f32 %v3976, 1.0
    %v3978 = vrcp.pop %v3977
    %v3979 = vmul.f32 1.0, %v3978
    %v3980 = vtanh.pop %v3964
    %v3981 = vxor.u32 %v3966, 2147483648
    %v3982 = vmul.f32 %v3981, 1.442695
    %v3983 = vpow.pop %v3982
    %v3984 = vadd.f32 %v3983, 1.0
    %v3985 = vrcp.pop %v3984
    %v3986 = vmul.f32 1.0, %v3985
    %v3987 = vld [vmem:[#allocation11] sm:$0xff]
    %v3988 = vmul.f32 %v3979, %v3987
    %v3989 = vmul.f32 %v3973, %v3980
    %v3990 = vadd.f32 %v3988, %v3989
    %v3991 = vtanh.pop %v3990
    %v3992 = vmul.f32 %v3986, %v3991
    %3993 = vst [vmem:[#allocation10] sm:$0xff] %v3992
    %3994 = vst [vmem:[#allocation11] sm:$0xff] %v3990
    %v3995 = vld [vmem:[#allocation10] sm:$0xff]
    %s3996 = scalar_lea.vmem [#allocation9], 40
    %3997 = vst [vmem:[%s3996] sm:$0xff] %v3995
    %s3998 = smul.u32 4, 16
    %s3999 = smul.u32 %s3998, 1
    %s4000 = sshll.u32 %s3999, 4
    %4001 = dma.done %s100, %s4000
    %s4002 = smul.u32 1, 1
    %s4003 = sshll.u32 %s4002, 4
    %4004 = dma.done %s112, %s4003
    %v4005 = vld [vmem:[#allocation9] sm:$0xff]
    %v4006 = vld [vmem:[#allocation9 + $0x8] sm:$0xff]
    %v4007 = vld [vmem:[#allocation9 + $0x10] sm:$0xff]
    %v4008 = vld [vmem:[#allocation9 + $0x18] sm:$0xff]
    %v4009 = vld [vmem:[#allocation9 + $0x20] sm:$0xff]
    %v4010 = vld [vmem:[#allocation9 + $0x28] sm:$0xff]
    %v4011 = vpack.c.bf16 %v4006, %v4005
    %v4012 = vpack.c.bf16 %v4008, %v4007
    %v4013 = vpack.c.bf16 %v4010, %v4009
    %v4014 = vld [vmem:[#allocation5] sm:$0xff]
    %v4015 = vld [vmem:[#allocation5 + $0x8] sm:$0xff]
    %v4016 = vld [vmem:[#allocation5 + $0x10] sm:$0xff]
    %v4017 = vld [vmem:[#allocation5 + $0x18] sm:$0xff]
    %v4018 = vld [vmem:[#allocation5 + $0x20] sm:$0xff]
    %v4019 = vld [vmem:[#allocation5 + $0x28] sm:$0xff]
    %v4020 = vld [vmem:[#allocation5 + $0x30] sm:$0xff]
    %v4021 = vld [vmem:[#allocation5 + $0x38] sm:$0xff]
    %v4022 = vld [vmem:[#allocation6] sm:$0x1]
    %v4024 = vlaneseq
    %v4025 = vshrl.u32 %v4024, 7
    %v4026 = vsub.s32 0, %v4025
    %v4027 = vrot.slane %v4022, %v4026
    %4029 = vmatprep.subr.bf16.mxu0 0
    %4030 = vmatpush1.bf16.msra.mxu0 %v4014
    %4031 = vmatprep.subr.bf16.mxu0 0
    %4032 = vmatpush1.bf16.msra.mxu0 %v4015
    %4033 = vmatprep.subr.bf16.mxu0 0
    %4034 = vmatpush1.bf16.msra.mxu0 %v4016
    %4035 = vmatprep.subr.bf16.mxu0 0
    %4036 = vmatpush1.bf16.msra.mxu0 %v4017
    %4037 = vmatprep.subr.bf16.mxu0 0
    %4038 = vmatpush1.bf16.msra.mxu0 %v4018
    %4039 = vmatprep.subr.bf16.mxu0 0
    %4040 = vmatpush1.bf16.msra.mxu0 %v4019
    %4041 = vmatprep.subr.bf16.mxu0 0
    %4042 = vmatpush1.bf16.msra.mxu0 %v4020
    %4043 = vmatprep.subr.bf16.mxu0 0
    %4044 = vmatpush1.bf16.msra.mxu0 %v4021
    %4045 = vmatprep.subr.bf16.mxu0 0
    %4046 = vmatpush1.bf16.msra.mxu0 0
    %4047 = vmatprep.subr.bf16.mxu0 0
    %4048 = vmatpush1.bf16.msra.mxu0 0
    %4049 = vmatprep.subr.bf16.mxu0 0
    %4050 = vmatpush1.bf16.msra.mxu0 0
    %4051 = vmatprep.subr.bf16.mxu0 0
    %4052 = vmatpush1.bf16.msra.mxu0 0
    %4053 = vmatprep.subr.bf16.mxu0 0
    %4054 = vmatpush1.bf16.msra.mxu0 0
    %4055 = vmatprep.subr.bf16.mxu0 0
    %4056 = vmatpush1.bf16.msra.mxu0 0
    %4057 = vmatprep.subr.bf16.mxu0 0
    %4058 = vmatpush1.bf16.msra.mxu0 0
    %4059 = vmatprep.subr.bf16.mxu0 0
    %4060 = vmatpush1.bf16.msra.mxu0 0
    %4061 = vmatprep.mubr.bf16.mxu0 0
    %4062 = vmatmul.mubr.bf16.gmra.mrb[0].mxu0 %v4011
    %v4063 = vpop.f32.mrb[0].mxu0
    %v4064 = vadd.f32 %v4027, %v4063
    %v4065 = vpop.f32.mrb[0].mxu0
    %v4066 = vpop.f32.mrb[0].mxu0
    %v4067 = vadd.f32 %v4027, %v4066
    %v4068 = vpop.f32.mrb[0].mxu0
    %4069 = vmatprep.mubr.bf16.mxu0 0
    %4070 = vmatmul.mubr.bf16.gmra.mrb[0].mxu0 %v4012
    %v4071 = vpop.f32.mrb[0].mxu0
    %v4072 = vadd.f32 %v4027, %v4071
    %v4073 = vpop.f32.mrb[0].mxu0
    %v4074 = vpop.f32.mrb[0].mxu0
    %v4075 = vadd.f32 %v4027, %v4074
    %v4076 = vpop.f32.mrb[0].mxu0
    %4077 = vmatprep.mubr.bf16.mxu0 0
    %4078 = vmatmul.mubr.bf16.gmra.mrb[0].mxu0 %v4013
    %v4079 = vpop.f32.mrb[0].mxu0
    %v4080 = vadd.f32 %v4027, %v4079
    %v4081 = vpop.f32.mrb[0].mxu0
    %v4082 = vpop.f32.mrb[0].mxu0
    %v4083 = vadd.f32 %v4027, %v4082
    %v4084 = vpop.f32.mrb[0].mxu0
    %4085 = vdwg.mxu0
    %4086 = vst [vmem:[#allocation18] sm:$0xff] %v4064
    %4087 = vst [vmem:[#allocation18 + $0x8] sm:$0xff] %v4067
    %4088 = vst [vmem:[#allocation18 + $0x10] sm:$0xff] %v4072
    %4089 = vst [vmem:[#allocation18 + $0x18] sm:$0xff] %v4075
    %4090 = vst [vmem:[#allocation18 + $0x20] sm:$0xff] %v4080
    %4091 = vst [vmem:[#allocation18 + $0x28] sm:$0xff] %v4083
    // Predicated region
    $region76: #{tpu_custom_call.1} parent=1 // pred_check
      _
    $region77: #{tpu_custom_call.1} parent=1 // pred_check_branch
      %4093 = sbr.rel (0) target = $region79
    $region78: #{tpu_custom_call.1} parent=1 // pred_region
      %s4095 = ssub.s32 768, 768
      %4096 = vsyncadd [#allocation14], %s4095
      %s4097 = sshll.u32 [#allocation18], 4
      %s4098 = int_to_ptr.vmem [resolvable:$true] %s4097
      %4103 = dma.vmem_to_hbm [thread:$0]  %s4098, 768, %s9, [#allocation14], 128, 128, 8
    $region79: #{tpu_custom_call.1} parent=1 // pred_fallthru
      _
    // Predicated region
    $region80: #{tpu_custom_call.1} parent=1 // pred_check
      _
    $region81: #{tpu_custom_call.1} parent=1 // pred_check_branch
      %4105 = sbr.rel (0) target = $region83
    $region82: #{tpu_custom_call.1} parent=1 // pred_region
      %4106 = dma.done [#allocation14], 768
    $region83: #{tpu_custom_call.1} parent=1 // pred_fallthru
      _
    %4107 = vsyncpa [#allocation13], 1
    %4108 = vsyncpa [#allocation16], 1
    %4109 = vsyncpa [#allocation14], 1
  %4110 = vsyncmov [#allocation7]
  %s4111 = vpop.sfrf %4110
  %p4112 = scmp.eq.s32.totalorder %s4111, 0
  %p4113 = pneg %p4112
  %4115 = shalt.err (%p4113)
  %s4116 = scalar_lea.sflag [#allocation7], 1
  %4117 = vsyncmov %s4116
  %s4118 = vpop.sfrf %4117
  %p4119 = scmp.eq.s32.totalorder %s4118, 0
  %p4120 = pneg %p4119
  %4122 = shalt.err (%p4120)
  %s4123 = scalar_lea.sflag [#allocation7], 2
  %4124 = vsyncmov %s4123
  %s4125 = vpop.sfrf %4124
  %p4126 = scmp.eq.s32.totalorder %s4125, 0
  %p4127 = pneg %p4126
  %4129 = shalt.err (%p4127)
  %s4130 = scalar_lea.sflag [#allocation7], 3
  %4131 = vsyncmov %s4130
  %s4132 = vpop.sfrf %4131
  %p4133 = scmp.eq.s32.totalorder %s4132, 0
  %p4134 = pneg %p4133
  %4136 = shalt.err (%p4134)
  %s4137 = scalar_lea.sflag [#allocation7], 4
  %4138 = vsyncmov %s4137
  %s4139 = vpop.sfrf %4138
  %p4140 = scmp.eq.s32.totalorder %s4139, 0
  %p4141 = pneg %p4140
  %4143 = shalt.err (%p4141)

</llo_original>
